<compile_context>
chip_gen: v5e
topology: v5e:2x2
jax: 0.10.0
libtpu: 0.0.40
codegen_flags: <defaults>
</compile_context>

<pallas_src>
import functools

import numpy as np

import jax
import jax.numpy as jnp
from jax.experimental import pallas as pl
from jax.experimental.pallas import tpu as pltpu

# ----------------------------- hyper-params ---------------------------------
NCLASSES = 10          # >0 so reid returns (feats, logits), as in the module
MAX_DISP = 2           # small test config of max_displacement
DISP_STRIDE = 1        # small test config of stride
FEATSTRIDE = 4
FEAT_DIM = 32          # re-id embedding dim
TRACK_OUT = 4          # tracker regression output dim
C1, C2 = 8, 16         # backbone channels

ND = (2 * MAX_DISP) // DISP_STRIDE + 1   # displacements per axis
D2 = ND * ND                             # correlation channels

VMEM_LIMIT = 48 * 1024 * 1024            # >32MiB default; <=48MiB for v7x headroom


# ----------------------------- in-kernel helpers -----------------------------
def _shift_rows(x, off):
    """out[p] = x[p + off] on the flat (row, channel) layout; rows shifted past
    either end of the array are zero-filled (cross-row / cross-image leakage is
    removed by the caller's validity mask)."""
    if off == 0:
        return x
    P, C = x.shape
    if abs(off) >= P:
        return jnp.zeros_like(x)
    z = jnp.zeros((abs(off), C), x.dtype)
    if off > 0:
        return jnp.concatenate([x[off:, :], z], axis=0)
    return jnp.concatenate([z, x[:off, :]], axis=0)


# ----------------------------- Pallas kernels -------------------------------
def backbone_kernel(x_ref, vt_ref, w1_ref, b1_ref, w2_ref, b2_ref, o_ref, *, W):
    """Fused conv1(3x3,s1)+ReLU -> conv2(3x3,s1)+ReLU for ONE image.

    Input/intermediates stay flat (H*W, C) in VMEM; each 3x3 conv is 9 shifted
    MXU multiply-accumulates (no HBM im2col, no lane-sparse intermediate)."""
    x = x_ref[...]                       # (P, Cin)
    vt = vt_ref[...]                     # (P, 9) border-validity per tap
    w1 = w1_ref[...]                     # (9*Cin, C1)
    w2 = w2_ref[...]                     # (9*C1,  C2)

    def conv3x3(inp, w_all, bias):
        P, cin = inp.shape
        cout = w_all.shape[1]
        acc = jnp.zeros((P, cout), jnp.float32)
        tap = 0
        for dy in (-1, 0, 1):
            for dx in (-1, 0, 1):
                off = dy * W + dx
                xs = _shift_rows(inp, off) * vt[:, tap:tap + 1]
                wt = w_all[tap * cin:(tap + 1) * cin, :]
                acc = acc + jnp.dot(xs, wt, preferred_element_type=jnp.float32)
                tap += 1
        return jnp.maximum(acc + bias, 0.0)

    h1 = conv3x3(x, w1, b1_ref[...])
    h2 = conv3x3(h1, w2, b2_ref[...])
    o_ref[...] = h2.astype(o_ref.dtype)


def corr_track_kernel(mask_ref, valid_ref, f1_ref, f2_ref, w_ref, b_ref, o_ref,
                      *, n_disp, disp_stride, max_disp, W):
    """Fused correlation + ROI mask-GEMM pooling + tracker FC.

    The (B,H,W,D2) correlation volume is never materialized: each displacement
    channel is pooled on the MXU immediately (mask @ (f1*shift(f2)))."""
    f1 = f1_ref[...]                     # (P, C)
    f2 = f2_ref[...]                     # (P, C)
    mask = mask_ref[...]                 # (N, P), includes 1/(box_area * C)
    valid = valid_ref[...]               # (P, D2) border validity per displacement

    cols = []
    d = 0
    for dyi in range(n_disp):
        for dxi in range(n_disp):
            dy = dyi * disp_stride - max_disp
            dx = dxi * disp_stride - max_disp
            off = dy * W + dx
            f2s = _shift_rows(f2, off) * valid[:, d:d + 1]
            prod = f1 * f2s                                           # VPU
            pd = jnp.dot(mask, prod,
                         preferred_element_type=jnp.float32)          # (N, C) MXU
            cols.append(jnp.sum(pd, axis=1, keepdims=True))           # (N, 1)
            d += 1
    pooled = jnp.concatenate(cols, axis=1)                            # (N, D2)
    out = jnp.dot(pooled, w_ref[...], preferred_element_type=jnp.float32)
    o_ref[...] = (out + b_ref[...]).astype(o_ref.dtype)


def reid_kernel(mask_ref, feat_ref, w1_ref, b1_ref, w2_ref, b2_ref,
                feats_ref, logits_ref):
    """Fused ROI mask-GEMM pooling -> fc1 + ReLU -> fc2 (both images)."""
    pooled = jnp.dot(mask_ref[...], feat_ref[...],
                     preferred_element_type=jnp.float32)              # (N, C)
    h = jnp.dot(pooled, w1_ref[...], preferred_element_type=jnp.float32)
    h = jnp.maximum(h + b1_ref[...], 0.0)
    feats_ref[...] = h.astype(feats_ref.dtype)
    logits = jnp.dot(h, w2_ref[...], preferred_element_type=jnp.float32)
    logits_ref[...] = (logits + b2_ref[...]).astype(logits_ref.dtype)


# ----------------------------- kernel wrappers -------------------------------
def _shift_valid_np(H, W, offsets):
    """(H*W, len(offsets)) f32 constant: 1 where the (dy,dx)-shifted source
    position stays inside the HxW image."""
    hh, ww = np.meshgrid(np.arange(H), np.arange(W), indexing="ij")
    hh = hh.reshape(-1)
    ww = ww.reshape(-1)
    cols = [((hh + dy >= 0) & (hh + dy < H) & (ww + dx >= 0) & (ww + dx < W))
            for dy, dx in offsets]
    return np.stack(cols, axis=1).astype(np.float32)


def backbone_fused(params, x_flat, n_imgs, Hc, Wc):
    pimg = Hc * Wc
    cin = x_flat.shape[1]
    c1 = params["conv1_b"].shape[1]
    c2 = params["conv2_b"].shape[1]
    taps = [(dy, dx) for dy in (-1, 0, 1) for dx in (-1, 0, 1)]
    vt = jnp.asarray(_shift_valid_np(Hc, Wc, taps))                  # (pimg, 9)
    return pl.pallas_call(
        functools.partial(backbone_kernel, W=Wc),
        out_shape=jax.ShapeDtypeStruct((n_imgs * pimg, c2), jnp.float32),
        grid=(n_imgs,),
        in_specs=[
            pl.BlockSpec((pimg, cin), lambda i: (i, 0)),
            pl.BlockSpec((pimg, 9), lambda i: (0, 0)),
            pl.BlockSpec((9 * cin, c1), lambda i: (0, 0)),
            pl.BlockSpec((1, c1), lambda i: (0, 0)),
            pl.BlockSpec((9 * c1, c2), lambda i: (0, 0)),
            pl.BlockSpec((1, c2), lambda i: (0, 0)),
        ],
        out_specs=pl.BlockSpec((pimg, c2), lambda i: (i, 0)),
        compiler_params=pltpu.CompilerParams(
            dimension_semantics=("parallel",),
            vmem_limit_bytes=VMEM_LIMIT),
    )(x_flat, vt, params["conv1_w"], params["conv1_b"],
      params["conv2_w"], params["conv2_b"])


def corr_track(mask, valid, f1_flat, f2_flat, w, b, Wf):
    N, P = mask.shape
    _, C = f1_flat.shape
    d2, n_out = w.shape
    return pl.pallas_call(
        functools.partial(corr_track_kernel, n_disp=ND, disp_stride=DISP_STRIDE,
                          max_disp=MAX_DISP, W=Wf),
        out_shape=jax.ShapeDtypeStruct((N, n_out), jnp.float32),
        grid=(1,),
        in_specs=[
            pl.BlockSpec((N, P), lambda i: (0, 0)),
            pl.BlockSpec((P, d2), lambda i: (0, 0)),
            pl.BlockSpec((P, C), lambda i: (0, 0)),
            pl.BlockSpec((P, C), lambda i: (0, 0)),
            pl.BlockSpec((d2, n_out), lambda i: (0, 0)),
            pl.BlockSpec((1, n_out), lambda i: (0, 0)),
        ],
        out_specs=pl.BlockSpec((N, n_out), lambda i: (0, 0)),
        compiler_params=pltpu.CompilerParams(
            dimension_semantics=("arbitrary",),
            vmem_limit_bytes=VMEM_LIMIT),
    )(mask, valid, f1_flat, f2_flat, w, b)


def reid_fused(mask, feat_flat, w1, b1, w2, b2):
    N, P = mask.shape
    _, C = feat_flat.shape
    _, d1 = w1.shape
    _, d2o = w2.shape
    return pl.pallas_call(
        reid_kernel,
        out_shape=(jax.ShapeDtypeStruct((N, d1), jnp.float32),
                   jax.ShapeDtypeStruct((N, d2o), jnp.float32)),
        grid=(1,),
        in_specs=[
            pl.BlockSpec((N, P), lambda i: (0, 0)),
            pl.BlockSpec((P, C), lambda i: (0, 0)),
            pl.BlockSpec((C, d1), lambda i: (0, 0)),
            pl.BlockSpec((1, d1), lambda i: (0, 0)),
            pl.BlockSpec((d1, d2o), lambda i: (0, 0)),
            pl.BlockSpec((1, d2o), lambda i: (0, 0)),
        ],
        out_specs=(pl.BlockSpec((N, d1), lambda i: (0, 0)),
                   pl.BlockSpec((N, d2o), lambda i: (0, 0))),
        compiler_params=pltpu.CompilerParams(
            dimension_semantics=("arbitrary",),
            vmem_limit_bytes=VMEM_LIMIT),
    )(mask, feat_flat, w1, b1, w2, b2)


# ----------------------------- JAX glue --------------------------------------
def scale_rois(rois, featstride, Hf, Wf):
    r = jnp.floor(rois / float(featstride)).astype(jnp.int32)
    x1 = jnp.clip(r[:, 0], 0, Wf - 1)
    y1 = jnp.clip(r[:, 1], 0, Hf - 1)
    x2 = jnp.clip(r[:, 2], 0, Wf - 1)
    y2 = jnp.clip(r[:, 3], 0, Hf - 1)
    x2 = jnp.maximum(x2, x1)
    y2 = jnp.maximum(y2, y1)
    return jnp.stack([x1, y1, x2, y2], axis=1)


def build_roi_mask(rois_s, idx, n_batch, Hf, Wf, extra_scale):
    """(N, n_batch*Hf*Wf) f32 pooling matrix: 1/box_area inside each ROI of its
    image (times extra_scale), 0 elsewhere."""
    P = n_batch * Hf * Wf
    p = jnp.arange(P, dtype=jnp.int32)
    b_of = p // (Hf * Wf)
    r = p % (Hf * Wf)
    h_of = r // Wf
    w_of = r % Wf
    x1 = rois_s[:, 0:1]
    y1 = rois_s[:, 1:2]
    x2 = rois_s[:, 2:3]
    y2 = rois_s[:, 3:4]
    inside = ((b_of[None, :] == idx[:, None]) &
              (w_of[None, :] >= x1) & (w_of[None, :] <= x2) &
              (h_of[None, :] >= y1) & (h_of[None, :] <= y2))
    cnt = ((x2 - x1 + 1) * (y2 - y1 + 1)).astype(jnp.float32)        # (N, 1)
    return inside.astype(jnp.float32) * (extra_scale / cnt)


def mennet_forward(params, ims1, ims2, rois1, rois_index1, rois2, rois2_index2):
    B = ims1.shape[0]
    # Single layout op on the concatenated raw batch: pixel-unshuffle x4
    # (NCHW -> flat NHWC at featstride resolution).
    x = jnp.concatenate([ims1, ims2], axis=0)                        # (2B,3,H,W)
    nB, cin, H, W = x.shape
    s = FEATSTRIDE
    Hc, Wc = H // s, W // s
    x = x.reshape(nB, cin, Hc, s, Wc, s)
    x = jnp.transpose(x, (0, 2, 4, 3, 5, 1))                         # (2B,Hc,Wc,s,s,C)
    x_flat = x.reshape(nB * Hc * Wc, s * s * cin)                    # (2B*Hc*Wc, 48)

    # One fused backbone pass over both images.
    feat_flat = backbone_fused(params, x_flat, nB, Hc, Wc)           # (2B*Hf*Wf, C2)
    Hf, Wf = Hc, Wc
    pimg = Hf * Wf

    rois1_s = scale_rois(rois1, FEATSTRIDE, Hf, Wf)
    rois2_s = scale_rois(rois2, FEATSTRIDE, Hf, Wf)
    idx1 = rois_index1.astype(jnp.int32)
    idx2 = rois2_index2.astype(jnp.int32)

    # ---------------- trackerNet: correlation + ROI mask-GEMM pool + FC ------
    f1_flat = feat_flat[:B * pimg]
    f2_flat = feat_flat[B * pimg:]
    mask1 = build_roi_mask(rois1_s, idx1, B, Hf, Wf, extra_scale=1.0 / C2)
    disp_offsets = [(dyi * DISP_STRIDE - MAX_DISP, dxi * DISP_STRIDE - MAX_DISP)
                    for dyi in range(ND) for dxi in range(ND)]
    valid_corr = jnp.asarray(
        np.tile(_shift_valid_np(Hf, Wf, disp_offsets), (B, 1)))      # (B*Hf*Wf, D2)
    track_res = corr_track(mask1, valid_corr, f1_flat, f2_flat,
                           params["track_w"], params["track_b"], Wf)  # (N1, 4)

    # ---------------- reidNet: both images through one fused kernel ----------
    rois_all = jnp.concatenate([rois1_s, rois2_s], axis=0)
    idx_all = jnp.concatenate([idx1, idx2 + B], axis=0)              # image-2 offset
    mask_all = build_roi_mask(rois_all, idx_all, nB, Hf, Wf, extra_scale=1.0)
    feats_all, logits_all = reid_fused(
        mask_all, feat_flat,
        params["reid_fc1_w"], params["reid_fc1_b"],
        params["reid_fc2_w"], params["reid_fc2_b"])
    n1 = rois1.shape[0]
    reid_res = [feats_all[:n1], logits_all[:n1],
                feats_all[n1:], logits_all[n1:]]

    return track_res, reid_res


def init_params(key):
    ks = jax.random.split(key, 6)
    cin_s2d = 3 * FEATSTRIDE * FEATSTRIDE          # 48 channels after unshuffle
    return {
        "conv1_w": 0.1 * jax.random.normal(ks[0], (9 * cin_s2d, C1), jnp.float32),
        "conv1_b": jnp.zeros((1, C1), jnp.float32),
        "conv2_w": 0.1 * jax.random.normal(ks[1], (9 * C1, C2), jnp.float32),
        "conv2_b": jnp.zeros((1, C2), jnp.float32),
        "reid_fc1_w": 0.1 * jax.random.normal(ks[2], (C2, FEAT_DIM), jnp.float32),
        "reid_fc1_b": jnp.zeros((1, FEAT_DIM), jnp.float32),
        "reid_fc2_w": 0.1 * jax.random.normal(ks[3], (FEAT_DIM, NCLASSES), jnp.float32),
        "reid_fc2_b": jnp.zeros((1, NCLASSES), jnp.float32),
        "track_w": 0.1 * jax.random.normal(ks[4], (D2, TRACK_OUT), jnp.float32),
        "track_b": jnp.zeros((1, TRACK_OUT), jnp.float32),
    }


if __name__ == "__main__":
    key = jax.random.PRNGKey(0)
    params = init_params(key)

    kx = jax.random.split(jax.random.PRNGKey(0), 4)
    ims1 = jax.random.normal(kx[0], (2, 3, 16, 16), jnp.float32)     # NCHW
    ims2 = jax.random.normal(kx[1], (2, 3, 16, 16), jnp.float32)     # NCHW
    rois1 = jnp.array([[0., 0., 8., 8.],
                       [4., 4., 15., 15.],
                       [2., 0., 10., 12.]], jnp.float32)
    rois_index1 = jnp.array([0, 1, 1], jnp.int32)
    rois2 = jnp.array([[1., 1., 9., 9.],
                       [3., 2., 14., 13.],
                       [0., 0., 15., 15.]], jnp.float32)
    rois2_index2 = jnp.array([0, 0, 1], jnp.int32)

    fwd = jax.jit(mennet_forward)
    track_res, reid_res = fwd(params, ims1, ims2, rois1, rois_index1,
                              rois2, rois2_index2)
    jax.block_until_ready((track_res, reid_res))

    assert track_res.shape == (3, TRACK_OUT)
    assert reid_res[0].shape == (3, FEAT_DIM)
    assert reid_res[1].shape == (3, NCLASSES)
    assert reid_res[2].shape == (3, FEAT_DIM)
    assert reid_res[3].shape == (3, NCLASSES)
    print("KERNEL_OK")
</pallas_src>

<mosaic_0001>
module attributes {stable_mosaic.version = 11 : i64} {
  func.func @backbone_kernel(%arg0: i32, %arg1: memref<16x48xf32, #tpu.memory_space<vmem>>, %arg2: memref<16x9xf32, #tpu.memory_space<vmem>>, %arg3: memref<432x8xf32, #tpu.memory_space<vmem>>, %arg4: memref<1x8xf32, #tpu.memory_space<vmem>>, %arg5: memref<72x16xf32, #tpu.memory_space<vmem>>, %arg6: memref<1x16xf32, #tpu.memory_space<vmem>>, %arg7: memref<16x16xf32, #tpu.memory_space<vmem>>) attributes {dimension_semantics = [#tpu.dimension_semantics<parallel>], iteration_bounds = array<i64: 4>, scalar_prefetch = 0 : i64, scratch_operands = 0 : i64, tpu.core_type = #tpu.core_type<tc>, window_params = [{transform_indices = @transform_0, window_bounds = array<i64: 16, 48>}, {pipeline_mode = #tpu.pipeline_mode<synchronous>, transform_indices = @transform_1, window_bounds = array<i64: 16, 9>}, {pipeline_mode = #tpu.pipeline_mode<synchronous>, transform_indices = @transform_2, window_bounds = array<i64: 432, 8>}, {pipeline_mode = #tpu.pipeline_mode<synchronous>, transform_indices = @transform_3, window_bounds = array<i64: 1, 8>}, {pipeline_mode = #tpu.pipeline_mode<synchronous>, transform_indices = @transform_4, window_bounds = array<i64: 72, 16>}, {pipeline_mode = #tpu.pipeline_mode<synchronous>, transform_indices = @transform_5, window_bounds = array<i64: 1, 16>}, {transform_indices = @transform_6, window_bounds = array<i64: 16, 16>}]} {
    %c0 = arith.constant 0 : index
    %c0_0 = arith.constant 0 : index
    %0 = vector.load %arg1[%c0, %c0_0] : memref<16x48xf32, #tpu.memory_space<vmem>>, vector<16x48xf32>
    %c0_1 = arith.constant 0 : index
    %c0_2 = arith.constant 0 : index
    %1 = vector.load %arg2[%c0_1, %c0_2] : memref<16x9xf32, #tpu.memory_space<vmem>>, vector<16x9xf32>
    %c0_3 = arith.constant 0 : index
    %c0_4 = arith.constant 0 : index
    %2 = vector.load %arg3[%c0_3, %c0_4] : memref<432x8xf32, #tpu.memory_space<vmem>>, vector<432x8xf32>
    %c0_5 = arith.constant 0 : index
    %c0_6 = arith.constant 0 : index
    %3 = vector.load %arg5[%c0_5, %c0_6] : memref<72x16xf32, #tpu.memory_space<vmem>>, vector<72x16xf32>
    %c0_7 = arith.constant 0 : index
    %c0_8 = arith.constant 0 : index
    %4 = vector.load %arg4[%c0_7, %c0_8] : memref<1x8xf32, #tpu.memory_space<vmem>>, vector<1x8xf32>
    %cst = arith.constant 0.000000e+00 : f32
    %5 = vector.broadcast %cst : f32 to vector<16x8xf32>
    %cst_9 = arith.constant 0.000000e+00 : f32
    %6 = vector.broadcast %cst_9 : f32 to vector<5x48xf32>
    %7 = vector.extract_strided_slice %0 {offsets = [0, 0], sizes = [11, 48], strides = [1, 1]} : vector<16x48xf32> to vector<11x48xf32>
    %8 = tpu.concatenate %6, %7 in 0 : vector<5x48xf32>, vector<11x48xf32> -> vector<16x48xf32>
    %9 = vector.extract_strided_slice %1 {offsets = [0, 0], sizes = [16, 1], strides = [1, 1]} : vector<16x9xf32> to vector<16x1xf32>
    %10 = vector.broadcast %9 : vector<16x1xf32> to vector<16x48xf32>
    %11 = arith.mulf %8, %10 : vector<16x48xf32>
    %12 = vector.extract_strided_slice %2 {offsets = [0, 0], sizes = [48, 8], strides = [1, 1]} : vector<432x8xf32> to vector<48x8xf32>
    %cst_10 = arith.constant dense<0.000000e+00> : vector<16x8xf32>
    %13 = tpu.matmul %11, %12, %cst_10 {dimension_numbers = #tpu.dot_dimension_numbers<[1], [0], [0], [1], [0, 0, 1, 1], [], []>} : vector<16x48xf32>, vector<48x8xf32>, vector<16x8xf32> -> vector<16x8xf32>
    %14 = arith.addf %5, %13 : vector<16x8xf32>
    %cst_11 = arith.constant 0.000000e+00 : f32
    %15 = vector.broadcast %cst_11 : f32 to vector<4x48xf32>
    %16 = vector.extract_strided_slice %0 {offsets = [0, 0], sizes = [12, 48], strides = [1, 1]} : vector<16x48xf32> to vector<12x48xf32>
    %17 = tpu.concatenate %15, %16 in 0 : vector<4x48xf32>, vector<12x48xf32> -> vector<16x48xf32>
    %18 = vector.extract_strided_slice %1 {offsets = [0, 1], sizes = [16, 1], strides = [1, 1]} : vector<16x9xf32> to vector<16x1xf32>
    %19 = vector.broadcast %18 : vector<16x1xf32> to vector<16x48xf32>
    %20 = arith.mulf %17, %19 : vector<16x48xf32>
    %21 = vector.extract_strided_slice %2 {offsets = [48, 0], sizes = [48, 8], strides = [1, 1]} : vector<432x8xf32> to vector<48x8xf32>
    %cst_12 = arith.constant dense<0.000000e+00> : vector<16x8xf32>
    %22 = tpu.matmul %20, %21, %cst_12 {dimension_numbers = #tpu.dot_dimension_numbers<[1], [0], [0], [1], [0, 0, 1, 1], [], []>} : vector<16x48xf32>, vector<48x8xf32>, vector<16x8xf32> -> vector<16x8xf32>
    %23 = arith.addf %14, %22 : vector<16x8xf32>
    %cst_13 = arith.constant 0.000000e+00 : f32
    %24 = vector.broadcast %cst_13 : f32 to vector<3x48xf32>
    %25 = vector.extract_strided_slice %0 {offsets = [0, 0], sizes = [13, 48], strides = [1, 1]} : vector<16x48xf32> to vector<13x48xf32>
    %26 = tpu.concatenate %24, %25 in 0 : vector<3x48xf32>, vector<13x48xf32> -> vector<16x48xf32>
    %27 = vector.extract_strided_slice %1 {offsets = [0, 2], sizes = [16, 1], strides = [1, 1]} : vector<16x9xf32> to vector<16x1xf32>
    %28 = vector.broadcast %27 : vector<16x1xf32> to vector<16x48xf32>
    %29 = arith.mulf %26, %28 : vector<16x48xf32>
    %30 = vector.extract_strided_slice %2 {offsets = [96, 0], sizes = [48, 8], strides = [1, 1]} : vector<432x8xf32> to vector<48x8xf32>
    %cst_14 = arith.constant dense<0.000000e+00> : vector<16x8xf32>
    %31 = tpu.matmul %29, %30, %cst_14 {dimension_numbers = #tpu.dot_dimension_numbers<[1], [0], [0], [1], [0, 0, 1, 1], [], []>} : vector<16x48xf32>, vector<48x8xf32>, vector<16x8xf32> -> vector<16x8xf32>
    %32 = arith.addf %23, %31 : vector<16x8xf32>
    %cst_15 = arith.constant 0.000000e+00 : f32
    %33 = vector.broadcast %cst_15 : f32 to vector<1x48xf32>
    %34 = vector.extract_strided_slice %0 {offsets = [0, 0], sizes = [15, 48], strides = [1, 1]} : vector<16x48xf32> to vector<15x48xf32>
    %35 = tpu.concatenate %33, %34 in 0 : vector<1x48xf32>, vector<15x48xf32> -> vector<16x48xf32>
    %36 = vector.extract_strided_slice %1 {offsets = [0, 3], sizes = [16, 1], strides = [1, 1]} : vector<16x9xf32> to vector<16x1xf32>
    %37 = vector.broadcast %36 : vector<16x1xf32> to vector<16x48xf32>
    %38 = arith.mulf %35, %37 : vector<16x48xf32>
    %39 = vector.extract_strided_slice %2 {offsets = [144, 0], sizes = [48, 8], strides = [1, 1]} : vector<432x8xf32> to vector<48x8xf32>
    %cst_16 = arith.constant dense<0.000000e+00> : vector<16x8xf32>
    %40 = tpu.matmul %38, %39, %cst_16 {dimension_numbers = #tpu.dot_dimension_numbers<[1], [0], [0], [1], [0, 0, 1, 1], [], []>} : vector<16x48xf32>, vector<48x8xf32>, vector<16x8xf32> -> vector<16x8xf32>
    %41 = arith.addf %32, %40 : vector<16x8xf32>
    %42 = vector.extract_strided_slice %1 {offsets = [0, 4], sizes = [16, 1], strides = [1, 1]} : vector<16x9xf32> to vector<16x1xf32>
    %43 = vector.broadcast %42 : vector<16x1xf32> to vector<16x48xf32>
    %44 = arith.mulf %0, %43 : vector<16x48xf32>
    %45 = vector.extract_strided_slice %2 {offsets = [192, 0], sizes = [48, 8], strides = [1, 1]} : vector<432x8xf32> to vector<48x8xf32>
    %cst_17 = arith.constant dense<0.000000e+00> : vector<16x8xf32>
    %46 = tpu.matmul %44, %45, %cst_17 {dimension_numbers = #tpu.dot_dimension_numbers<[1], [0], [0], [1], [0, 0, 1, 1], [], []>} : vector<16x48xf32>, vector<48x8xf32>, vector<16x8xf32> -> vector<16x8xf32>
    %47 = arith.addf %41, %46 : vector<16x8xf32>
    %cst_18 = arith.constant 0.000000e+00 : f32
    %48 = vector.broadcast %cst_18 : f32 to vector<1x48xf32>
    %49 = vector.extract_strided_slice %0 {offsets = [1, 0], sizes = [15, 48], strides = [1, 1]} : vector<16x48xf32> to vector<15x48xf32>
    %50 = tpu.concatenate %49, %48 in 0 : vector<15x48xf32>, vector<1x48xf32> -> vector<16x48xf32>
    %51 = vector.extract_strided_slice %1 {offsets = [0, 5], sizes = [16, 1], strides = [1, 1]} : vector<16x9xf32> to vector<16x1xf32>
    %52 = vector.broadcast %51 : vector<16x1xf32> to vector<16x48xf32>
    %53 = arith.mulf %50, %52 : vector<16x48xf32>
    %54 = vector.extract_strided_slice %2 {offsets = [240, 0], sizes = [48, 8], strides = [1, 1]} : vector<432x8xf32> to vector<48x8xf32>
    %cst_19 = arith.constant dense<0.000000e+00> : vector<16x8xf32>
    %55 = tpu.matmul %53, %54, %cst_19 {dimension_numbers = #tpu.dot_dimension_numbers<[1], [0], [0], [1], [0, 0, 1, 1], [], []>} : vector<16x48xf32>, vector<48x8xf32>, vector<16x8xf32> -> vector<16x8xf32>
    %56 = arith.addf %47, %55 : vector<16x8xf32>
    %cst_20 = arith.constant 0.000000e+00 : f32
    %57 = vector.broadcast %cst_20 : f32 to vector<3x48xf32>
    %58 = vector.extract_strided_slice %0 {offsets = [3, 0], sizes = [13, 48], strides = [1, 1]} : vector<16x48xf32> to vector<13x48xf32>
    %59 = tpu.concatenate %58, %57 in 0 : vector<13x48xf32>, vector<3x48xf32> -> vector<16x48xf32>
    %60 = vector.extract_strided_slice %1 {offsets = [0, 6], sizes = [16, 1], strides = [1, 1]} : vector<16x9xf32> to vector<16x1xf32>
    %61 = vector.broadcast %60 : vector<16x1xf32> to vector<16x48xf32>
    %62 = arith.mulf %59, %61 : vector<16x48xf32>
    %63 = vector.extract_strided_slice %2 {offsets = [288, 0], sizes = [48, 8], strides = [1, 1]} : vector<432x8xf32> to vector<48x8xf32>
    %cst_21 = arith.constant dense<0.000000e+00> : vector<16x8xf32>
    %64 = tpu.matmul %62, %63, %cst_21 {dimension_numbers = #tpu.dot_dimension_numbers<[1], [0], [0], [1], [0, 0, 1, 1], [], []>} : vector<16x48xf32>, vector<48x8xf32>, vector<16x8xf32> -> vector<16x8xf32>
    %65 = arith.addf %56, %64 : vector<16x8xf32>
    %cst_22 = arith.constant 0.000000e+00 : f32
    %66 = vector.broadcast %cst_22 : f32 to vector<4x48xf32>
    %67 = vector.extract_strided_slice %0 {offsets = [4, 0], sizes = [12, 48], strides = [1, 1]} : vector<16x48xf32> to vector<12x48xf32>
    %68 = tpu.concatenate %67, %66 in 0 : vector<12x48xf32>, vector<4x48xf32> -> vector<16x48xf32>
    %69 = vector.extract_strided_slice %1 {offsets = [0, 7], sizes = [16, 1], strides = [1, 1]} : vector<16x9xf32> to vector<16x1xf32>
    %70 = vector.broadcast %69 : vector<16x1xf32> to vector<16x48xf32>
    %71 = arith.mulf %68, %70 : vector<16x48xf32>
    %72 = vector.extract_strided_slice %2 {offsets = [336, 0], sizes = [48, 8], strides = [1, 1]} : vector<432x8xf32> to vector<48x8xf32>
    %cst_23 = arith.constant dense<0.000000e+00> : vector<16x8xf32>
    %73 = tpu.matmul %71, %72, %cst_23 {dimension_numbers = #tpu.dot_dimension_numbers<[1], [0], [0], [1], [0, 0, 1, 1], [], []>} : vector<16x48xf32>, vector<48x8xf32>, vector<16x8xf32> -> vector<16x8xf32>
    %74 = arith.addf %65, %73 : vector<16x8xf32>
    %cst_24 = arith.constant 0.000000e+00 : f32
    %75 = vector.broadcast %cst_24 : f32 to vector<5x48xf32>
    %76 = vector.extract_strided_slice %0 {offsets = [5, 0], sizes = [11, 48], strides = [1, 1]} : vector<16x48xf32> to vector<11x48xf32>
    %77 = tpu.concatenate %76, %75 in 0 : vector<11x48xf32>, vector<5x48xf32> -> vector<16x48xf32>
    %78 = vector.extract_strided_slice %1 {offsets = [0, 8], sizes = [16, 1], strides = [1, 1]} : vector<16x9xf32> to vector<16x1xf32>
    %79 = vector.broadcast %78 : vector<16x1xf32> to vector<16x48xf32>
    %80 = arith.mulf %77, %79 : vector<16x48xf32>
    %81 = vector.extract_strided_slice %2 {offsets = [384, 0], sizes = [48, 8], strides = [1, 1]} : vector<432x8xf32> to vector<48x8xf32>
    %cst_25 = arith.constant dense<0.000000e+00> : vector<16x8xf32>
    %82 = tpu.matmul %80, %81, %cst_25 {dimension_numbers = #tpu.dot_dimension_numbers<[1], [0], [0], [1], [0, 0, 1, 1], [], []>} : vector<16x48xf32>, vector<48x8xf32>, vector<16x8xf32> -> vector<16x8xf32>
    %83 = arith.addf %74, %82 : vector<16x8xf32>
    %84 = vector.broadcast %4 : vector<1x8xf32> to vector<16x8xf32>
    %85 = arith.addf %83, %84 : vector<16x8xf32>
    %cst_26 = arith.constant 0.000000e+00 : f32
    %86 = vector.broadcast %cst_26 : f32 to vector<16x8xf32>
    %87 = arith.maximumf %85, %86 : vector<16x8xf32>
    %c0_27 = arith.constant 0 : index
    %c0_28 = arith.constant 0 : index
    %88 = vector.load %arg6[%c0_27, %c0_28] : memref<1x16xf32, #tpu.memory_space<vmem>>, vector<1x16xf32>
    %cst_29 = arith.constant 0.000000e+00 : f32
    %89 = vector.broadcast %cst_29 : f32 to vector<16x16xf32>
    %cst_30 = arith.constant 0.000000e+00 : f32
    %90 = vector.broadcast %cst_30 : f32 to vector<5x8xf32>
    %91 = vector.extract_strided_slice %87 {offsets = [0, 0], sizes = [11, 8], strides = [1, 1]} : vector<16x8xf32> to vector<11x8xf32>
    %92 = tpu.concatenate %90, %91 in 0 : vector<5x8xf32>, vector<11x8xf32> -> vector<16x8xf32>
    %93 = vector.extract_strided_slice %1 {offsets = [0, 0], sizes = [16, 1], strides = [1, 1]} : vector<16x9xf32> to vector<16x1xf32>
    %94 = vector.broadcast %93 : vector<16x1xf32> to vector<16x8xf32>
    %95 = arith.mulf %92, %94 : vector<16x8xf32>
    %96 = vector.extract_strided_slice %3 {offsets = [0, 0], sizes = [8, 16], strides = [1, 1]} : vector<72x16xf32> to vector<8x16xf32>
    %cst_31 = arith.constant dense<0.000000e+00> : vector<16x16xf32>
    %97 = tpu.matmul %95, %96, %cst_31 {dimension_numbers = #tpu.dot_dimension_numbers<[1], [0], [0], [1], [0, 0, 1, 1], [], []>} : vector<16x8xf32>, vector<8x16xf32>, vector<16x16xf32> -> vector<16x16xf32>
    %98 = arith.addf %89, %97 : vector<16x16xf32>
    %cst_32 = arith.constant 0.000000e+00 : f32
    %99 = vector.broadcast %cst_32 : f32 to vector<4x8xf32>
    %100 = vector.extract_strided_slice %87 {offsets = [0, 0], sizes = [12, 8], strides = [1, 1]} : vector<16x8xf32> to vector<12x8xf32>
    %101 = tpu.concatenate %99, %100 in 0 : vector<4x8xf32>, vector<12x8xf32> -> vector<16x8xf32>
    %102 = vector.extract_strided_slice %1 {offsets = [0, 1], sizes = [16, 1], strides = [1, 1]} : vector<16x9xf32> to vector<16x1xf32>
    %103 = vector.broadcast %102 : vector<16x1xf32> to vector<16x8xf32>
    %104 = arith.mulf %101, %103 : vector<16x8xf32>
    %105 = vector.extract_strided_slice %3 {offsets = [8, 0], sizes = [8, 16], strides = [1, 1]} : vector<72x16xf32> to vector<8x16xf32>
    %cst_33 = arith.constant dense<0.000000e+00> : vector<16x16xf32>
    %106 = tpu.matmul %104, %105, %cst_33 {dimension_numbers = #tpu.dot_dimension_numbers<[1], [0], [0], [1], [0, 0, 1, 1], [], []>} : vector<16x8xf32>, vector<8x16xf32>, vector<16x16xf32> -> vector<16x16xf32>
    %107 = arith.addf %98, %106 : vector<16x16xf32>
    %cst_34 = arith.constant 0.000000e+00 : f32
    %108 = vector.broadcast %cst_34 : f32 to vector<3x8xf32>
    %109 = vector.extract_strided_slice %87 {offsets = [0, 0], sizes = [13, 8], strides = [1, 1]} : vector<16x8xf32> to vector<13x8xf32>
    %110 = tpu.concatenate %108, %109 in 0 : vector<3x8xf32>, vector<13x8xf32> -> vector<16x8xf32>
    %111 = vector.extract_strided_slice %1 {offsets = [0, 2], sizes = [16, 1], strides = [1, 1]} : vector<16x9xf32> to vector<16x1xf32>
    %112 = vector.broadcast %111 : vector<16x1xf32> to vector<16x8xf32>
    %113 = arith.mulf %110, %112 : vector<16x8xf32>
    %114 = vector.extract_strided_slice %3 {offsets = [16, 0], sizes = [8, 16], strides = [1, 1]} : vector<72x16xf32> to vector<8x16xf32>
    %cst_35 = arith.constant dense<0.000000e+00> : vector<16x16xf32>
    %115 = tpu.matmul %113, %114, %cst_35 {dimension_numbers = #tpu.dot_dimension_numbers<[1], [0], [0], [1], [0, 0, 1, 1], [], []>} : vector<16x8xf32>, vector<8x16xf32>, vector<16x16xf32> -> vector<16x16xf32>
    %116 = arith.addf %107, %115 : vector<16x16xf32>
    %cst_36 = arith.constant 0.000000e+00 : f32
    %117 = vector.broadcast %cst_36 : f32 to vector<1x8xf32>
    %118 = vector.extract_strided_slice %87 {offsets = [0, 0], sizes = [15, 8], strides = [1, 1]} : vector<16x8xf32> to vector<15x8xf32>
    %119 = tpu.concatenate %117, %118 in 0 : vector<1x8xf32>, vector<15x8xf32> -> vector<16x8xf32>
    %120 = vector.extract_strided_slice %1 {offsets = [0, 3], sizes = [16, 1], strides = [1, 1]} : vector<16x9xf32> to vector<16x1xf32>
    %121 = vector.broadcast %120 : vector<16x1xf32> to vector<16x8xf32>
    %122 = arith.mulf %119, %121 : vector<16x8xf32>
    %123 = vector.extract_strided_slice %3 {offsets = [24, 0], sizes = [8, 16], strides = [1, 1]} : vector<72x16xf32> to vector<8x16xf32>
    %cst_37 = arith.constant dense<0.000000e+00> : vector<16x16xf32>
    %124 = tpu.matmul %122, %123, %cst_37 {dimension_numbers = #tpu.dot_dimension_numbers<[1], [0], [0], [1], [0, 0, 1, 1], [], []>} : vector<16x8xf32>, vector<8x16xf32>, vector<16x16xf32> -> vector<16x16xf32>
    %125 = arith.addf %116, %124 : vector<16x16xf32>
    %126 = vector.extract_strided_slice %1 {offsets = [0, 4], sizes = [16, 1], strides = [1, 1]} : vector<16x9xf32> to vector<16x1xf32>
    %127 = vector.broadcast %126 : vector<16x1xf32> to vector<16x8xf32>
    %128 = arith.mulf %87, %127 : vector<16x8xf32>
    %129 = vector.extract_strided_slice %3 {offsets = [32, 0], sizes = [8, 16], strides = [1, 1]} : vector<72x16xf32> to vector<8x16xf32>
    %cst_38 = arith.constant dense<0.000000e+00> : vector<16x16xf32>
    %130 = tpu.matmul %128, %129, %cst_38 {dimension_numbers = #tpu.dot_dimension_numbers<[1], [0], [0], [1], [0, 0, 1, 1], [], []>} : vector<16x8xf32>, vector<8x16xf32>, vector<16x16xf32> -> vector<16x16xf32>
    %131 = arith.addf %125, %130 : vector<16x16xf32>
    %cst_39 = arith.constant 0.000000e+00 : f32
    %132 = vector.broadcast %cst_39 : f32 to vector<1x8xf32>
    %133 = vector.extract_strided_slice %87 {offsets = [1, 0], sizes = [15, 8], strides = [1, 1]} : vector<16x8xf32> to vector<15x8xf32>
    %134 = tpu.concatenate %133, %132 in 0 : vector<15x8xf32>, vector<1x8xf32> -> vector<16x8xf32>
    %135 = vector.extract_strided_slice %1 {offsets = [0, 5], sizes = [16, 1], strides = [1, 1]} : vector<16x9xf32> to vector<16x1xf32>
    %136 = vector.broadcast %135 : vector<16x1xf32> to vector<16x8xf32>
    %137 = arith.mulf %134, %136 : vector<16x8xf32>
    %138 = vector.extract_strided_slice %3 {offsets = [40, 0], sizes = [8, 16], strides = [1, 1]} : vector<72x16xf32> to vector<8x16xf32>
    %cst_40 = arith.constant dense<0.000000e+00> : vector<16x16xf32>
    %139 = tpu.matmul %137, %138, %cst_40 {dimension_numbers = #tpu.dot_dimension_numbers<[1], [0], [0], [1], [0, 0, 1, 1], [], []>} : vector<16x8xf32>, vector<8x16xf32>, vector<16x16xf32> -> vector<16x16xf32>
    %140 = arith.addf %131, %139 : vector<16x16xf32>
    %cst_41 = arith.constant 0.000000e+00 : f32
    %141 = vector.broadcast %cst_41 : f32 to vector<3x8xf32>
    %142 = vector.extract_strided_slice %87 {offsets = [3, 0], sizes = [13, 8], strides = [1, 1]} : vector<16x8xf32> to vector<13x8xf32>
    %143 = tpu.concatenate %142, %141 in 0 : vector<13x8xf32>, vector<3x8xf32> -> vector<16x8xf32>
    %144 = vector.extract_strided_slice %1 {offsets = [0, 6], sizes = [16, 1], strides = [1, 1]} : vector<16x9xf32> to vector<16x1xf32>
    %145 = vector.broadcast %144 : vector<16x1xf32> to vector<16x8xf32>
    %146 = arith.mulf %143, %145 : vector<16x8xf32>
    %147 = vector.extract_strided_slice %3 {offsets = [48, 0], sizes = [8, 16], strides = [1, 1]} : vector<72x16xf32> to vector<8x16xf32>
    %cst_42 = arith.constant dense<0.000000e+00> : vector<16x16xf32>
    %148 = tpu.matmul %146, %147, %cst_42 {dimension_numbers = #tpu.dot_dimension_numbers<[1], [0], [0], [1], [0, 0, 1, 1], [], []>} : vector<16x8xf32>, vector<8x16xf32>, vector<16x16xf32> -> vector<16x16xf32>
    %149 = arith.addf %140, %148 : vector<16x16xf32>
    %cst_43 = arith.constant 0.000000e+00 : f32
    %150 = vector.broadcast %cst_43 : f32 to vector<4x8xf32>
    %151 = vector.extract_strided_slice %87 {offsets = [4, 0], sizes = [12, 8], strides = [1, 1]} : vector<16x8xf32> to vector<12x8xf32>
    %152 = tpu.concatenate %151, %150 in 0 : vector<12x8xf32>, vector<4x8xf32> -> vector<16x8xf32>
    %153 = vector.extract_strided_slice %1 {offsets = [0, 7], sizes = [16, 1], strides = [1, 1]} : vector<16x9xf32> to vector<16x1xf32>
    %154 = vector.broadcast %153 : vector<16x1xf32> to vector<16x8xf32>
    %155 = arith.mulf %152, %154 : vector<16x8xf32>
    %156 = vector.extract_strided_slice %3 {offsets = [56, 0], sizes = [8, 16], strides = [1, 1]} : vector<72x16xf32> to vector<8x16xf32>
    %cst_44 = arith.constant dense<0.000000e+00> : vector<16x16xf32>
    %157 = tpu.matmul %155, %156, %cst_44 {dimension_numbers = #tpu.dot_dimension_numbers<[1], [0], [0], [1], [0, 0, 1, 1], [], []>} : vector<16x8xf32>, vector<8x16xf32>, vector<16x16xf32> -> vector<16x16xf32>
    %158 = arith.addf %149, %157 : vector<16x16xf32>
    %cst_45 = arith.constant 0.000000e+00 : f32
    %159 = vector.broadcast %cst_45 : f32 to vector<5x8xf32>
    %160 = vector.extract_strided_slice %87 {offsets = [5, 0], sizes = [11, 8], strides = [1, 1]} : vector<16x8xf32> to vector<11x8xf32>
    %161 = tpu.concatenate %160, %159 in 0 : vector<11x8xf32>, vector<5x8xf32> -> vector<16x8xf32>
    %162 = vector.extract_strided_slice %1 {offsets = [0, 8], sizes = [16, 1], strides = [1, 1]} : vector<16x9xf32> to vector<16x1xf32>
    %163 = vector.broadcast %162 : vector<16x1xf32> to vector<16x8xf32>
    %164 = arith.mulf %161, %163 : vector<16x8xf32>
    %165 = vector.extract_strided_slice %3 {offsets = [64, 0], sizes = [8, 16], strides = [1, 1]} : vector<72x16xf32> to vector<8x16xf32>
    %cst_46 = arith.constant dense<0.000000e+00> : vector<16x16xf32>
    %166 = tpu.matmul %164, %165, %cst_46 {dimension_numbers = #tpu.dot_dimension_numbers<[1], [0], [0], [1], [0, 0, 1, 1], [], []>} : vector<16x8xf32>, vector<8x16xf32>, vector<16x16xf32> -> vector<16x16xf32>
    %167 = arith.addf %158, %166 : vector<16x16xf32>
    %168 = vector.broadcast %88 : vector<1x16xf32> to vector<16x16xf32>
    %169 = arith.addf %167, %168 : vector<16x16xf32>
    %cst_47 = arith.constant 0.000000e+00 : f32
    %170 = vector.broadcast %cst_47 : f32 to vector<16x16xf32>
    %171 = arith.maximumf %169, %170 : vector<16x16xf32>
    %c0_48 = arith.constant 0 : index
    %c0_49 = arith.constant 0 : index
    %172 = vector.load %arg7[%c0_48, %c0_49] : memref<16x16xf32, #tpu.memory_space<vmem>>, vector<16x16xf32>
    tpu.vector_store %arg7[%c0_48, %c0_49], %171 {strides = array<i32>} : memref<16x16xf32, #tpu.memory_space<vmem>>, vector<16x16xf32>,
    return
  }
  func.func @transform_0(%arg0: i32) -> (i32, i32) {
    %c0_i32 = arith.constant 0 : i32
    %c0_i32_0 = arith.constant 0 : i32
    return %arg0, %c0_i32 : i32, i32
  }
  func.func @transform_1(%arg0: i32) -> (i32, i32) {
    %c0_i32 = arith.constant 0 : i32
    %c0_i32_0 = arith.constant 0 : i32
    %c0_i32_1 = arith.constant 0 : i32
    return %c0_i32, %c0_i32_0 : i32, i32
  }
  func.func @transform_2(%arg0: i32) -> (i32, i32) {
    %c0_i32 = arith.constant 0 : i32
    %c0_i32_0 = arith.constant 0 : i32
    %c0_i32_1 = arith.constant 0 : i32
    return %c0_i32, %c0_i32_0 : i32, i32
  }
  func.func @transform_3(%arg0: i32) -> (i32, i32) {
    %c0_i32 = arith.constant 0 : i32
    %c0_i32_0 = arith.constant 0 : i32
    %c0_i32_1 = arith.constant 0 : i32
    return %c0_i32, %c0_i32_0 : i32, i32
  }
  func.func @transform_4(%arg0: i32) -> (i32, i32) {
    %c0_i32 = arith.constant 0 : i32
    %c0_i32_0 = arith.constant 0 : i32
    %c0_i32_1 = arith.constant 0 : i32
    return %c0_i32, %c0_i32_0 : i32, i32
  }
  func.func @transform_5(%arg0: i32) -> (i32, i32) {
    %c0_i32 = arith.constant 0 : i32
    %c0_i32_0 = arith.constant 0 : i32
    %c0_i32_1 = arith.constant 0 : i32
    return %c0_i32, %c0_i32_0 : i32, i32
  }
  func.func @transform_6(%arg0: i32) -> (i32, i32) {
    %c0_i32 = arith.constant 0 : i32
    %c0_i32_0 = arith.constant 0 : i32
    return %arg0, %c0_i32 : i32, i32
  }
}

module attributes {stable_mosaic.version = 11 : i64} {
  func.func @corr_track_kernel(%arg0: i32, %arg1: memref<3x32xf32, #tpu.memory_space<vmem>>, %arg2: memref<32x25xf32, #tpu.memory_space<vmem>>, %arg3: memref<32x16xf32, #tpu.memory_space<vmem>>, %arg4: memref<32x16xf32, #tpu.memory_space<vmem>>, %arg5: memref<25x4xf32, #tpu.memory_space<vmem>>, %arg6: memref<1x4xf32, #tpu.memory_space<vmem>>, %arg7: memref<3x4xf32, #tpu.memory_space<vmem>>) attributes {dimension_semantics = [#tpu.dimension_semantics<arbitrary>], iteration_bounds = array<i64: 1>, scalar_prefetch = 0 : i64, scratch_operands = 0 : i64, tpu.core_type = #tpu.core_type<tc>, window_params = [{pipeline_mode = #tpu.pipeline_mode<synchronous>, transform_indices = @transform_0, window_bounds = array<i64: 3, 32>}, {pipeline_mode = #tpu.pipeline_mode<synchronous>, transform_indices = @transform_1, window_bounds = array<i64: 32, 25>}, {pipeline_mode = #tpu.pipeline_mode<synchronous>, transform_indices = @transform_2, window_bounds = array<i64: 32, 16>}, {pipeline_mode = #tpu.pipeline_mode<synchronous>, transform_indices = @transform_3, window_bounds = array<i64: 32, 16>}, {pipeline_mode = #tpu.pipeline_mode<synchronous>, transform_indices = @transform_4, window_bounds = array<i64: 25, 4>}, {pipeline_mode = #tpu.pipeline_mode<synchronous>, transform_indices = @transform_5, window_bounds = array<i64: 1, 4>}, {pipeline_mode = #tpu.pipeline_mode<synchronous>, transform_indices = @transform_6, window_bounds = array<i64: 3, 4>}]} {
    %c0 = arith.constant 0 : index
    %c0_0 = arith.constant 0 : index
    %0 = vector.load %arg3[%c0, %c0_0] : memref<32x16xf32, #tpu.memory_space<vmem>>, vector<32x16xf32>
    %c0_1 = arith.constant 0 : index
    %c0_2 = arith.constant 0 : index
    %1 = vector.load %arg4[%c0_1, %c0_2] : memref<32x16xf32, #tpu.memory_space<vmem>>, vector<32x16xf32>
    %c0_3 = arith.constant 0 : index
    %c0_4 = arith.constant 0 : index
    %2 = vector.load %arg1[%c0_3, %c0_4] : memref<3x32xf32, #tpu.memory_space<vmem>>, vector<3x32xf32>
    %c0_5 = arith.constant 0 : index
    %c0_6 = arith.constant 0 : index
    %3 = vector.load %arg2[%c0_5, %c0_6] : memref<32x25xf32, #tpu.memory_space<vmem>>, vector<32x25xf32>
    %cst = arith.constant 0.000000e+00 : f32
    %4 = vector.broadcast %cst : f32 to vector<10x16xf32>
    %5 = vector.extract_strided_slice %1 {offsets = [0, 0], sizes = [22, 16], strides = [1, 1]} : vector<32x16xf32> to vector<22x16xf32>
    %6 = tpu.concatenate %4, %5 in 0 : vector<10x16xf32>, vector<22x16xf32> -> vector<32x16xf32>
    %7 = vector.extract_strided_slice %3 {offsets = [0, 0], sizes = [32, 1], strides = [1, 1]} : vector<32x25xf32> to vector<32x1xf32>
    %8 = vector.broadcast %7 : vector<32x1xf32> to vector<32x16xf32>
    %9 = arith.mulf %6, %8 : vector<32x16xf32>
    %10 = arith.mulf %0, %9 : vector<32x16xf32>
    %cst_7 = arith.constant dense<0.000000e+00> : vector<3x16xf32>
    %11 = tpu.matmul %2, %10, %cst_7 {dimension_numbers = #tpu.dot_dimension_numbers<[1], [0], [0], [1], [0, 0, 1, 1], [], []>} : vector<3x32xf32>, vector<32x16xf32>, vector<3x16xf32> -> vector<3x16xf32>
    %cst_8 = arith.constant dense<0.000000e+00> : vector<3xf32>
    %12 = vector.multi_reduction <add>, %11, %cst_8 [1] : vector<3x16xf32> to vector<3xf32>
    %13 = vector.shape_cast %12 : vector<3xf32> to vector<3x1xf32>
    %cst_9 = arith.constant 0.000000e+00 : f32
    %14 = vector.broadcast %cst_9 : f32 to vector<9x16xf32>
    %15 = vector.extract_strided_slice %1 {offsets = [0, 0], sizes = [23, 16], strides = [1, 1]} : vector<32x16xf32> to vector<23x16xf32>
    %16 = tpu.concatenate %14, %15 in 0 : vector<9x16xf32>, vector<23x16xf32> -> vector<32x16xf32>
    %17 = vector.extract_strided_slice %3 {offsets = [0, 1], sizes = [32, 1], strides = [1, 1]} : vector<32x25xf32> to vector<32x1xf32>
    %18 = vector.broadcast %17 : vector<32x1xf32> to vector<32x16xf32>
    %19 = arith.mulf %16, %18 : vector<32x16xf32>
    %20 = arith.mulf %0, %19 : vector<32x16xf32>
    %cst_10 = arith.constant dense<0.000000e+00> : vector<3x16xf32>
    %21 = tpu.matmul %2, %20, %cst_10 {dimension_numbers = #tpu.dot_dimension_numbers<[1], [0], [0], [1], [0, 0, 1, 1], [], []>} : vector<3x32xf32>, vector<32x16xf32>, vector<3x16xf32> -> vector<3x16xf32>
    %cst_11 = arith.constant dense<0.000000e+00> : vector<3xf32>
    %22 = vector.multi_reduction <add>, %21, %cst_11 [1] : vector<3x16xf32> to vector<3xf32>
    %23 = vector.shape_cast %22 : vector<3xf32> to vector<3x1xf32>
    %cst_12 = arith.constant 0.000000e+00 : f32
    %24 = vector.broadcast %cst_12 : f32 to vector<8x16xf32>
    %25 = vector.extract_strided_slice %1 {offsets = [0, 0], sizes = [24, 16], strides = [1, 1]} : vector<32x16xf32> to vector<24x16xf32>
    %26 = tpu.concatenate %24, %25 in 0 : vector<8x16xf32>, vector<24x16xf32> -> vector<32x16xf32>
    %27 = vector.extract_strided_slice %3 {offsets = [0, 2], sizes = [32, 1], strides = [1, 1]} : vector<32x25xf32> to vector<32x1xf32>
    %28 = vector.broadcast %27 : vector<32x1xf32> to vector<32x16xf32>
    %29 = arith.mulf %26, %28 : vector<32x16xf32>
    %30 = arith.mulf %0, %29 : vector<32x16xf32>
    %cst_13 = arith.constant dense<0.000000e+00> : vector<3x16xf32>
    %31 = tpu.matmul %2, %30, %cst_13 {dimension_numbers = #tpu.dot_dimension_numbers<[1], [0], [0], [1], [0, 0, 1, 1], [], []>} : vector<3x32xf32>, vector<32x16xf32>, vector<3x16xf32> -> vector<3x16xf32>
    %cst_14 = arith.constant dense<0.000000e+00> : vector<3xf32>
    %32 = vector.multi_reduction <add>, %31, %cst_14 [1] : vector<3x16xf32> to vector<3xf32>
    %33 = vector.shape_cast %32 : vector<3xf32> to vector<3x1xf32>
    %cst_15 = arith.constant 0.000000e+00 : f32
    %34 = vector.broadcast %cst_15 : f32 to vector<7x16xf32>
    %35 = vector.extract_strided_slice %1 {offsets = [0, 0], sizes = [25, 16], strides = [1, 1]} : vector<32x16xf32> to vector<25x16xf32>
    %36 = tpu.concatenate %34, %35 in 0 : vector<7x16xf32>, vector<25x16xf32> -> vector<32x16xf32>
    %37 = vector.extract_strided_slice %3 {offsets = [0, 3], sizes = [32, 1], strides = [1, 1]} : vector<32x25xf32> to vector<32x1xf32>
    %38 = vector.broadcast %37 : vector<32x1xf32> to vector<32x16xf32>
    %39 = arith.mulf %36, %38 : vector<32x16xf32>
    %40 = arith.mulf %0, %39 : vector<32x16xf32>
    %cst_16 = arith.constant dense<0.000000e+00> : vector<3x16xf32>
    %41 = tpu.matmul %2, %40, %cst_16 {dimension_numbers = #tpu.dot_dimension_numbers<[1], [0], [0], [1], [0, 0, 1, 1], [], []>} : vector<3x32xf32>, vector<32x16xf32>, vector<3x16xf32> -> vector<3x16xf32>
    %cst_17 = arith.constant dense<0.000000e+00> : vector<3xf32>
    %42 = vector.multi_reduction <add>, %41, %cst_17 [1] : vector<3x16xf32> to vector<3xf32>
    %43 = vector.shape_cast %42 : vector<3xf32> to vector<3x1xf32>
    %cst_18 = arith.constant 0.000000e+00 : f32
    %44 = vector.broadcast %cst_18 : f32 to vector<6x16xf32>
    %45 = vector.extract_strided_slice %1 {offsets = [0, 0], sizes = [26, 16], strides = [1, 1]} : vector<32x16xf32> to vector<26x16xf32>
    %46 = tpu.concatenate %44, %45 in 0 : vector<6x16xf32>, vector<26x16xf32> -> vector<32x16xf32>
    %47 = vector.extract_strided_slice %3 {offsets = [0, 4], sizes = [32, 1], strides = [1, 1]} : vector<32x25xf32> to vector<32x1xf32>
    %48 = vector.broadcast %47 : vector<32x1xf32> to vector<32x16xf32>
    %49 = arith.mulf %46, %48 : vector<32x16xf32>
    %50 = arith.mulf %0, %49 : vector<32x16xf32>
    %cst_19 = arith.constant dense<0.000000e+00> : vector<3x16xf32>
    %51 = tpu.matmul %2, %50, %cst_19 {dimension_numbers = #tpu.dot_dimension_numbers<[1], [0], [0], [1], [0, 0, 1, 1], [], []>} : vector<3x32xf32>, vector<32x16xf32>, vector<3x16xf32> -> vector<3x16xf32>
    %cst_20 = arith.constant dense<0.000000e+00> : vector<3xf32>
    %52 = vector.multi_reduction <add>, %51, %cst_20 [1] : vector<3x16xf32> to vector<3xf32>
    %53 = vector.shape_cast %52 : vector<3xf32> to vector<3x1xf32>
    %cst_21 = arith.constant 0.000000e+00 : f32
    %54 = vector.broadcast %cst_21 : f32 to vector<6x16xf32>
    %55 = vector.extract_strided_slice %1 {offsets = [0, 0], sizes = [26, 16], strides = [1, 1]} : vector<32x16xf32> to vector<26x16xf32>
    %56 = tpu.concatenate %54, %55 in 0 : vector<6x16xf32>, vector<26x16xf32> -> vector<32x16xf32>
    %57 = vector.extract_strided_slice %3 {offsets = [0, 5], sizes = [32, 1], strides = [1, 1]} : vector<32x25xf32> to vector<32x1xf32>
    %58 = vector.broadcast %57 : vector<32x1xf32> to vector<32x16xf32>
    %59 = arith.mulf %56, %58 : vector<32x16xf32>
    %60 = arith.mulf %0, %59 : vector<32x16xf32>
    %cst_22 = arith.constant dense<0.000000e+00> : vector<3x16xf32>
    %61 = tpu.matmul %2, %60, %cst_22 {dimension_numbers = #tpu.dot_dimension_numbers<[1], [0], [0], [1], [0, 0, 1, 1], [], []>} : vector<3x32xf32>, vector<32x16xf32>, vector<3x16xf32> -> vector<3x16xf32>
    %cst_23 = arith.constant dense<0.000000e+00> : vector<3xf32>
    %62 = vector.multi_reduction <add>, %61, %cst_23 [1] : vector<3x16xf32> to vector<3xf32>
    %63 = vector.shape_cast %62 : vector<3xf32> to vector<3x1xf32>
    %cst_24 = arith.constant 0.000000e+00 : f32
    %64 = vector.broadcast %cst_24 : f32 to vector<5x16xf32>
    %65 = vector.extract_strided_slice %1 {offsets = [0, 0], sizes = [27, 16], strides = [1, 1]} : vector<32x16xf32> to vector<27x16xf32>
    %66 = tpu.concatenate %64, %65 in 0 : vector<5x16xf32>, vector<27x16xf32> -> vector<32x16xf32>
    %67 = vector.extract_strided_slice %3 {offsets = [0, 6], sizes = [32, 1], strides = [1, 1]} : vector<32x25xf32> to vector<32x1xf32>
    %68 = vector.broadcast %67 : vector<32x1xf32> to vector<32x16xf32>
    %69 = arith.mulf %66, %68 : vector<32x16xf32>
    %70 = arith.mulf %0, %69 : vector<32x16xf32>
    %cst_25 = arith.constant dense<0.000000e+00> : vector<3x16xf32>
    %71 = tpu.matmul %2, %70, %cst_25 {dimension_numbers = #tpu.dot_dimension_numbers<[1], [0], [0], [1], [0, 0, 1, 1], [], []>} : vector<3x32xf32>, vector<32x16xf32>, vector<3x16xf32> -> vector<3x16xf32>
    %cst_26 = arith.constant dense<0.000000e+00> : vector<3xf32>
    %72 = vector.multi_reduction <add>, %71, %cst_26 [1] : vector<3x16xf32> to vector<3xf32>
    %73 = vector.shape_cast %72 : vector<3xf32> to vector<3x1xf32>
    %cst_27 = arith.constant 0.000000e+00 : f32
    %74 = vector.broadcast %cst_27 : f32 to vector<4x16xf32>
    %75 = vector.extract_strided_slice %1 {offsets = [0, 0], sizes = [28, 16], strides = [1, 1]} : vector<32x16xf32> to vector<28x16xf32>
    %76 = tpu.concatenate %74, %75 in 0 : vector<4x16xf32>, vector<28x16xf32> -> vector<32x16xf32>
    %77 = vector.extract_strided_slice %3 {offsets = [0, 7], sizes = [32, 1], strides = [1, 1]} : vector<32x25xf32> to vector<32x1xf32>
    %78 = vector.broadcast %77 : vector<32x1xf32> to vector<32x16xf32>
    %79 = arith.mulf %76, %78 : vector<32x16xf32>
    %80 = arith.mulf %0, %79 : vector<32x16xf32>
    %cst_28 = arith.constant dense<0.000000e+00> : vector<3x16xf32>
    %81 = tpu.matmul %2, %80, %cst_28 {dimension_numbers = #tpu.dot_dimension_numbers<[1], [0], [0], [1], [0, 0, 1, 1], [], []>} : vector<3x32xf32>, vector<32x16xf32>, vector<3x16xf32> -> vector<3x16xf32>
    %cst_29 = arith.constant dense<0.000000e+00> : vector<3xf32>
    %82 = vector.multi_reduction <add>, %81, %cst_29 [1] : vector<3x16xf32> to vector<3xf32>
    %83 = vector.shape_cast %82 : vector<3xf32> to vector<3x1xf32>
    %cst_30 = arith.constant 0.000000e+00 : f32
    %84 = vector.broadcast %cst_30 : f32 to vector<3x16xf32>
    %85 = vector.extract_strided_slice %1 {offsets = [0, 0], sizes = [29, 16], strides = [1, 1]} : vector<32x16xf32> to vector<29x16xf32>
    %86 = tpu.concatenate %84, %85 in 0 : vector<3x16xf32>, vector<29x16xf32> -> vector<32x16xf32>
    %87 = vector.extract_strided_slice %3 {offsets = [0, 8], sizes = [32, 1], strides = [1, 1]} : vector<32x25xf32> to vector<32x1xf32>
    %88 = vector.broadcast %87 : vector<32x1xf32> to vector<32x16xf32>
    %89 = arith.mulf %86, %88 : vector<32x16xf32>
    %90 = arith.mulf %0, %89 : vector<32x16xf32>
    %cst_31 = arith.constant dense<0.000000e+00> : vector<3x16xf32>
    %91 = tpu.matmul %2, %90, %cst_31 {dimension_numbers = #tpu.dot_dimension_numbers<[1], [0], [0], [1], [0, 0, 1, 1], [], []>} : vector<3x32xf32>, vector<32x16xf32>, vector<3x16xf32> -> vector<3x16xf32>
    %cst_32 = arith.constant dense<0.000000e+00> : vector<3xf32>
    %92 = vector.multi_reduction <add>, %91, %cst_32 [1] : vector<3x16xf32> to vector<3xf32>
    %93 = vector.shape_cast %92 : vector<3xf32> to vector<3x1xf32>
    %cst_33 = arith.constant 0.000000e+00 : f32
    %94 = vector.broadcast %cst_33 : f32 to vector<2x16xf32>
    %95 = vector.extract_strided_slice %1 {offsets = [0, 0], sizes = [30, 16], strides = [1, 1]} : vector<32x16xf32> to vector<30x16xf32>
    %96 = tpu.concatenate %94, %95 in 0 : vector<2x16xf32>, vector<30x16xf32> -> vector<32x16xf32>
    %97 = vector.extract_strided_slice %3 {offsets = [0, 9], sizes = [32, 1], strides = [1, 1]} : vector<32x25xf32> to vector<32x1xf32>
    %98 = vector.broadcast %97 : vector<32x1xf32> to vector<32x16xf32>
    %99 = arith.mulf %96, %98 : vector<32x16xf32>
    %100 = arith.mulf %0, %99 : vector<32x16xf32>
    %cst_34 = arith.constant dense<0.000000e+00> : vector<3x16xf32>
    %101 = tpu.matmul %2, %100, %cst_34 {dimension_numbers = #tpu.dot_dimension_numbers<[1], [0], [0], [1], [0, 0, 1, 1], [], []>} : vector<3x32xf32>, vector<32x16xf32>, vector<3x16xf32> -> vector<3x16xf32>
    %cst_35 = arith.constant dense<0.000000e+00> : vector<3xf32>
    %102 = vector.multi_reduction <add>, %101, %cst_35 [1] : vector<3x16xf32> to vector<3xf32>
    %103 = vector.shape_cast %102 : vector<3xf32> to vector<3x1xf32>
    %cst_36 = arith.constant 0.000000e+00 : f32
    %104 = vector.broadcast %cst_36 : f32 to vector<2x16xf32>
    %105 = vector.extract_strided_slice %1 {offsets = [0, 0], sizes = [30, 16], strides = [1, 1]} : vector<32x16xf32> to vector<30x16xf32>
    %106 = tpu.concatenate %104, %105 in 0 : vector<2x16xf32>, vector<30x16xf32> -> vector<32x16xf32>
    %107 = vector.extract_strided_slice %3 {offsets = [0, 10], sizes = [32, 1], strides = [1, 1]} : vector<32x25xf32> to vector<32x1xf32>
    %108 = vector.broadcast %107 : vector<32x1xf32> to vector<32x16xf32>
    %109 = arith.mulf %106, %108 : vector<32x16xf32>
    %110 = arith.mulf %0, %109 : vector<32x16xf32>
    %cst_37 = arith.constant dense<0.000000e+00> : vector<3x16xf32>
    %111 = tpu.matmul %2, %110, %cst_37 {dimension_numbers = #tpu.dot_dimension_numbers<[1], [0], [0], [1], [0, 0, 1, 1], [], []>} : vector<3x32xf32>, vector<32x16xf32>, vector<3x16xf32> -> vector<3x16xf32>
    %cst_38 = arith.constant dense<0.000000e+00> : vector<3xf32>
    %112 = vector.multi_reduction <add>, %111, %cst_38 [1] : vector<3x16xf32> to vector<3xf32>
    %113 = vector.shape_cast %112 : vector<3xf32> to vector<3x1xf32>
    %cst_39 = arith.constant 0.000000e+00 : f32
    %114 = vector.broadcast %cst_39 : f32 to vector<1x16xf32>
    %115 = vector.extract_strided_slice %1 {offsets = [0, 0], sizes = [31, 16], strides = [1, 1]} : vector<32x16xf32> to vector<31x16xf32>
    %116 = tpu.concatenate %114, %115 in 0 : vector<1x16xf32>, vector<31x16xf32> -> vector<32x16xf32>
    %117 = vector.extract_strided_slice %3 {offsets = [0, 11], sizes = [32, 1], strides = [1, 1]} : vector<32x25xf32> to vector<32x1xf32>
    %118 = vector.broadcast %117 : vector<32x1xf32> to vector<32x16xf32>
    %119 = arith.mulf %116, %118 : vector<32x16xf32>
    %120 = arith.mulf %0, %119 : vector<32x16xf32>
    %cst_40 = arith.constant dense<0.000000e+00> : vector<3x16xf32>
    %121 = tpu.matmul %2, %120, %cst_40 {dimension_numbers = #tpu.dot_dimension_numbers<[1], [0], [0], [1], [0, 0, 1, 1], [], []>} : vector<3x32xf32>, vector<32x16xf32>, vector<3x16xf32> -> vector<3x16xf32>
    %cst_41 = arith.constant dense<0.000000e+00> : vector<3xf32>
    %122 = vector.multi_reduction <add>, %121, %cst_41 [1] : vector<3x16xf32> to vector<3xf32>
    %123 = vector.shape_cast %122 : vector<3xf32> to vector<3x1xf32>
    %124 = vector.extract_strided_slice %3 {offsets = [0, 12], sizes = [32, 1], strides = [1, 1]} : vector<32x25xf32> to vector<32x1xf32>
    %125 = vector.broadcast %124 : vector<32x1xf32> to vector<32x16xf32>
    %126 = arith.mulf %1, %125 : vector<32x16xf32>
    %127 = arith.mulf %0, %126 : vector<32x16xf32>
    %cst_42 = arith.constant dense<0.000000e+00> : vector<3x16xf32>
    %128 = tpu.matmul %2, %127, %cst_42 {dimension_numbers = #tpu.dot_dimension_numbers<[1], [0], [0], [1], [0, 0, 1, 1], [], []>} : vector<3x32xf32>, vector<32x16xf32>, vector<3x16xf32> -> vector<3x16xf32>
    %cst_43 = arith.constant dense<0.000000e+00> : vector<3xf32>
    %129 = vector.multi_reduction <add>, %128, %cst_43 [1] : vector<3x16xf32> to vector<3xf32>
    %130 = vector.shape_cast %129 : vector<3xf32> to vector<3x1xf32>
    %cst_44 = arith.constant 0.000000e+00 : f32
    %131 = vector.broadcast %cst_44 : f32 to vector<1x16xf32>
    %132 = vector.extract_strided_slice %1 {offsets = [1, 0], sizes = [31, 16], strides = [1, 1]} : vector<32x16xf32> to vector<31x16xf32>
    %133 = tpu.concatenate %132, %131 in 0 : vector<31x16xf32>, vector<1x16xf32> -> vector<32x16xf32>
    %134 = vector.extract_strided_slice %3 {offsets = [0, 13], sizes = [32, 1], strides = [1, 1]} : vector<32x25xf32> to vector<32x1xf32>
    %135 = vector.broadcast %134 : vector<32x1xf32> to vector<32x16xf32>
    %136 = arith.mulf %133, %135 : vector<32x16xf32>
    %137 = arith.mulf %0, %136 : vector<32x16xf32>
    %cst_45 = arith.constant dense<0.000000e+00> : vector<3x16xf32>
    %138 = tpu.matmul %2, %137, %cst_45 {dimension_numbers = #tpu.dot_dimension_numbers<[1], [0], [0], [1], [0, 0, 1, 1], [], []>} : vector<3x32xf32>, vector<32x16xf32>, vector<3x16xf32> -> vector<3x16xf32>
    %cst_46 = arith.constant dense<0.000000e+00> : vector<3xf32>
    %139 = vector.multi_reduction <add>, %138, %cst_46 [1] : vector<3x16xf32> to vector<3xf32>
    %140 = vector.shape_cast %139 : vector<3xf32> to vector<3x1xf32>
    %cst_47 = arith.constant 0.000000e+00 : f32
    %141 = vector.broadcast %cst_47 : f32 to vector<2x16xf32>
    %142 = vector.extract_strided_slice %1 {offsets = [2, 0], sizes = [30, 16], strides = [1, 1]} : vector<32x16xf32> to vector<30x16xf32>
    %143 = tpu.concatenate %142, %141 in 0 : vector<30x16xf32>, vector<2x16xf32> -> vector<32x16xf32>
    %144 = vector.extract_strided_slice %3 {offsets = [0, 14], sizes = [32, 1], strides = [1, 1]} : vector<32x25xf32> to vector<32x1xf32>
    %145 = vector.broadcast %144 : vector<32x1xf32> to vector<32x16xf32>
    %146 = arith.mulf %143, %145 : vector<32x16xf32>
    %147 = arith.mulf %0, %146 : vector<32x16xf32>
    %cst_48 = arith.constant dense<0.000000e+00> : vector<3x16xf32>
    %148 = tpu.matmul %2, %147, %cst_48 {dimension_numbers = #tpu.dot_dimension_numbers<[1], [0], [0], [1], [0, 0, 1, 1], [], []>} : vector<3x32xf32>, vector<32x16xf32>, vector<3x16xf32> -> vector<3x16xf32>
    %cst_49 = arith.constant dense<0.000000e+00> : vector<3xf32>
    %149 = vector.multi_reduction <add>, %148, %cst_49 [1] : vector<3x16xf32> to vector<3xf32>
    %150 = vector.shape_cast %149 : vector<3xf32> to vector<3x1xf32>
    %cst_50 = arith.constant 0.000000e+00 : f32
    %151 = vector.broadcast %cst_50 : f32 to vector<2x16xf32>
    %152 = vector.extract_strided_slice %1 {offsets = [2, 0], sizes = [30, 16], strides = [1, 1]} : vector<32x16xf32> to vector<30x16xf32>
    %153 = tpu.concatenate %152, %151 in 0 : vector<30x16xf32>, vector<2x16xf32> -> vector<32x16xf32>
    %154 = vector.extract_strided_slice %3 {offsets = [0, 15], sizes = [32, 1], strides = [1, 1]} : vector<32x25xf32> to vector<32x1xf32>
    %155 = vector.broadcast %154 : vector<32x1xf32> to vector<32x16xf32>
    %156 = arith.mulf %153, %155 : vector<32x16xf32>
    %157 = arith.mulf %0, %156 : vector<32x16xf32>
    %cst_51 = arith.constant dense<0.000000e+00> : vector<3x16xf32>
    %158 = tpu.matmul %2, %157, %cst_51 {dimension_numbers = #tpu.dot_dimension_numbers<[1], [0], [0], [1], [0, 0, 1, 1], [], []>} : vector<3x32xf32>, vector<32x16xf32>, vector<3x16xf32> -> vector<3x16xf32>
    %cst_52 = arith.constant dense<0.000000e+00> : vector<3xf32>
    %159 = vector.multi_reduction <add>, %158, %cst_52 [1] : vector<3x16xf32> to vector<3xf32>
    %160 = vector.shape_cast %159 : vector<3xf32> to vector<3x1xf32>
    %cst_53 = arith.constant 0.000000e+00 : f32
    %161 = vector.broadcast %cst_53 : f32 to vector<3x16xf32>
    %162 = vector.extract_strided_slice %1 {offsets = [3, 0], sizes = [29, 16], strides = [1, 1]} : vector<32x16xf32> to vector<29x16xf32>
    %163 = tpu.concatenate %162, %161 in 0 : vector<29x16xf32>, vector<3x16xf32> -> vector<32x16xf32>
    %164 = vector.extract_strided_slice %3 {offsets = [0, 16], sizes = [32, 1], strides = [1, 1]} : vector<32x25xf32> to vector<32x1xf32>
    %165 = vector.broadcast %164 : vector<32x1xf32> to vector<32x16xf32>
    %166 = arith.mulf %163, %165 : vector<32x16xf32>
    %167 = arith.mulf %0, %166 : vector<32x16xf32>
    %cst_54 = arith.constant dense<0.000000e+00> : vector<3x16xf32>
    %168 = tpu.matmul %2, %167, %cst_54 {dimension_numbers = #tpu.dot_dimension_numbers<[1], [0], [0], [1], [0, 0, 1, 1], [], []>} : vector<3x32xf32>, vector<32x16xf32>, vector<3x16xf32> -> vector<3x16xf32>
    %cst_55 = arith.constant dense<0.000000e+00> : vector<3xf32>
    %169 = vector.multi_reduction <add>, %168, %cst_55 [1] : vector<3x16xf32> to vector<3xf32>
    %170 = vector.shape_cast %169 : vector<3xf32> to vector<3x1xf32>
    %cst_56 = arith.constant 0.000000e+00 : f32
    %171 = vector.broadcast %cst_56 : f32 to vector<4x16xf32>
    %172 = vector.extract_strided_slice %1 {offsets = [4, 0], sizes = [28, 16], strides = [1, 1]} : vector<32x16xf32> to vector<28x16xf32>
    %173 = tpu.concatenate %172, %171 in 0 : vector<28x16xf32>, vector<4x16xf32> -> vector<32x16xf32>
    %174 = vector.extract_strided_slice %3 {offsets = [0, 17], sizes = [32, 1], strides = [1, 1]} : vector<32x25xf32> to vector<32x1xf32>
    %175 = vector.broadcast %174 : vector<32x1xf32> to vector<32x16xf32>
    %176 = arith.mulf %173, %175 : vector<32x16xf32>
    %177 = arith.mulf %0, %176 : vector<32x16xf32>
    %cst_57 = arith.constant dense<0.000000e+00> : vector<3x16xf32>
    %178 = tpu.matmul %2, %177, %cst_57 {dimension_numbers = #tpu.dot_dimension_numbers<[1], [0], [0], [1], [0, 0, 1, 1], [], []>} : vector<3x32xf32>, vector<32x16xf32>, vector<3x16xf32> -> vector<3x16xf32>
    %cst_58 = arith.constant dense<0.000000e+00> : vector<3xf32>
    %179 = vector.multi_reduction <add>, %178, %cst_58 [1] : vector<3x16xf32> to vector<3xf32>
    %180 = vector.shape_cast %179 : vector<3xf32> to vector<3x1xf32>
    %cst_59 = arith.constant 0.000000e+00 : f32
    %181 = vector.broadcast %cst_59 : f32 to vector<5x16xf32>
    %182 = vector.extract_strided_slice %1 {offsets = [5, 0], sizes = [27, 16], strides = [1, 1]} : vector<32x16xf32> to vector<27x16xf32>
    %183 = tpu.concatenate %182, %181 in 0 : vector<27x16xf32>, vector<5x16xf32> -> vector<32x16xf32>
    %184 = vector.extract_strided_slice %3 {offsets = [0, 18], sizes = [32, 1], strides = [1, 1]} : vector<32x25xf32> to vector<32x1xf32>
    %185 = vector.broadcast %184 : vector<32x1xf32> to vector<32x16xf32>
    %186 = arith.mulf %183, %185 : vector<32x16xf32>
    %187 = arith.mulf %0, %186 : vector<32x16xf32>
    %cst_60 = arith.constant dense<0.000000e+00> : vector<3x16xf32>
    %188 = tpu.matmul %2, %187, %cst_60 {dimension_numbers = #tpu.dot_dimension_numbers<[1], [0], [0], [1], [0, 0, 1, 1], [], []>} : vector<3x32xf32>, vector<32x16xf32>, vector<3x16xf32> -> vector<3x16xf32>
    %cst_61 = arith.constant dense<0.000000e+00> : vector<3xf32>
    %189 = vector.multi_reduction <add>, %188, %cst_61 [1] : vector<3x16xf32> to vector<3xf32>
    %190 = vector.shape_cast %189 : vector<3xf32> to vector<3x1xf32>
    %cst_62 = arith.constant 0.000000e+00 : f32
    %191 = vector.broadcast %cst_62 : f32 to vector<6x16xf32>
    %192 = vector.extract_strided_slice %1 {offsets = [6, 0], sizes = [26, 16], strides = [1, 1]} : vector<32x16xf32> to vector<26x16xf32>
    %193 = tpu.concatenate %192, %191 in 0 : vector<26x16xf32>, vector<6x16xf32> -> vector<32x16xf32>
    %194 = vector.extract_strided_slice %3 {offsets = [0, 19], sizes = [32, 1], strides = [1, 1]} : vector<32x25xf32> to vector<32x1xf32>
    %195 = vector.broadcast %194 : vector<32x1xf32> to vector<32x16xf32>
    %196 = arith.mulf %193, %195 : vector<32x16xf32>
    %197 = arith.mulf %0, %196 : vector<32x16xf32>
    %cst_63 = arith.constant dense<0.000000e+00> : vector<3x16xf32>
    %198 = tpu.matmul %2, %197, %cst_63 {dimension_numbers = #tpu.dot_dimension_numbers<[1], [0], [0], [1], [0, 0, 1, 1], [], []>} : vector<3x32xf32>, vector<32x16xf32>, vector<3x16xf32> -> vector<3x16xf32>
    %cst_64 = arith.constant dense<0.000000e+00> : vector<3xf32>
    %199 = vector.multi_reduction <add>, %198, %cst_64 [1] : vector<3x16xf32> to vector<3xf32>
    %200 = vector.shape_cast %199 : vector<3xf32> to vector<3x1xf32>
    %cst_65 = arith.constant 0.000000e+00 : f32
    %201 = vector.broadcast %cst_65 : f32 to vector<6x16xf32>
    %202 = vector.extract_strided_slice %1 {offsets = [6, 0], sizes = [26, 16], strides = [1, 1]} : vector<32x16xf32> to vector<26x16xf32>
    %203 = tpu.concatenate %202, %201 in 0 : vector<26x16xf32>, vector<6x16xf32> -> vector<32x16xf32>
    %204 = vector.extract_strided_slice %3 {offsets = [0, 20], sizes = [32, 1], strides = [1, 1]} : vector<32x25xf32> to vector<32x1xf32>
    %205 = vector.broadcast %204 : vector<32x1xf32> to vector<32x16xf32>
    %206 = arith.mulf %203, %205 : vector<32x16xf32>
    %207 = arith.mulf %0, %206 : vector<32x16xf32>
    %cst_66 = arith.constant dense<0.000000e+00> : vector<3x16xf32>
    %208 = tpu.matmul %2, %207, %cst_66 {dimension_numbers = #tpu.dot_dimension_numbers<[1], [0], [0], [1], [0, 0, 1, 1], [], []>} : vector<3x32xf32>, vector<32x16xf32>, vector<3x16xf32> -> vector<3x16xf32>
    %cst_67 = arith.constant dense<0.000000e+00> : vector<3xf32>
    %209 = vector.multi_reduction <add>, %208, %cst_67 [1] : vector<3x16xf32> to vector<3xf32>
    %210 = vector.shape_cast %209 : vector<3xf32> to vector<3x1xf32>
    %cst_68 = arith.constant 0.000000e+00 : f32
    %211 = vector.broadcast %cst_68 : f32 to vector<7x16xf32>
    %212 = vector.extract_strided_slice %1 {offsets = [7, 0], sizes = [25, 16], strides = [1, 1]} : vector<32x16xf32> to vector<25x16xf32>
    %213 = tpu.concatenate %212, %211 in 0 : vector<25x16xf32>, vector<7x16xf32> -> vector<32x16xf32>
    %214 = vector.extract_strided_slice %3 {offsets = [0, 21], sizes = [32, 1], strides = [1, 1]} : vector<32x25xf32> to vector<32x1xf32>
    %215 = vector.broadcast %214 : vector<32x1xf32> to vector<32x16xf32>
    %216 = arith.mulf %213, %215 : vector<32x16xf32>
    %217 = arith.mulf %0, %216 : vector<32x16xf32>
    %cst_69 = arith.constant dense<0.000000e+00> : vector<3x16xf32>
    %218 = tpu.matmul %2, %217, %cst_69 {dimension_numbers = #tpu.dot_dimension_numbers<[1], [0], [0], [1], [0, 0, 1, 1], [], []>} : vector<3x32xf32>, vector<32x16xf32>, vector<3x16xf32> -> vector<3x16xf32>
    %cst_70 = arith.constant dense<0.000000e+00> : vector<3xf32>
    %219 = vector.multi_reduction <add>, %218, %cst_70 [1] : vector<3x16xf32> to vector<3xf32>
    %220 = vector.shape_cast %219 : vector<3xf32> to vector<3x1xf32>
    %cst_71 = arith.constant 0.000000e+00 : f32
    %221 = vector.broadcast %cst_71 : f32 to vector<8x16xf32>
    %222 = vector.extract_strided_slice %1 {offsets = [8, 0], sizes = [24, 16], strides = [1, 1]} : vector<32x16xf32> to vector<24x16xf32>
    %223 = tpu.concatenate %222, %221 in 0 : vector<24x16xf32>, vector<8x16xf32> -> vector<32x16xf32>
    %224 = vector.extract_strided_slice %3 {offsets = [0, 22], sizes = [32, 1], strides = [1, 1]} : vector<32x25xf32> to vector<32x1xf32>
    %225 = vector.broadcast %224 : vector<32x1xf32> to vector<32x16xf32>
    %226 = arith.mulf %223, %225 : vector<32x16xf32>
    %227 = arith.mulf %0, %226 : vector<32x16xf32>
    %cst_72 = arith.constant dense<0.000000e+00> : vector<3x16xf32>
    %228 = tpu.matmul %2, %227, %cst_72 {dimension_numbers = #tpu.dot_dimension_numbers<[1], [0], [0], [1], [0, 0, 1, 1], [], []>} : vector<3x32xf32>, vector<32x16xf32>, vector<3x16xf32> -> vector<3x16xf32>
    %cst_73 = arith.constant dense<0.000000e+00> : vector<3xf32>
    %229 = vector.multi_reduction <add>, %228, %cst_73 [1] : vector<3x16xf32> to vector<3xf32>
    %230 = vector.shape_cast %229 : vector<3xf32> to vector<3x1xf32>
    %cst_74 = arith.constant 0.000000e+00 : f32
    %231 = vector.broadcast %cst_74 : f32 to vector<9x16xf32>
    %232 = vector.extract_strided_slice %1 {offsets = [9, 0], sizes = [23, 16], strides = [1, 1]} : vector<32x16xf32> to vector<23x16xf32>
    %233 = tpu.concatenate %232, %231 in 0 : vector<23x16xf32>, vector<9x16xf32> -> vector<32x16xf32>
    %234 = vector.extract_strided_slice %3 {offsets = [0, 23], sizes = [32, 1], strides = [1, 1]} : vector<32x25xf32> to vector<32x1xf32>
    %235 = vector.broadcast %234 : vector<32x1xf32> to vector<32x16xf32>
    %236 = arith.mulf %233, %235 : vector<32x16xf32>
    %237 = arith.mulf %0, %236 : vector<32x16xf32>
    %cst_75 = arith.constant dense<0.000000e+00> : vector<3x16xf32>
    %238 = tpu.matmul %2, %237, %cst_75 {dimension_numbers = #tpu.dot_dimension_numbers<[1], [0], [0], [1], [0, 0, 1, 1], [], []>} : vector<3x32xf32>, vector<32x16xf32>, vector<3x16xf32> -> vector<3x16xf32>
    %cst_76 = arith.constant dense<0.000000e+00> : vector<3xf32>
    %239 = vector.multi_reduction <add>, %238, %cst_76 [1] : vector<3x16xf32> to vector<3xf32>
    %240 = vector.shape_cast %239 : vector<3xf32> to vector<3x1xf32>
    %cst_77 = arith.constant 0.000000e+00 : f32
    %241 = vector.broadcast %cst_77 : f32 to vector<10x16xf32>
    %242 = vector.extract_strided_slice %1 {offsets = [10, 0], sizes = [22, 16], strides = [1, 1]} : vector<32x16xf32> to vector<22x16xf32>
    %243 = tpu.concatenate %242, %241 in 0 : vector<22x16xf32>, vector<10x16xf32> -> vector<32x16xf32>
    %244 = vector.extract_strided_slice %3 {offsets = [0, 24], sizes = [32, 1], strides = [1, 1]} : vector<32x25xf32> to vector<32x1xf32>
    %245 = vector.broadcast %244 : vector<32x1xf32> to vector<32x16xf32>
    %246 = arith.mulf %243, %245 : vector<32x16xf32>
    %247 = arith.mulf %0, %246 : vector<32x16xf32>
    %cst_78 = arith.constant dense<0.000000e+00> : vector<3x16xf32>
    %248 = tpu.matmul %2, %247, %cst_78 {dimension_numbers = #tpu.dot_dimension_numbers<[1], [0], [0], [1], [0, 0, 1, 1], [], []>} : vector<3x32xf32>, vector<32x16xf32>, vector<3x16xf32> -> vector<3x16xf32>
    %cst_79 = arith.constant dense<0.000000e+00> : vector<3xf32>
    %249 = vector.multi_reduction <add>, %248, %cst_79 [1] : vector<3x16xf32> to vector<3xf32>
    %250 = vector.shape_cast %249 : vector<3xf32> to vector<3x1xf32>
    %251 = tpu.concatenate %13, %23, %33, %43, %53, %63, %73, %83, %93, %103, %113, %123, %130, %140, %150, %160 in 1 : vector<3x1xf32>, vector<3x1xf32>, vector<3x1xf32>, vector<3x1xf32>, vector<3x1xf32>, vector<3x1xf32>, vector<3x1xf32>, vector<3x1xf32>, vector<3x1xf32>, vector<3x1xf32>, vector<3x1xf32>, vector<3x1xf32>, vector<3x1xf32>, vector<3x1xf32>, vector<3x1xf32>, vector<3x1xf32> -> vector<3x16xf32>
    %252 = tpu.concatenate %170, %180, %190, %200, %210, %220, %230, %240, %250 in 1 : vector<3x1xf32>, vector<3x1xf32>, vector<3x1xf32>, vector<3x1xf32>, vector<3x1xf32>, vector<3x1xf32>, vector<3x1xf32>, vector<3x1xf32>, vector<3x1xf32> -> vector<3x9xf32>
    %253 = tpu.concatenate %251, %252 in 1 : vector<3x16xf32>, vector<3x9xf32> -> vector<3x25xf32>
    %c0_80 = arith.constant 0 : index
    %c0_81 = arith.constant 0 : index
    %254 = vector.load %arg5[%c0_80, %c0_81] : memref<25x4xf32, #tpu.memory_space<vmem>>, vector<25x4xf32>
    %cst_82 = arith.constant dense<0.000000e+00> : vector<3x4xf32>
    %255 = tpu.matmul %253, %254, %cst_82 {dimension_numbers = #tpu.dot_dimension_numbers<[1], [0], [0], [1], [0, 0, 1, 1], [], []>} : vector<3x25xf32>, vector<25x4xf32>, vector<3x4xf32> -> vector<3x4xf32>
    %c0_83 = arith.constant 0 : index
    %c0_84 = arith.constant 0 : index
    %256 = vector.load %arg6[%c0_83, %c0_84] : memref<1x4xf32, #tpu.memory_space<vmem>>, vector<1x4xf32>
    %257 = vector.broadcast %256 : vector<1x4xf32> to vector<3x4xf32>
    %258 = arith.addf %255, %257 : vector<3x4xf32>
    %c0_85 = arith.constant 0 : index
    %c0_86 = arith.constant 0 : index
    %259 = vector.load %arg7[%c0_85, %c0_86] : memref<3x4xf32, #tpu.memory_space<vmem>>, vector<3x4xf32>
    tpu.vector_store %arg7[%c0_85, %c0_86], %258 {strides = array<i32>} : memref<3x4xf32, #tpu.memory_space<vmem>>, vector<3x4xf32>,
    return
  }
  func.func @transform_0(%arg0: i32) -> (i32, i32) {
    %c0_i32 = arith.constant 0 : i32
    %c0_i32_0 = arith.constant 0 : i32
    %c0_i32_1 = arith.constant 0 : i32
    return %c0_i32, %c0_i32_0 : i32, i32
  }
  func.func @transform_1(%arg0: i32) -> (i32, i32) {
    %c0_i32 = arith.constant 0 : i32
    %c0_i32_0 = arith.constant 0 : i32
    %c0_i32_1 = arith.constant 0 : i32
    return %c0_i32, %c0_i32_0 : i32, i32
  }
  func.func @transform_2(%arg0: i32) -> (i32, i32) {
    %c0_i32 = arith.constant 0 : i32
    %c0_i32_0 = arith.constant 0 : i32
    %c0_i32_1 = arith.constant 0 : i32
    return %c0_i32, %c0_i32_0 : i32, i32
  }
  func.func @transform_3(%arg0: i32) -> (i32, i32) {
    %c0_i32 = arith.constant 0 : i32
    %c0_i32_0 = arith.constant 0 : i32
    %c0_i32_1 = arith.constant 0 : i32
    return %c0_i32, %c0_i32_0 : i32, i32
  }
  func.func @transform_4(%arg0: i32) -> (i32, i32) {
    %c0_i32 = arith.constant 0 : i32
    %c0_i32_0 = arith.constant 0 : i32
    %c0_i32_1 = arith.constant 0 : i32
    return %c0_i32, %c0_i32_0 : i32, i32
  }
  func.func @transform_5(%arg0: i32) -> (i32, i32) {
    %c0_i32 = arith.constant 0 : i32
    %c0_i32_0 = arith.constant 0 : i32
    %c0_i32_1 = arith.constant 0 : i32
    return %c0_i32, %c0_i32_0 : i32, i32
  }
  func.func @transform_6(%arg0: i32) -> (i32, i32) {
    %c0_i32 = arith.constant 0 : i32
    %c0_i32_0 = arith.constant 0 : i32
    %c0_i32_1 = arith.constant 0 : i32
    return %c0_i32, %c0_i32_0 : i32, i32
  }
}

module attributes {stable_mosaic.version = 11 : i64} {
  func.func @reid_kernel(%arg0: i32, %arg1: memref<6x64xf32, #tpu.memory_space<vmem>>, %arg2: memref<64x16xf32, #tpu.memory_space<vmem>>, %arg3: memref<16x32xf32, #tpu.memory_space<vmem>>, %arg4: memref<1x32xf32, #tpu.memory_space<vmem>>, %arg5: memref<32x10xf32, #tpu.memory_space<vmem>>, %arg6: memref<1x10xf32, #tpu.memory_space<vmem>>, %arg7: memref<6x32xf32, #tpu.memory_space<vmem>>, %arg8: memref<6x10xf32, #tpu.memory_space<vmem>>) attributes {dimension_semantics = [#tpu.dimension_semantics<arbitrary>], iteration_bounds = array<i64: 1>, scalar_prefetch = 0 : i64, scratch_operands = 0 : i64, tpu.core_type = #tpu.core_type<tc>, window_params = [{pipeline_mode = #tpu.pipeline_mode<synchronous>, transform_indices = @transform_0, window_bounds = array<i64: 6, 64>}, {pipeline_mode = #tpu.pipeline_mode<synchronous>, transform_indices = @transform_1, window_bounds = array<i64: 64, 16>}, {pipeline_mode = #tpu.pipeline_mode<synchronous>, transform_indices = @transform_2, window_bounds = array<i64: 16, 32>}, {pipeline_mode = #tpu.pipeline_mode<synchronous>, transform_indices = @transform_3, window_bounds = array<i64: 1, 32>}, {pipeline_mode = #tpu.pipeline_mode<synchronous>, transform_indices = @transform_4, window_bounds = array<i64: 32, 10>}, {pipeline_mode = #tpu.pipeline_mode<synchronous>, transform_indices = @transform_5, window_bounds = array<i64: 1, 10>}, {pipeline_mode = #tpu.pipeline_mode<synchronous>, transform_indices = @transform_6, window_bounds = array<i64: 6, 32>}, {pipeline_mode = #tpu.pipeline_mode<synchronous>, transform_indices = @transform_7, window_bounds = array<i64: 6, 10>}]} {
    %c0 = arith.constant 0 : index
    %c0_0 = arith.constant 0 : index
    %0 = vector.load %arg1[%c0, %c0_0] : memref<6x64xf32, #tpu.memory_space<vmem>>, vector<6x64xf32>
    %c0_1 = arith.constant 0 : index
    %c0_2 = arith.constant 0 : index
    %1 = vector.load %arg2[%c0_1, %c0_2] : memref<64x16xf32, #tpu.memory_space<vmem>>, vector<64x16xf32>
    %cst = arith.constant dense<0.000000e+00> : vector<6x16xf32>
    %2 = tpu.matmul %0, %1, %cst {dimension_numbers = #tpu.dot_dimension_numbers<[1], [0], [0], [1], [0, 0, 1, 1], [], []>} : vector<6x64xf32>, vector<64x16xf32>, vector<6x16xf32> -> vector<6x16xf32>
    %c0_3 = arith.constant 0 : index
    %c0_4 = arith.constant 0 : index
    %3 = vector.load %arg3[%c0_3, %c0_4] : memref<16x32xf32, #tpu.memory_space<vmem>>, vector<16x32xf32>
    %cst_5 = arith.constant dense<0.000000e+00> : vector<6x32xf32>
    %4 = tpu.matmul %2, %3, %cst_5 {dimension_numbers = #tpu.dot_dimension_numbers<[1], [0], [0], [1], [0, 0, 1, 1], [], []>} : vector<6x16xf32>, vector<16x32xf32>, vector<6x32xf32> -> vector<6x32xf32>
    %c0_6 = arith.constant 0 : index
    %c0_7 = arith.constant 0 : index
    %5 = vector.load %arg4[%c0_6, %c0_7] : memref<1x32xf32, #tpu.memory_space<vmem>>, vector<1x32xf32>
    %6 = vector.broadcast %5 : vector<1x32xf32> to vector<6x32xf32>
    %7 = arith.addf %4, %6 : vector<6x32xf32>
    %cst_8 = arith.constant 0.000000e+00 : f32
    %8 = vector.broadcast %cst_8 : f32 to vector<6x32xf32>
    %9 = arith.maximumf %7, %8 : vector<6x32xf32>
    %c0_9 = arith.constant 0 : index
    %c0_10 = arith.constant 0 : index
    %10 = vector.load %arg7[%c0_9, %c0_10] : memref<6x32xf32, #tpu.memory_space<vmem>>, vector<6x32xf32>
    tpu.vector_store %arg7[%c0_9, %c0_10], %9 {strides = array<i32>} : memref<6x32xf32, #tpu.memory_space<vmem>>, vector<6x32xf32>,
    %c0_11 = arith.constant 0 : index
    %c0_12 = arith.constant 0 : index
    %11 = vector.load %arg5[%c0_11, %c0_12] : memref<32x10xf32, #tpu.memory_space<vmem>>, vector<32x10xf32>
    %cst_13 = arith.constant dense<0.000000e+00> : vector<6x10xf32>
    %12 = tpu.matmul %9, %11, %cst_13 {dimension_numbers = #tpu.dot_dimension_numbers<[1], [0], [0], [1], [0, 0, 1, 1], [], []>} : vector<6x32xf32>, vector<32x10xf32>, vector<6x10xf32> -> vector<6x10xf32>
    %c0_14 = arith.constant 0 : index
    %c0_15 = arith.constant 0 : index
    %13 = vector.load %arg6[%c0_14, %c0_15] : memref<1x10xf32, #tpu.memory_space<vmem>>, vector<1x10xf32>
    %14 = vector.broadcast %13 : vector<1x10xf32> to vector<6x10xf32>
    %15 = arith.addf %12, %14 : vector<6x10xf32>
    %c0_16 = arith.constant 0 : index
    %c0_17 = arith.constant 0 : index
    %16 = vector.load %arg8[%c0_16, %c0_17] : memref<6x10xf32, #tpu.memory_space<vmem>>, vector<6x10xf32>
    tpu.vector_store %arg8[%c0_16, %c0_17], %15 {strides = array<i32>} : memref<6x10xf32, #tpu.memory_space<vmem>>, vector<6x10xf32>,
    return
  }
  func.func @transform_0(%arg0: i32) -> (i32, i32) {
    %c0_i32 = arith.constant 0 : i32
    %c0_i32_0 = arith.constant 0 : i32
    %c0_i32_1 = arith.constant 0 : i32
    return %c0_i32, %c0_i32_0 : i32, i32
  }
  func.func @transform_1(%arg0: i32) -> (i32, i32) {
    %c0_i32 = arith.constant 0 : i32
    %c0_i32_0 = arith.constant 0 : i32
    %c0_i32_1 = arith.constant 0 : i32
    return %c0_i32, %c0_i32_0 : i32, i32
  }
  func.func @transform_2(%arg0: i32) -> (i32, i32) {
    %c0_i32 = arith.constant 0 : i32
    %c0_i32_0 = arith.constant 0 : i32
    %c0_i32_1 = arith.constant 0 : i32
    return %c0_i32, %c0_i32_0 : i32, i32
  }
  func.func @transform_3(%arg0: i32) -> (i32, i32) {
    %c0_i32 = arith.constant 0 : i32
    %c0_i32_0 = arith.constant 0 : i32
    %c0_i32_1 = arith.constant 0 : i32
    return %c0_i32, %c0_i32_0 : i32, i32
  }
  func.func @transform_4(%arg0: i32) -> (i32, i32) {
    %c0_i32 = arith.constant 0 : i32
    %c0_i32_0 = arith.constant 0 : i32
    %c0_i32_1 = arith.constant 0 : i32
    return %c0_i32, %c0_i32_0 : i32, i32
  }
  func.func @transform_5(%arg0: i32) -> (i32, i32) {
    %c0_i32 = arith.constant 0 : i32
    %c0_i32_0 = arith.constant 0 : i32
    %c0_i32_1 = arith.constant 0 : i32
    return %c0_i32, %c0_i32_0 : i32, i32
  }
  func.func @transform_6(%arg0: i32) -> (i32, i32) {
    %c0_i32 = arith.constant 0 : i32
    %c0_i32_0 = arith.constant 0 : i32
    %c0_i32_1 = arith.constant 0 : i32
    return %c0_i32, %c0_i32_0 : i32, i32
  }
  func.func @transform_7(%arg0: i32) -> (i32, i32) {
    %c0_i32 = arith.constant 0 : i32
    %c0_i32_0 = arith.constant 0 : i32
    %c0_i32_1 = arith.constant 0 : i32
    return %c0_i32, %c0_i32_0 : i32, i32
  }
}

</mosaic_0001>

<llo_original>
// kernel: mennet_forward.4
$region0: #{mennet_forward.4}
  #allocation0 [shape = 'u32[]', space=smem, size = 0x4, offset = 0x4, fixed_abs, tag = 'smem constant byte address 0x4 - core index']
  #allocation1 [shape = 'u32[72,128]{1,0:T(1,128)}', space=vmem, size = 0x9000, scoped, tag = 'internal scratch']
  %s0 = inlined_call_operand.vmem [shape: f32[3,32], index: 0, kind: input, shape index: {}]
  %s1 = inlined_call_operand.vmem [shape: f32[32,25], index: 1, kind: input, shape index: {}]
  %s2 = inlined_call_operand.vmem [shape: f32[32,16], index: 2, kind: input, shape index: {}]
  %s3 = inlined_call_operand.vmem [shape: f32[32,16], index: 3, kind: input, shape index: {}]
  %s4 = inlined_call_operand.vmem [shape: f32[25,4], index: 4, kind: input, shape index: {}]
  %s5 = inlined_call_operand.vmem [shape: f32[1,4], index: 5, kind: input, shape index: {}]
  %s6 = inlined_call_operand.hbm [shape: f32[3,4], index: 6, kind: output, shape index: {}]
  %s7 = sld [smem:[#allocation0]]
  $region34: #{mennet_forward.4} parent=0
    _
  %s9 = ssub.s32 1, %s7
  %s10 = scalar_select 0, %s9, %s7
  $region1: #{mennet_forward.4} parent=0
    #allocation2 [shape = 'u8[2048]{0}', space=vmem, size = 0x800, scoped, tag = 'output window, operand 0, single buffered']
    #allocation3 [shape = 's32[1]{0}', space=sflag, size = 0x4, scoped, tag = 'scoped memory for mennet_forward.4']
    %11 = vsyncpa [#allocation3], 0
    // Predicated region
    $region2: #{mennet_forward.4} parent=1 // pred_check
      _
    $region3: #{mennet_forward.4} parent=1 // pred_check_branch
      %13 = sbr.rel (0) target = $region5
    $region4: #{mennet_forward.4} parent=1 // pred_region
      _
    $region5: #{mennet_forward.4} parent=1 // pred_fallthru
      _
    // Predicated region
    $region6: #{mennet_forward.4} parent=1 // pred_check
      _
    $region7: #{mennet_forward.4} parent=1 // pred_check_branch
      %15 = sbr.rel (0) target = $region9
    $region8: #{mennet_forward.4} parent=1 // pred_region
      _
    $region9: #{mennet_forward.4} parent=1 // pred_fallthru
      _
    // Predicated region
    $region10: #{mennet_forward.4} parent=1 // pred_check
      _
    $region11: #{mennet_forward.4} parent=1 // pred_check_branch
      %17 = sbr.rel (0) target = $region13
    $region12: #{mennet_forward.4} parent=1 // pred_region
      _
    $region13: #{mennet_forward.4} parent=1 // pred_fallthru
      _
    // Predicated region
    $region14: #{mennet_forward.4} parent=1 // pred_check
      _
    $region15: #{mennet_forward.4} parent=1 // pred_check_branch
      %19 = sbr.rel (0) target = $region17
    $region16: #{mennet_forward.4} parent=1 // pred_region
      _
    $region17: #{mennet_forward.4} parent=1 // pred_fallthru
      _
    // Predicated region
    $region18: #{mennet_forward.4} parent=1 // pred_check
      _
    $region19: #{mennet_forward.4} parent=1 // pred_check_branch
      %21 = sbr.rel (0) target = $region21
    $region20: #{mennet_forward.4} parent=1 // pred_region
      _
    $region21: #{mennet_forward.4} parent=1 // pred_fallthru
      _
    // Predicated region
    $region22: #{mennet_forward.4} parent=1 // pred_check
      _
    $region23: #{mennet_forward.4} parent=1 // pred_check_branch
      %23 = sbr.rel (0) target = $region25
    $region24: #{mennet_forward.4} parent=1 // pred_region
      _
    $region25: #{mennet_forward.4} parent=1 // pred_fallthru
      _
    %v24 = vld [vmem:[%s2] sm:$0xff]
    %v25 = vld [vmem:[%s2 + $0x8] sm:$0xff]
    %v26 = vld [vmem:[%s2 + $0x10] sm:$0xff]
    %v27 = vld [vmem:[%s2 + $0x18] sm:$0xff]
    %v28 = vld [vmem:[%s3] sm:$0xff]
    %v29 = vld [vmem:[%s3 + $0x8] sm:$0xff]
    %v30 = vld [vmem:[%s3 + $0x10] sm:$0xff]
    %v31 = vld [vmem:[%s3 + $0x18] sm:$0xff]
    %v32 = vld [vmem:[%s0] sm:$0x7]
    %v33 = vld [vmem:[%s1] sm:$0xff]
    %v34 = vld [vmem:[%s1 + $0x8] sm:$0xff]
    %v35 = vld [vmem:[%s1 + $0x10] sm:$0xff]
    %v36 = vld [vmem:[%s1 + $0x18] sm:$0xff]
    %vm40 = vcmask 1041408
    %v41 = vrot.slane %v28, 6
    %v42 = vrot.slane %v29, 6
    %v43 = vsel %vm40, %v41, %v42
    %v44 = vrot.slane %v30, 6
    %v45 = vsel %vm40, %v42, %v44
    %v49 = vsel %vm40, 0.0, %v41
    %51 = vset.pattern.permute.xlu0 0
    %52 = vperm.xlu0 %51, %v33
    %v53 = vpop.permute.xlu0 %52
    %56 = vset.pattern.permute.xlu0 0
    %57 = vperm.xlu0 %56, %v34
    %v58 = vpop.permute.xlu0 %57
    %61 = vset.pattern.permute.xlu0 0
    %62 = vperm.xlu0 %61, %v35
    %v63 = vpop.permute.xlu0 %62
    %66 = vset.pattern.permute.xlu0 0
    %67 = vperm.xlu0 %66, %v36
    %v68 = vpop.permute.xlu0 %67
    %v70 = vmul.f32 %v53, 0.0
    %v71 = vmul.f32 %v49, %v58
    %v72 = vmul.f32 %v43, %v63
    %v73 = vmul.f32 %v45, %v68
    %v74 = vmul.f32 %v24, %v70
    %v75 = vmul.f32 %v25, %v71
    %v76 = vmul.f32 %v26, %v72
    %v77 = vmul.f32 %v27, %v73
    %vm78 = vcmask 261120
    %v80 = vsel %vm78, %v32, 0
    %82 = vmatpush.msra.mxu0 0.0
    %83 = vmatpush.msra.mxu0 0.0
    %84 = vmatpush.msra.mxu0 0.0
    %85 = vmatpush.msra.mxu0 0.0
    %86 = vmatpush.msra.mxu0 0.0
    %87 = vmatpush.msra.mxu0 0.0
    %88 = vmatpush.msra.mxu0 0.0
    %89 = vmatpush.msra.mxu0 0.0
    %90 = vmatpush.msra.mxu0 0.0
    %91 = vmatpush.msra.mxu0 0.0
    %92 = vmatpush.msra.mxu0 0.0
    %93 = vmatpush.msra.mxu0 0.0
    %94 = vmatpush.msra.mxu0 %v77
    %95 = vmatpush.msra.mxu0 %v76
    %96 = vmatpush.msra.mxu0 %v75
    %97 = vmatpush.msra.mxu0 %v74
    %98 = vmatmul.f32.gmra.mxu0 %v80
    %v99 = vpop.f32.mrf.mxu0
    %v100 = vadd.f32 0.0, %v99
    %101 = vdwg.mxu0
    %vm102 = vcmask 124928
    %v103 = vsel %vm102, %v100, 0.0
    %104 = vadd.xlane.f32.xlu0 %v103
    %v105 = vpop.xlane.xlu0 %104
    %vm106 = vcmask 1040384
    %v107 = vrot.slane %v28, 7
    %v108 = vrot.slane %v29, 7
    %v109 = vsel %vm106, %v107, %v108
    %v110 = vrot.slane %v30, 7
    %v111 = vsel %vm106, %v108, %v110
    %v115 = vsel %vm106, 0.0, %v107
    %116 = vset.pattern.permute.xlu0 1
    %117 = vperm.xlu0 %116, %v33
    %v118 = vpop.permute.xlu0 %117
    %120 = vset.pattern.permute.xlu0 1
    %121 = vperm.xlu0 %120, %v34
    %v122 = vpop.permute.xlu0 %121
    %124 = vset.pattern.permute.xlu0 1
    %125 = vperm.xlu0 %124, %v35
    %v126 = vpop.permute.xlu0 %125
    %128 = vset.pattern.permute.xlu0 1
    %129 = vperm.xlu0 %128, %v36
    %v130 = vpop.permute.xlu0 %129
    %v132 = vmul.f32 %v118, 0.0
    %v133 = vmul.f32 %v115, %v122
    %v134 = vmul.f32 %v109, %v126
    %v135 = vmul.f32 %v111, %v130
    %v136 = vmul.f32 %v24, %v132
    %v137 = vmul.f32 %v25, %v133
    %v138 = vmul.f32 %v26, %v134
    %v139 = vmul.f32 %v27, %v135
    %140 = vmatpush.msra.mxu0 0.0
    %141 = vmatpush.msra.mxu0 0.0
    %142 = vmatpush.msra.mxu0 0.0
    %143 = vmatpush.msra.mxu0 0.0
    %144 = vmatpush.msra.mxu0 0.0
    %145 = vmatpush.msra.mxu0 0.0
    %146 = vmatpush.msra.mxu0 0.0
    %147 = vmatpush.msra.mxu0 0.0
    %148 = vmatpush.msra.mxu0 0.0
    %149 = vmatpush.msra.mxu0 0.0
    %150 = vmatpush.msra.mxu0 0.0
    %151 = vmatpush.msra.mxu0 0.0
    %152 = vmatpush.msra.mxu0 %v139
    %153 = vmatpush.msra.mxu0 %v138
    %154 = vmatpush.msra.mxu0 %v137
    %155 = vmatpush.msra.mxu0 %v136
    %156 = vmatmul.f32.gmra.mxu0 %v80
    %v157 = vpop.f32.mrf.mxu0
    %v158 = vadd.f32 0.0, %v157
    %159 = vdwg.mxu0
    %v160 = vsel %vm102, %v158, 0.0
    %161 = vadd.xlane.f32.xlu0 %v160
    %v162 = vpop.xlane.xlu0 %161
    %163 = vset.pattern.permute.xlu0 2
    %164 = vperm.xlu0 %163, %v33
    %v165 = vpop.permute.xlu0 %164
    %167 = vset.pattern.permute.xlu0 2
    %168 = vperm.xlu0 %167, %v34
    %v169 = vpop.permute.xlu0 %168
    %171 = vset.pattern.permute.xlu0 2
    %172 = vperm.xlu0 %171, %v35
    %v173 = vpop.permute.xlu0 %172
    %175 = vset.pattern.permute.xlu0 2
    %176 = vperm.xlu0 %175, %v36
    %v177 = vpop.permute.xlu0 %176
    %v179 = vmul.f32 %v165, 0.0
    %v180 = vmul.f32 %v28, %v169
    %v181 = vmul.f32 %v29, %v173
    %v182 = vmul.f32 %v30, %v177
    %v183 = vmul.f32 %v24, %v179
    %v184 = vmul.f32 %v25, %v180
    %v185 = vmul.f32 %v26, %v181
    %v186 = vmul.f32 %v27, %v182
    %187 = vmatpush.msra.mxu0 0.0
    %188 = vmatpush.msra.mxu0 0.0
    %189 = vmatpush.msra.mxu0 0.0
    %190 = vmatpush.msra.mxu0 0.0
    %191 = vmatpush.msra.mxu0 0.0
    %192 = vmatpush.msra.mxu0 0.0
    %193 = vmatpush.msra.mxu0 0.0
    %194 = vmatpush.msra.mxu0 0.0
    %195 = vmatpush.msra.mxu0 0.0
    %196 = vmatpush.msra.mxu0 0.0
    %197 = vmatpush.msra.mxu0 0.0
    %198 = vmatpush.msra.mxu0 0.0
    %199 = vmatpush.msra.mxu0 %v186
    %200 = vmatpush.msra.mxu0 %v185
    %201 = vmatpush.msra.mxu0 %v184
    %202 = vmatpush.msra.mxu0 %v183
    %203 = vmatmul.f32.gmra.mxu0 %v80
    %v204 = vpop.f32.mrf.mxu0
    %v205 = vadd.f32 0.0, %v204
    %206 = vdwg.mxu0
    %v207 = vsel %vm102, %v205, 0.0
    %208 = vadd.xlane.f32.xlu0 %v207
    %v209 = vpop.xlane.xlu0 %208
    %vm211 = vcmask 1046528
    %v212 = vrot.slane %v28, 1
    %v213 = vrot.slane %v29, 1
    %v214 = vsel %vm211, %v212, %v213
    %v215 = vrot.slane %v30, 1
    %v216 = vsel %vm211, %v213, %v215
    %v217 = vrot.slane %v31, 1
    %v218 = vsel %vm211, %v215, %v217
    %v223 = vsel %vm211, 0.0, %v212
    %224 = vset.pattern.permute.xlu0 3
    %225 = vperm.xlu0 %224, %v33
    %v226 = vpop.permute.xlu0 %225
    %228 = vset.pattern.permute.xlu0 3
    %229 = vperm.xlu0 %228, %v34
    %v230 = vpop.permute.xlu0 %229
    %232 = vset.pattern.permute.xlu0 3
    %233 = vperm.xlu0 %232, %v35
    %v234 = vpop.permute.xlu0 %233
    %236 = vset.pattern.permute.xlu0 3
    %237 = vperm.xlu0 %236, %v36
    %v238 = vpop.permute.xlu0 %237
    %v240 = vmul.f32 %v223, %v226
    %v241 = vmul.f32 %v214, %v230
    %v242 = vmul.f32 %v216, %v234
    %v243 = vmul.f32 %v218, %v238
    %v244 = vmul.f32 %v24, %v240
    %v245 = vmul.f32 %v25, %v241
    %v246 = vmul.f32 %v26, %v242
    %v247 = vmul.f32 %v27, %v243
    %248 = vmatpush.msra.mxu0 0.0
    %249 = vmatpush.msra.mxu0 0.0
    %250 = vmatpush.msra.mxu0 0.0
    %251 = vmatpush.msra.mxu0 0.0
    %252 = vmatpush.msra.mxu0 0.0
    %253 = vmatpush.msra.mxu0 0.0
    %254 = vmatpush.msra.mxu0 0.0
    %255 = vmatpush.msra.mxu0 0.0
    %256 = vmatpush.msra.mxu0 0.0
    %257 = vmatpush.msra.mxu0 0.0
    %258 = vmatpush.msra.mxu0 0.0
    %259 = vmatpush.msra.mxu0 0.0
    %260 = vmatpush.msra.mxu0 %v247
    %261 = vmatpush.msra.mxu0 %v246
    %262 = vmatpush.msra.mxu0 %v245
    %263 = vmatpush.msra.mxu0 %v244
    %264 = vmatmul.f32.gmra.mxu0 %v80
    %v265 = vpop.f32.mrf.mxu0
    %v266 = vadd.f32 0.0, %v265
    %267 = vdwg.mxu0
    %v268 = vsel %vm102, %v266, 0.0
    %269 = vadd.xlane.f32.xlu0 %v268
    %v270 = vpop.xlane.xlu0 %269
    %vm271 = vcmask 1045504
    %v272 = vrot.slane %v28, 2
    %v273 = vrot.slane %v29, 2
    %v274 = vsel %vm271, %v272, %v273
    %v275 = vrot.slane %v30, 2
    %v276 = vsel %vm271, %v273, %v275
    %v277 = vrot.slane %v31, 2
    %v278 = vsel %vm271, %v275, %v277
    %v283 = vsel %vm271, 0.0, %v272
    %284 = vset.pattern.permute.xlu0 4
    %285 = vperm.xlu0 %284, %v33
    %v286 = vpop.permute.xlu0 %285
    %288 = vset.pattern.permute.xlu0 4
    %289 = vperm.xlu0 %288, %v34
    %v290 = vpop.permute.xlu0 %289
    %292 = vset.pattern.permute.xlu0 4
    %293 = vperm.xlu0 %292, %v35
    %v294 = vpop.permute.xlu0 %293
    %296 = vset.pattern.permute.xlu0 4
    %297 = vperm.xlu0 %296, %v36
    %v298 = vpop.permute.xlu0 %297
    %v300 = vmul.f32 %v283, %v286
    %v301 = vmul.f32 %v274, %v290
    %v302 = vmul.f32 %v276, %v294
    %v303 = vmul.f32 %v278, %v298
    %v304 = vmul.f32 %v24, %v300
    %v305 = vmul.f32 %v25, %v301
    %v306 = vmul.f32 %v26, %v302
    %v307 = vmul.f32 %v27, %v303
    %308 = vmatpush.msra.mxu0 0.0
    %309 = vmatpush.msra.mxu0 0.0
    %310 = vmatpush.msra.mxu0 0.0
    %311 = vmatpush.msra.mxu0 0.0
    %312 = vmatpush.msra.mxu0 0.0
    %313 = vmatpush.msra.mxu0 0.0
    %314 = vmatpush.msra.mxu0 0.0
    %315 = vmatpush.msra.mxu0 0.0
    %316 = vmatpush.msra.mxu0 0.0
    %317 = vmatpush.msra.mxu0 0.0
    %318 = vmatpush.msra.mxu0 0.0
    %319 = vmatpush.msra.mxu0 0.0
    %320 = vmatpush.msra.mxu0 %v307
    %321 = vmatpush.msra.mxu0 %v306
    %322 = vmatpush.msra.mxu0 %v305
    %323 = vmatpush.msra.mxu0 %v304
    %324 = vmatmul.f32.gmra.mxu0 %v80
    %v325 = vpop.f32.mrf.mxu0
    %v326 = vadd.f32 0.0, %v325
    %327 = vdwg.mxu0
    %v328 = vsel %vm102, %v326, 0.0
    %329 = vadd.xlane.f32.xlu0 %v328
    %v330 = vpop.xlane.xlu0 %329
    %331 = vset.pattern.permute.xlu0 5
    %332 = vperm.xlu0 %331, %v33
    %v333 = vpop.permute.xlu0 %332
    %335 = vset.pattern.permute.xlu0 5
    %336 = vperm.xlu0 %335, %v34
    %v337 = vpop.permute.xlu0 %336
    %339 = vset.pattern.permute.xlu0 5
    %340 = vperm.xlu0 %339, %v35
    %v341 = vpop.permute.xlu0 %340
    %343 = vset.pattern.permute.xlu0 5
    %344 = vperm.xlu0 %343, %v36
    %v345 = vpop.permute.xlu0 %344
    %v347 = vmul.f32 %v283, %v333
    %v348 = vmul.f32 %v274, %v337
    %v349 = vmul.f32 %v276, %v341
    %v350 = vmul.f32 %v278, %v345
    %v351 = vmul.f32 %v24, %v347
    %v352 = vmul.f32 %v25, %v348
    %v353 = vmul.f32 %v26, %v349
    %v354 = vmul.f32 %v27, %v350
    %355 = vmatpush.msra.mxu0 0.0
    %356 = vmatpush.msra.mxu0 0.0
    %357 = vmatpush.msra.mxu0 0.0
    %358 = vmatpush.msra.mxu0 0.0
    %359 = vmatpush.msra.mxu0 0.0
    %360 = vmatpush.msra.mxu0 0.0
    %361 = vmatpush.msra.mxu0 0.0
    %362 = vmatpush.msra.mxu0 0.0
    %363 = vmatpush.msra.mxu0 0.0
    %364 = vmatpush.msra.mxu0 0.0
    %365 = vmatpush.msra.mxu0 0.0
    %366 = vmatpush.msra.mxu0 0.0
    %367 = vmatpush.msra.mxu0 %v354
    %368 = vmatpush.msra.mxu0 %v353
    %369 = vmatpush.msra.mxu0 %v352
    %370 = vmatpush.msra.mxu0 %v351
    %371 = vmatmul.f32.gmra.mxu0 %v80
    %v372 = vpop.f32.mrf.mxu0
    %v373 = vadd.f32 0.0, %v372
    %374 = vdwg.mxu0
    %v375 = vsel %vm102, %v373, 0.0
    %376 = vadd.xlane.f32.xlu0 %v375
    %v377 = vpop.xlane.xlu0 %376
    %vm378 = vcmask 1044480
    %v379 = vrot.slane %v28, 3
    %v380 = vrot.slane %v29, 3
    %v381 = vsel %vm378, %v379, %v380
    %v382 = vrot.slane %v30, 3
    %v383 = vsel %vm378, %v380, %v382
    %v384 = vrot.slane %v31, 3
    %v385 = vsel %vm378, %v382, %v384
    %v390 = vsel %vm378, 0.0, %v379
    %391 = vset.pattern.permute.xlu0 6
    %392 = vperm.xlu0 %391, %v33
    %v393 = vpop.permute.xlu0 %392
    %395 = vset.pattern.permute.xlu0 6
    %396 = vperm.xlu0 %395, %v34
    %v397 = vpop.permute.xlu0 %396
    %399 = vset.pattern.permute.xlu0 6
    %400 = vperm.xlu0 %399, %v35
    %v401 = vpop.permute.xlu0 %400
    %403 = vset.pattern.permute.xlu0 6
    %404 = vperm.xlu0 %403, %v36
    %v405 = vpop.permute.xlu0 %404
    %v407 = vmul.f32 %v390, %v393
    %v408 = vmul.f32 %v381, %v397
    %v409 = vmul.f32 %v383, %v401
    %v410 = vmul.f32 %v385, %v405
    %v411 = vmul.f32 %v24, %v407
    %v412 = vmul.f32 %v25, %v408
    %v413 = vmul.f32 %v26, %v409
    %v414 = vmul.f32 %v27, %v410
    %415 = vmatpush.msra.mxu0 0.0
    %416 = vmatpush.msra.mxu0 0.0
    %417 = vmatpush.msra.mxu0 0.0
    %418 = vmatpush.msra.mxu0 0.0
    %419 = vmatpush.msra.mxu0 0.0
    %420 = vmatpush.msra.mxu0 0.0
    %421 = vmatpush.msra.mxu0 0.0
    %422 = vmatpush.msra.mxu0 0.0
    %423 = vmatpush.msra.mxu0 0.0
    %424 = vmatpush.msra.mxu0 0.0
    %425 = vmatpush.msra.mxu0 0.0
    %426 = vmatpush.msra.mxu0 0.0
    %427 = vmatpush.msra.mxu0 %v414
    %428 = vmatpush.msra.mxu0 %v413
    %429 = vmatpush.msra.mxu0 %v412
    %430 = vmatpush.msra.mxu0 %v411
    %431 = vmatmul.f32.gmra.mxu0 %v80
    %v432 = vpop.f32.mrf.mxu0
    %v433 = vadd.f32 0.0, %v432
    %434 = vdwg.mxu0
    %v435 = vsel %vm102, %v433, 0.0
    %436 = vadd.xlane.f32.xlu0 %v435
    %v437 = vpop.xlane.xlu0 %436
    %vm438 = vcmask 1043456
    %v439 = vrot.slane %v28, 4
    %v440 = vrot.slane %v29, 4
    %v441 = vsel %vm438, %v439, %v440
    %v442 = vrot.slane %v30, 4
    %v443 = vsel %vm438, %v440, %v442
    %v444 = vrot.slane %v31, 4
    %v445 = vsel %vm438, %v442, %v444
    %v450 = vsel %vm438, 0.0, %v439
    %451 = vset.pattern.permute.xlu0 7
    %452 = vperm.xlu0 %451, %v33
    %v453 = vpop.permute.xlu0 %452
    %455 = vset.pattern.permute.xlu0 7
    %456 = vperm.xlu0 %455, %v34
    %v457 = vpop.permute.xlu0 %456
    %459 = vset.pattern.permute.xlu0 7
    %460 = vperm.xlu0 %459, %v35
    %v461 = vpop.permute.xlu0 %460
    %463 = vset.pattern.permute.xlu0 7
    %464 = vperm.xlu0 %463, %v36
    %v465 = vpop.permute.xlu0 %464
    %v467 = vmul.f32 %v450, %v453
    %v468 = vmul.f32 %v441, %v457
    %v469 = vmul.f32 %v443, %v461
    %v470 = vmul.f32 %v445, %v465
    %v471 = vmul.f32 %v24, %v467
    %v472 = vmul.f32 %v25, %v468
    %v473 = vmul.f32 %v26, %v469
    %v474 = vmul.f32 %v27, %v470
    %475 = vmatpush.msra.mxu0 0.0
    %476 = vmatpush.msra.mxu0 0.0
    %477 = vmatpush.msra.mxu0 0.0
    %478 = vmatpush.msra.mxu0 0.0
    %479 = vmatpush.msra.mxu0 0.0
    %480 = vmatpush.msra.mxu0 0.0
    %481 = vmatpush.msra.mxu0 0.0
    %482 = vmatpush.msra.mxu0 0.0
    %483 = vmatpush.msra.mxu0 0.0
    %484 = vmatpush.msra.mxu0 0.0
    %485 = vmatpush.msra.mxu0 0.0
    %486 = vmatpush.msra.mxu0 0.0
    %487 = vmatpush.msra.mxu0 %v474
    %488 = vmatpush.msra.mxu0 %v473
    %489 = vmatpush.msra.mxu0 %v472
    %490 = vmatpush.msra.mxu0 %v471
    %491 = vmatmul.f32.gmra.mxu0 %v80
    %v492 = vpop.f32.mrf.mxu0
    %v493 = vadd.f32 0.0, %v492
    %494 = vdwg.mxu0
    %v495 = vsel %vm102, %v493, 0.0
    %496 = vadd.xlane.f32.xlu0 %v495
    %v497 = vpop.xlane.xlu0 %496
    %vm498 = vcmask 1042432
    %v499 = vrot.slane %v28, 5
    %v500 = vrot.slane %v29, 5
    %v501 = vsel %vm498, %v499, %v500
    %v502 = vrot.slane %v30, 5
    %v503 = vsel %vm498, %v500, %v502
    %v504 = vrot.slane %v31, 5
    %v505 = vsel %vm498, %v502, %v504
    %v510 = vsel %vm498, 0.0, %v499
    %511 = vset.pattern.permute.xlu0 8
    %512 = vperm.xlu0 %511, %v33
    %v513 = vpop.permute.xlu0 %512
    %515 = vset.pattern.permute.xlu0 8
    %516 = vperm.xlu0 %515, %v34
    %v517 = vpop.permute.xlu0 %516
    %519 = vset.pattern.permute.xlu0 8
    %520 = vperm.xlu0 %519, %v35
    %v521 = vpop.permute.xlu0 %520
    %523 = vset.pattern.permute.xlu0 8
    %524 = vperm.xlu0 %523, %v36
    %v525 = vpop.permute.xlu0 %524
    %v527 = vmul.f32 %v510, %v513
    %v528 = vmul.f32 %v501, %v517
    %v529 = vmul.f32 %v503, %v521
    %v530 = vmul.f32 %v505, %v525
    %v531 = vmul.f32 %v24, %v527
    %v532 = vmul.f32 %v25, %v528
    %v533 = vmul.f32 %v26, %v529
    %v534 = vmul.f32 %v27, %v530
    %535 = vmatpush.msra.mxu0 0.0
    %536 = vmatpush.msra.mxu0 0.0
    %537 = vmatpush.msra.mxu0 0.0
    %538 = vmatpush.msra.mxu0 0.0
    %539 = vmatpush.msra.mxu0 0.0
    %540 = vmatpush.msra.mxu0 0.0
    %541 = vmatpush.msra.mxu0 0.0
    %542 = vmatpush.msra.mxu0 0.0
    %543 = vmatpush.msra.mxu0 0.0
    %544 = vmatpush.msra.mxu0 0.0
    %545 = vmatpush.msra.mxu0 0.0
    %546 = vmatpush.msra.mxu0 0.0
    %547 = vmatpush.msra.mxu0 %v534
    %548 = vmatpush.msra.mxu0 %v533
    %549 = vmatpush.msra.mxu0 %v532
    %550 = vmatpush.msra.mxu0 %v531
    %551 = vmatmul.f32.gmra.mxu0 %v80
    %v552 = vpop.f32.mrf.mxu0
    %v553 = vadd.f32 0.0, %v552
    %554 = vdwg.mxu0
    %v555 = vsel %vm102, %v553, 0.0
    %556 = vadd.xlane.f32.xlu0 %v555
    %v557 = vpop.xlane.xlu0 %556
    %v558 = vrot.slane %v31, 6
    %v559 = vsel %vm40, %v44, %v558
    %561 = vset.pattern.permute.xlu0 9
    %562 = vperm.xlu0 %561, %v33
    %v563 = vpop.permute.xlu0 %562
    %565 = vset.pattern.permute.xlu0 9
    %566 = vperm.xlu0 %565, %v34
    %v567 = vpop.permute.xlu0 %566
    %569 = vset.pattern.permute.xlu0 9
    %570 = vperm.xlu0 %569, %v35
    %v571 = vpop.permute.xlu0 %570
    %573 = vset.pattern.permute.xlu0 9
    %574 = vperm.xlu0 %573, %v36
    %v575 = vpop.permute.xlu0 %574
    %v577 = vmul.f32 %v49, %v563
    %v578 = vmul.f32 %v43, %v567
    %v579 = vmul.f32 %v45, %v571
    %v580 = vmul.f32 %v559, %v575
    %v581 = vmul.f32 %v24, %v577
    %v582 = vmul.f32 %v25, %v578
    %v583 = vmul.f32 %v26, %v579
    %v584 = vmul.f32 %v27, %v580
    %585 = vmatpush.msra.mxu0 0.0
    %586 = vmatpush.msra.mxu0 0.0
    %587 = vmatpush.msra.mxu0 0.0
    %588 = vmatpush.msra.mxu0 0.0
    %589 = vmatpush.msra.mxu0 0.0
    %590 = vmatpush.msra.mxu0 0.0
    %591 = vmatpush.msra.mxu0 0.0
    %592 = vmatpush.msra.mxu0 0.0
    %593 = vmatpush.msra.mxu0 0.0
    %594 = vmatpush.msra.mxu0 0.0
    %595 = vmatpush.msra.mxu0 0.0
    %596 = vmatpush.msra.mxu0 0.0
    %597 = vmatpush.msra.mxu0 %v584
    %598 = vmatpush.msra.mxu0 %v583
    %599 = vmatpush.msra.mxu0 %v582
    %600 = vmatpush.msra.mxu0 %v581
    %601 = vmatmul.f32.gmra.mxu0 %v80
    %v602 = vpop.f32.mrf.mxu0
    %v603 = vadd.f32 0.0, %v602
    %604 = vdwg.mxu0
    %v605 = vsel %vm102, %v603, 0.0
    %606 = vadd.xlane.f32.xlu0 %v605
    %v607 = vpop.xlane.xlu0 %606
    %608 = vset.pattern.permute.xlu0 10
    %609 = vperm.xlu0 %608, %v33
    %v610 = vpop.permute.xlu0 %609
    %612 = vset.pattern.permute.xlu0 10
    %613 = vperm.xlu0 %612, %v34
    %v614 = vpop.permute.xlu0 %613
    %616 = vset.pattern.permute.xlu0 10
    %617 = vperm.xlu0 %616, %v35
    %v618 = vpop.permute.xlu0 %617
    %620 = vset.pattern.permute.xlu0 10
    %621 = vperm.xlu0 %620, %v36
    %v622 = vpop.permute.xlu0 %621
    %v624 = vmul.f32 %v49, %v610
    %v625 = vmul.f32 %v43, %v614
    %v626 = vmul.f32 %v45, %v618
    %v627 = vmul.f32 %v559, %v622
    %v628 = vmul.f32 %v24, %v624
    %v629 = vmul.f32 %v25, %v625
    %v630 = vmul.f32 %v26, %v626
    %v631 = vmul.f32 %v27, %v627
    %632 = vmatpush.msra.mxu0 0.0
    %633 = vmatpush.msra.mxu0 0.0
    %634 = vmatpush.msra.mxu0 0.0
    %635 = vmatpush.msra.mxu0 0.0
    %636 = vmatpush.msra.mxu0 0.0
    %637 = vmatpush.msra.mxu0 0.0
    %638 = vmatpush.msra.mxu0 0.0
    %639 = vmatpush.msra.mxu0 0.0
    %640 = vmatpush.msra.mxu0 0.0
    %641 = vmatpush.msra.mxu0 0.0
    %642 = vmatpush.msra.mxu0 0.0
    %643 = vmatpush.msra.mxu0 0.0
    %644 = vmatpush.msra.mxu0 %v631
    %645 = vmatpush.msra.mxu0 %v630
    %646 = vmatpush.msra.mxu0 %v629
    %647 = vmatpush.msra.mxu0 %v628
    %648 = vmatmul.f32.gmra.mxu0 %v80
    %v649 = vpop.f32.mrf.mxu0
    %v650 = vadd.f32 0.0, %v649
    %651 = vdwg.mxu0
    %v652 = vsel %vm102, %v650, 0.0
    %653 = vadd.xlane.f32.xlu0 %v652
    %v654 = vpop.xlane.xlu0 %653
    %v655 = vrot.slane %v31, 7
    %v656 = vsel %vm106, %v110, %v655
    %658 = vset.pattern.permute.xlu0 11
    %659 = vperm.xlu0 %658, %v33
    %v660 = vpop.permute.xlu0 %659
    %662 = vset.pattern.permute.xlu0 11
    %663 = vperm.xlu0 %662, %v34
    %v664 = vpop.permute.xlu0 %663
    %666 = vset.pattern.permute.xlu0 11
    %667 = vperm.xlu0 %666, %v35
    %v668 = vpop.permute.xlu0 %667
    %670 = vset.pattern.permute.xlu0 11
    %671 = vperm.xlu0 %670, %v36
    %v672 = vpop.permute.xlu0 %671
    %v674 = vmul.f32 %v115, %v660
    %v675 = vmul.f32 %v109, %v664
    %v676 = vmul.f32 %v111, %v668
    %v677 = vmul.f32 %v656, %v672
    %v678 = vmul.f32 %v24, %v674
    %v679 = vmul.f32 %v25, %v675
    %v680 = vmul.f32 %v26, %v676
    %v681 = vmul.f32 %v27, %v677
    %682 = vmatpush.msra.mxu0 0.0
    %683 = vmatpush.msra.mxu0 0.0
    %684 = vmatpush.msra.mxu0 0.0
    %685 = vmatpush.msra.mxu0 0.0
    %686 = vmatpush.msra.mxu0 0.0
    %687 = vmatpush.msra.mxu0 0.0
    %688 = vmatpush.msra.mxu0 0.0
    %689 = vmatpush.msra.mxu0 0.0
    %690 = vmatpush.msra.mxu0 0.0
    %691 = vmatpush.msra.mxu0 0.0
    %692 = vmatpush.msra.mxu0 0.0
    %693 = vmatpush.msra.mxu0 0.0
    %694 = vmatpush.msra.mxu0 %v681
    %695 = vmatpush.msra.mxu0 %v680
    %696 = vmatpush.msra.mxu0 %v679
    %697 = vmatpush.msra.mxu0 %v678
    %698 = vmatmul.f32.gmra.mxu0 %v80
    %v699 = vpop.f32.mrf.mxu0
    %v700 = vadd.f32 0.0, %v699
    %701 = vdwg.mxu0
    %v702 = vsel %vm102, %v700, 0.0
    %703 = vadd.xlane.f32.xlu0 %v702
    %v704 = vpop.xlane.xlu0 %703
    %705 = vset.pattern.permute.xlu0 12
    %706 = vperm.xlu0 %705, %v33
    %v707 = vpop.permute.xlu0 %706
    %709 = vset.pattern.permute.xlu0 12
    %710 = vperm.xlu0 %709, %v34
    %v711 = vpop.permute.xlu0 %710
    %713 = vset.pattern.permute.xlu0 12
    %714 = vperm.xlu0 %713, %v35
    %v715 = vpop.permute.xlu0 %714
    %717 = vset.pattern.permute.xlu0 12
    %718 = vperm.xlu0 %717, %v36
    %v719 = vpop.permute.xlu0 %718
    %v721 = vmul.f32 %v28, %v707
    %v722 = vmul.f32 %v29, %v711
    %v723 = vmul.f32 %v30, %v715
    %v724 = vmul.f32 %v31, %v719
    %v725 = vmul.f32 %v24, %v721
    %v726 = vmul.f32 %v25, %v722
    %v727 = vmul.f32 %v26, %v723
    %v728 = vmul.f32 %v27, %v724
    %729 = vmatpush.msra.mxu0 0.0
    %730 = vmatpush.msra.mxu0 0.0
    %731 = vmatpush.msra.mxu0 0.0
    %732 = vmatpush.msra.mxu0 0.0
    %733 = vmatpush.msra.mxu0 0.0
    %734 = vmatpush.msra.mxu0 0.0
    %735 = vmatpush.msra.mxu0 0.0
    %736 = vmatpush.msra.mxu0 0.0
    %737 = vmatpush.msra.mxu0 0.0
    %738 = vmatpush.msra.mxu0 0.0
    %739 = vmatpush.msra.mxu0 0.0
    %740 = vmatpush.msra.mxu0 0.0
    %741 = vmatpush.msra.mxu0 %v728
    %742 = vmatpush.msra.mxu0 %v727
    %743 = vmatpush.msra.mxu0 %v726
    %744 = vmatpush.msra.mxu0 %v725
    %745 = vmatmul.f32.gmra.mxu0 %v80
    %v746 = vpop.f32.mrf.mxu0
    %v747 = vadd.f32 0.0, %v746
    %748 = vdwg.mxu0
    %v749 = vsel %vm102, %v747, 0.0
    %750 = vadd.xlane.f32.xlu0 %v749
    %v751 = vpop.xlane.xlu0 %750
    %v753 = vsel %vm211, %v217, 0.0
    %754 = vset.pattern.permute.xlu0 13
    %755 = vperm.xlu0 %754, %v33
    %v756 = vpop.permute.xlu0 %755
    %758 = vset.pattern.permute.xlu0 13
    %759 = vperm.xlu0 %758, %v34
    %v760 = vpop.permute.xlu0 %759
    %762 = vset.pattern.permute.xlu0 13
    %763 = vperm.xlu0 %762, %v35
    %v764 = vpop.permute.xlu0 %763
    %766 = vset.pattern.permute.xlu0 13
    %767 = vperm.xlu0 %766, %v36
    %v768 = vpop.permute.xlu0 %767
    %v770 = vmul.f32 %v214, %v756
    %v771 = vmul.f32 %v216, %v760
    %v772 = vmul.f32 %v218, %v764
    %v773 = vmul.f32 %v753, %v768
    %v774 = vmul.f32 %v24, %v770
    %v775 = vmul.f32 %v25, %v771
    %v776 = vmul.f32 %v26, %v772
    %v777 = vmul.f32 %v27, %v773
    %778 = vmatpush.msra.mxu0 0.0
    %779 = vmatpush.msra.mxu0 0.0
    %780 = vmatpush.msra.mxu0 0.0
    %781 = vmatpush.msra.mxu0 0.0
    %782 = vmatpush.msra.mxu0 0.0
    %783 = vmatpush.msra.mxu0 0.0
    %784 = vmatpush.msra.mxu0 0.0
    %785 = vmatpush.msra.mxu0 0.0
    %786 = vmatpush.msra.mxu0 0.0
    %787 = vmatpush.msra.mxu0 0.0
    %788 = vmatpush.msra.mxu0 0.0
    %789 = vmatpush.msra.mxu0 0.0
    %790 = vmatpush.msra.mxu0 %v777
    %791 = vmatpush.msra.mxu0 %v776
    %792 = vmatpush.msra.mxu0 %v775
    %793 = vmatpush.msra.mxu0 %v774
    %794 = vmatmul.f32.gmra.mxu0 %v80
    %v795 = vpop.f32.mrf.mxu0
    %v796 = vadd.f32 0.0, %v795
    %797 = vdwg.mxu0
    %v798 = vsel %vm102, %v796, 0.0
    %799 = vadd.xlane.f32.xlu0 %v798
    %v800 = vpop.xlane.xlu0 %799
    %v802 = vsel %vm271, %v277, 0.0
    %803 = vset.pattern.permute.xlu0 14
    %804 = vperm.xlu0 %803, %v33
    %v805 = vpop.permute.xlu0 %804
    %807 = vset.pattern.permute.xlu0 14
    %808 = vperm.xlu0 %807, %v34
    %v809 = vpop.permute.xlu0 %808
    %811 = vset.pattern.permute.xlu0 14
    %812 = vperm.xlu0 %811, %v35
    %v813 = vpop.permute.xlu0 %812
    %815 = vset.pattern.permute.xlu0 14
    %816 = vperm.xlu0 %815, %v36
    %v817 = vpop.permute.xlu0 %816
    %v819 = vmul.f32 %v274, %v805
    %v820 = vmul.f32 %v276, %v809
    %v821 = vmul.f32 %v278, %v813
    %v822 = vmul.f32 %v802, %v817
    %v823 = vmul.f32 %v24, %v819
    %v824 = vmul.f32 %v25, %v820
    %v825 = vmul.f32 %v26, %v821
    %v826 = vmul.f32 %v27, %v822
    %827 = vmatpush.msra.mxu0 0.0
    %828 = vmatpush.msra.mxu0 0.0
    %829 = vmatpush.msra.mxu0 0.0
    %830 = vmatpush.msra.mxu0 0.0
    %831 = vmatpush.msra.mxu0 0.0
    %832 = vmatpush.msra.mxu0 0.0
    %833 = vmatpush.msra.mxu0 0.0
    %834 = vmatpush.msra.mxu0 0.0
    %835 = vmatpush.msra.mxu0 0.0
    %836 = vmatpush.msra.mxu0 0.0
    %837 = vmatpush.msra.mxu0 0.0
    %838 = vmatpush.msra.mxu0 0.0
    %839 = vmatpush.msra.mxu0 %v826
    %840 = vmatpush.msra.mxu0 %v825
    %841 = vmatpush.msra.mxu0 %v824
    %842 = vmatpush.msra.mxu0 %v823
    %843 = vmatmul.f32.gmra.mxu0 %v80
    %v844 = vpop.f32.mrf.mxu0
    %v845 = vadd.f32 0.0, %v844
    %846 = vdwg.mxu0
    %v847 = vsel %vm102, %v845, 0.0
    %848 = vadd.xlane.f32.xlu0 %v847
    %v849 = vpop.xlane.xlu0 %848
    %850 = vset.pattern.permute.xlu0 15
    %851 = vperm.xlu0 %850, %v33
    %v852 = vpop.permute.xlu0 %851
    %854 = vset.pattern.permute.xlu0 15
    %855 = vperm.xlu0 %854, %v34
    %v856 = vpop.permute.xlu0 %855
    %858 = vset.pattern.permute.xlu0 15
    %859 = vperm.xlu0 %858, %v35
    %v860 = vpop.permute.xlu0 %859
    %862 = vset.pattern.permute.xlu0 15
    %863 = vperm.xlu0 %862, %v36
    %v864 = vpop.permute.xlu0 %863
    %v866 = vmul.f32 %v274, %v852
    %v867 = vmul.f32 %v276, %v856
    %v868 = vmul.f32 %v278, %v860
    %v869 = vmul.f32 %v802, %v864
    %v870 = vmul.f32 %v24, %v866
    %v871 = vmul.f32 %v25, %v867
    %v872 = vmul.f32 %v26, %v868
    %v873 = vmul.f32 %v27, %v869
    %874 = vmatpush.msra.mxu0 0.0
    %875 = vmatpush.msra.mxu0 0.0
    %876 = vmatpush.msra.mxu0 0.0
    %877 = vmatpush.msra.mxu0 0.0
    %878 = vmatpush.msra.mxu0 0.0
    %879 = vmatpush.msra.mxu0 0.0
    %880 = vmatpush.msra.mxu0 0.0
    %881 = vmatpush.msra.mxu0 0.0
    %882 = vmatpush.msra.mxu0 0.0
    %883 = vmatpush.msra.mxu0 0.0
    %884 = vmatpush.msra.mxu0 0.0
    %885 = vmatpush.msra.mxu0 0.0
    %886 = vmatpush.msra.mxu0 %v873
    %887 = vmatpush.msra.mxu0 %v872
    %888 = vmatpush.msra.mxu0 %v871
    %889 = vmatpush.msra.mxu0 %v870
    %890 = vmatmul.f32.gmra.mxu0 %v80
    %v891 = vpop.f32.mrf.mxu0
    %v892 = vadd.f32 0.0, %v891
    %893 = vdwg.mxu0
    %v894 = vsel %vm102, %v892, 0.0
    %895 = vadd.xlane.f32.xlu0 %v894
    %v896 = vpop.xlane.xlu0 %895
    %v898 = vsel %vm378, %v384, 0.0
    %899 = vset.pattern.permute.xlu0 16
    %900 = vperm.xlu0 %899, %v33
    %v901 = vpop.permute.xlu0 %900
    %903 = vset.pattern.permute.xlu0 16
    %904 = vperm.xlu0 %903, %v34
    %v905 = vpop.permute.xlu0 %904
    %907 = vset.pattern.permute.xlu0 16
    %908 = vperm.xlu0 %907, %v35
    %v909 = vpop.permute.xlu0 %908
    %911 = vset.pattern.permute.xlu0 16
    %912 = vperm.xlu0 %911, %v36
    %v913 = vpop.permute.xlu0 %912
    %v915 = vmul.f32 %v381, %v901
    %v916 = vmul.f32 %v383, %v905
    %v917 = vmul.f32 %v385, %v909
    %v918 = vmul.f32 %v898, %v913
    %v919 = vmul.f32 %v24, %v915
    %v920 = vmul.f32 %v25, %v916
    %v921 = vmul.f32 %v26, %v917
    %v922 = vmul.f32 %v27, %v918
    %923 = vmatpush.msra.mxu0 0.0
    %924 = vmatpush.msra.mxu0 0.0
    %925 = vmatpush.msra.mxu0 0.0
    %926 = vmatpush.msra.mxu0 0.0
    %927 = vmatpush.msra.mxu0 0.0
    %928 = vmatpush.msra.mxu0 0.0
    %929 = vmatpush.msra.mxu0 0.0
    %930 = vmatpush.msra.mxu0 0.0
    %931 = vmatpush.msra.mxu0 0.0
    %932 = vmatpush.msra.mxu0 0.0
    %933 = vmatpush.msra.mxu0 0.0
    %934 = vmatpush.msra.mxu0 0.0
    %935 = vmatpush.msra.mxu0 %v922
    %936 = vmatpush.msra.mxu0 %v921
    %937 = vmatpush.msra.mxu0 %v920
    %938 = vmatpush.msra.mxu0 %v919
    %939 = vmatmul.f32.gmra.mxu0 %v80
    %v940 = vpop.f32.mrf.mxu0
    %v941 = vadd.f32 0.0, %v940
    %942 = vdwg.mxu0
    %v943 = vsel %vm102, %v941, 0.0
    %944 = vadd.xlane.f32.xlu0 %v943
    %v945 = vpop.xlane.xlu0 %944
    %v947 = vsel %vm438, %v444, 0.0
    %948 = vset.pattern.permute.xlu0 17
    %949 = vperm.xlu0 %948, %v33
    %v950 = vpop.permute.xlu0 %949
    %952 = vset.pattern.permute.xlu0 17
    %953 = vperm.xlu0 %952, %v34
    %v954 = vpop.permute.xlu0 %953
    %956 = vset.pattern.permute.xlu0 17
    %957 = vperm.xlu0 %956, %v35
    %v958 = vpop.permute.xlu0 %957
    %960 = vset.pattern.permute.xlu0 17
    %961 = vperm.xlu0 %960, %v36
    %v962 = vpop.permute.xlu0 %961
    %v964 = vmul.f32 %v441, %v950
    %v965 = vmul.f32 %v443, %v954
    %v966 = vmul.f32 %v445, %v958
    %v967 = vmul.f32 %v947, %v962
    %v968 = vmul.f32 %v24, %v964
    %v969 = vmul.f32 %v25, %v965
    %v970 = vmul.f32 %v26, %v966
    %v971 = vmul.f32 %v27, %v967
    %972 = vmatpush.msra.mxu0 0.0
    %973 = vmatpush.msra.mxu0 0.0
    %974 = vmatpush.msra.mxu0 0.0
    %975 = vmatpush.msra.mxu0 0.0
    %976 = vmatpush.msra.mxu0 0.0
    %977 = vmatpush.msra.mxu0 0.0
    %978 = vmatpush.msra.mxu0 0.0
    %979 = vmatpush.msra.mxu0 0.0
    %980 = vmatpush.msra.mxu0 0.0
    %981 = vmatpush.msra.mxu0 0.0
    %982 = vmatpush.msra.mxu0 0.0
    %983 = vmatpush.msra.mxu0 0.0
    %984 = vmatpush.msra.mxu0 %v971
    %985 = vmatpush.msra.mxu0 %v970
    %986 = vmatpush.msra.mxu0 %v969
    %987 = vmatpush.msra.mxu0 %v968
    %988 = vmatmul.f32.gmra.mxu0 %v80
    %v989 = vpop.f32.mrf.mxu0
    %v990 = vadd.f32 0.0, %v989
    %991 = vdwg.mxu0
    %v992 = vsel %vm102, %v990, 0.0
    %993 = vadd.xlane.f32.xlu0 %v992
    %v994 = vpop.xlane.xlu0 %993
    %v996 = vsel %vm498, %v504, 0.0
    %997 = vset.pattern.permute.xlu0 18
    %998 = vperm.xlu0 %997, %v33
    %v999 = vpop.permute.xlu0 %998
    %1001 = vset.pattern.permute.xlu0 18
    %1002 = vperm.xlu0 %1001, %v34
    %v1003 = vpop.permute.xlu0 %1002
    %1005 = vset.pattern.permute.xlu0 18
    %1006 = vperm.xlu0 %1005, %v35
    %v1007 = vpop.permute.xlu0 %1006
    %1009 = vset.pattern.permute.xlu0 18
    %1010 = vperm.xlu0 %1009, %v36
    %v1011 = vpop.permute.xlu0 %1010
    %v1013 = vmul.f32 %v501, %v999
    %v1014 = vmul.f32 %v503, %v1003
    %v1015 = vmul.f32 %v505, %v1007
    %v1016 = vmul.f32 %v996, %v1011
    %v1017 = vmul.f32 %v24, %v1013
    %v1018 = vmul.f32 %v25, %v1014
    %v1019 = vmul.f32 %v26, %v1015
    %v1020 = vmul.f32 %v27, %v1016
    %1021 = vmatpush.msra.mxu0 0.0
    %1022 = vmatpush.msra.mxu0 0.0
    %1023 = vmatpush.msra.mxu0 0.0
    %1024 = vmatpush.msra.mxu0 0.0
    %1025 = vmatpush.msra.mxu0 0.0
    %1026 = vmatpush.msra.mxu0 0.0
    %1027 = vmatpush.msra.mxu0 0.0
    %1028 = vmatpush.msra.mxu0 0.0
    %1029 = vmatpush.msra.mxu0 0.0
    %1030 = vmatpush.msra.mxu0 0.0
    %1031 = vmatpush.msra.mxu0 0.0
    %1032 = vmatpush.msra.mxu0 0.0
    %1033 = vmatpush.msra.mxu0 %v1020
    %1034 = vmatpush.msra.mxu0 %v1019
    %1035 = vmatpush.msra.mxu0 %v1018
    %1036 = vmatpush.msra.mxu0 %v1017
    %1037 = vmatmul.f32.gmra.mxu0 %v80
    %v1038 = vpop.f32.mrf.mxu0
    %v1039 = vadd.f32 0.0, %v1038
    %1040 = vdwg.mxu0
    %v1041 = vsel %vm102, %v1039, 0.0
    %1042 = vadd.xlane.f32.xlu0 %v1041
    %v1043 = vpop.xlane.xlu0 %1042
    %v1045 = vsel %vm40, %v558, 0.0
    %1046 = vset.pattern.permute.xlu0 19
    %1047 = vperm.xlu0 %1046, %v33
    %v1048 = vpop.permute.xlu0 %1047
    %1050 = vset.pattern.permute.xlu0 19
    %1051 = vperm.xlu0 %1050, %v34
    %v1052 = vpop.permute.xlu0 %1051
    %1054 = vset.pattern.permute.xlu0 19
    %1055 = vperm.xlu0 %1054, %v35
    %v1056 = vpop.permute.xlu0 %1055
    %1058 = vset.pattern.permute.xlu0 19
    %1059 = vperm.xlu0 %1058, %v36
    %v1060 = vpop.permute.xlu0 %1059
    %v1062 = vmul.f32 %v43, %v1048
    %v1063 = vmul.f32 %v45, %v1052
    %v1064 = vmul.f32 %v559, %v1056
    %v1065 = vmul.f32 %v1045, %v1060
    %v1066 = vmul.f32 %v24, %v1062
    %v1067 = vmul.f32 %v25, %v1063
    %v1068 = vmul.f32 %v26, %v1064
    %v1069 = vmul.f32 %v27, %v1065
    %1070 = vmatpush.msra.mxu0 0.0
    %1071 = vmatpush.msra.mxu0 0.0
    %1072 = vmatpush.msra.mxu0 0.0
    %1073 = vmatpush.msra.mxu0 0.0
    %1074 = vmatpush.msra.mxu0 0.0
    %1075 = vmatpush.msra.mxu0 0.0
    %1076 = vmatpush.msra.mxu0 0.0
    %1077 = vmatpush.msra.mxu0 0.0
    %1078 = vmatpush.msra.mxu0 0.0
    %1079 = vmatpush.msra.mxu0 0.0
    %1080 = vmatpush.msra.mxu0 0.0
    %1081 = vmatpush.msra.mxu0 0.0
    %1082 = vmatpush.msra.mxu0 %v1069
    %1083 = vmatpush.msra.mxu0 %v1068
    %1084 = vmatpush.msra.mxu0 %v1067
    %1085 = vmatpush.msra.mxu0 %v1066
    %1086 = vmatmul.f32.gmra.mxu0 %v80
    %v1087 = vpop.f32.mrf.mxu0
    %v1088 = vadd.f32 0.0, %v1087
    %1089 = vdwg.mxu0
    %v1090 = vsel %vm102, %v1088, 0.0
    %1091 = vadd.xlane.f32.xlu0 %v1090
    %v1092 = vpop.xlane.xlu0 %1091
    %1093 = vset.pattern.permute.xlu0 20
    %1094 = vperm.xlu0 %1093, %v33
    %v1095 = vpop.permute.xlu0 %1094
    %1097 = vset.pattern.permute.xlu0 20
    %1098 = vperm.xlu0 %1097, %v34
    %v1099 = vpop.permute.xlu0 %1098
    %1101 = vset.pattern.permute.xlu0 20
    %1102 = vperm.xlu0 %1101, %v35
    %v1103 = vpop.permute.xlu0 %1102
    %1105 = vset.pattern.permute.xlu0 20
    %1106 = vperm.xlu0 %1105, %v36
    %v1107 = vpop.permute.xlu0 %1106
    %v1109 = vmul.f32 %v43, %v1095
    %v1110 = vmul.f32 %v45, %v1099
    %v1111 = vmul.f32 %v559, %v1103
    %v1112 = vmul.f32 %v1045, %v1107
    %v1113 = vmul.f32 %v24, %v1109
    %v1114 = vmul.f32 %v25, %v1110
    %v1115 = vmul.f32 %v26, %v1111
    %v1116 = vmul.f32 %v27, %v1112
    %1117 = vmatpush.msra.mxu0 0.0
    %1118 = vmatpush.msra.mxu0 0.0
    %1119 = vmatpush.msra.mxu0 0.0
    %1120 = vmatpush.msra.mxu0 0.0
    %1121 = vmatpush.msra.mxu0 0.0
    %1122 = vmatpush.msra.mxu0 0.0
    %1123 = vmatpush.msra.mxu0 0.0
    %1124 = vmatpush.msra.mxu0 0.0
    %1125 = vmatpush.msra.mxu0 0.0
    %1126 = vmatpush.msra.mxu0 0.0
    %1127 = vmatpush.msra.mxu0 0.0
    %1128 = vmatpush.msra.mxu0 0.0
    %1129 = vmatpush.msra.mxu0 %v1116
    %1130 = vmatpush.msra.mxu0 %v1115
    %1131 = vmatpush.msra.mxu0 %v1114
    %1132 = vmatpush.msra.mxu0 %v1113
    %1133 = vmatmul.f32.gmra.mxu0 %v80
    %v1134 = vpop.f32.mrf.mxu0
    %v1135 = vadd.f32 0.0, %v1134
    %1136 = vdwg.mxu0
    %v1137 = vsel %vm102, %v1135, 0.0
    %1138 = vadd.xlane.f32.xlu0 %v1137
    %v1139 = vpop.xlane.xlu0 %1138
    %v1141 = vsel %vm106, %v655, 0.0
    %1142 = vset.pattern.permute.xlu0 21
    %1143 = vperm.xlu0 %1142, %v33
    %v1144 = vpop.permute.xlu0 %1143
    %1146 = vset.pattern.permute.xlu0 21
    %1147 = vperm.xlu0 %1146, %v34
    %v1148 = vpop.permute.xlu0 %1147
    %1150 = vset.pattern.permute.xlu0 21
    %1151 = vperm.xlu0 %1150, %v35
    %v1152 = vpop.permute.xlu0 %1151
    %1154 = vset.pattern.permute.xlu0 21
    %1155 = vperm.xlu0 %1154, %v36
    %v1156 = vpop.permute.xlu0 %1155
    %v1158 = vmul.f32 %v109, %v1144
    %v1159 = vmul.f32 %v111, %v1148
    %v1160 = vmul.f32 %v656, %v1152
    %v1161 = vmul.f32 %v1141, %v1156
    %v1162 = vmul.f32 %v24, %v1158
    %v1163 = vmul.f32 %v25, %v1159
    %v1164 = vmul.f32 %v26, %v1160
    %v1165 = vmul.f32 %v27, %v1161
    %1166 = vmatpush.msra.mxu0 0.0
    %1167 = vmatpush.msra.mxu0 0.0
    %1168 = vmatpush.msra.mxu0 0.0
    %1169 = vmatpush.msra.mxu0 0.0
    %1170 = vmatpush.msra.mxu0 0.0
    %1171 = vmatpush.msra.mxu0 0.0
    %1172 = vmatpush.msra.mxu0 0.0
    %1173 = vmatpush.msra.mxu0 0.0
    %1174 = vmatpush.msra.mxu0 0.0
    %1175 = vmatpush.msra.mxu0 0.0
    %1176 = vmatpush.msra.mxu0 0.0
    %1177 = vmatpush.msra.mxu0 0.0
    %1178 = vmatpush.msra.mxu0 %v1165
    %1179 = vmatpush.msra.mxu0 %v1164
    %1180 = vmatpush.msra.mxu0 %v1163
    %1181 = vmatpush.msra.mxu0 %v1162
    %1182 = vmatmul.f32.gmra.mxu0 %v80
    %v1183 = vpop.f32.mrf.mxu0
    %v1184 = vadd.f32 0.0, %v1183
    %1185 = vdwg.mxu0
    %v1186 = vsel %vm102, %v1184, 0.0
    %1187 = vadd.xlane.f32.xlu0 %v1186
    %v1188 = vpop.xlane.xlu0 %1187
    %1189 = vset.pattern.permute.xlu0 22
    %1190 = vperm.xlu0 %1189, %v33
    %v1191 = vpop.permute.xlu0 %1190
    %1193 = vset.pattern.permute.xlu0 22
    %1194 = vperm.xlu0 %1193, %v34
    %v1195 = vpop.permute.xlu0 %1194
    %1197 = vset.pattern.permute.xlu0 22
    %1198 = vperm.xlu0 %1197, %v35
    %v1199 = vpop.permute.xlu0 %1198
    %1201 = vset.pattern.permute.xlu0 22
    %1202 = vperm.xlu0 %1201, %v36
    %v1203 = vpop.permute.xlu0 %1202
    %v1205 = vmul.f32 %v29, %v1191
    %v1206 = vmul.f32 %v30, %v1195
    %v1207 = vmul.f32 %v31, %v1199
    %v1208 = vmul.f32 %v1203, 0.0
    %v1209 = vmul.f32 %v24, %v1205
    %v1210 = vmul.f32 %v25, %v1206
    %v1211 = vmul.f32 %v26, %v1207
    %v1212 = vmul.f32 %v27, %v1208
    %1213 = vmatpush.msra.mxu0 0.0
    %1214 = vmatpush.msra.mxu0 0.0
    %1215 = vmatpush.msra.mxu0 0.0
    %1216 = vmatpush.msra.mxu0 0.0
    %1217 = vmatpush.msra.mxu0 0.0
    %1218 = vmatpush.msra.mxu0 0.0
    %1219 = vmatpush.msra.mxu0 0.0
    %1220 = vmatpush.msra.mxu0 0.0
    %1221 = vmatpush.msra.mxu0 0.0
    %1222 = vmatpush.msra.mxu0 0.0
    %1223 = vmatpush.msra.mxu0 0.0
    %1224 = vmatpush.msra.mxu0 0.0
    %1225 = vmatpush.msra.mxu0 %v1212
    %1226 = vmatpush.msra.mxu0 %v1211
    %1227 = vmatpush.msra.mxu0 %v1210
    %1228 = vmatpush.msra.mxu0 %v1209
    %1229 = vmatmul.f32.gmra.mxu0 %v80
    %v1230 = vpop.f32.mrf.mxu0
    %v1231 = vadd.f32 0.0, %v1230
    %1232 = vdwg.mxu0
    %v1233 = vsel %vm102, %v1231, 0.0
    %1234 = vadd.xlane.f32.xlu0 %v1233
    %v1235 = vpop.xlane.xlu0 %1234
    %1236 = vset.pattern.permute.xlu0 23
    %1237 = vperm.xlu0 %1236, %v33
    %v1238 = vpop.permute.xlu0 %1237
    %1240 = vset.pattern.permute.xlu0 23
    %1241 = vperm.xlu0 %1240, %v34
    %v1242 = vpop.permute.xlu0 %1241
    %1244 = vset.pattern.permute.xlu0 23
    %1245 = vperm.xlu0 %1244, %v35
    %v1246 = vpop.permute.xlu0 %1245
    %1248 = vset.pattern.permute.xlu0 23
    %1249 = vperm.xlu0 %1248, %v36
    %v1250 = vpop.permute.xlu0 %1249
    %v1252 = vmul.f32 %v216, %v1238
    %v1253 = vmul.f32 %v218, %v1242
    %v1254 = vmul.f32 %v753, %v1246
    %v1255 = vmul.f32 %v1250, 0.0
    %v1256 = vmul.f32 %v24, %v1252
    %v1257 = vmul.f32 %v25, %v1253
    %v1258 = vmul.f32 %v26, %v1254
    %v1259 = vmul.f32 %v27, %v1255
    %1260 = vmatpush.msra.mxu0 0.0
    %1261 = vmatpush.msra.mxu0 0.0
    %1262 = vmatpush.msra.mxu0 0.0
    %1263 = vmatpush.msra.mxu0 0.0
    %1264 = vmatpush.msra.mxu0 0.0
    %1265 = vmatpush.msra.mxu0 0.0
    %1266 = vmatpush.msra.mxu0 0.0
    %1267 = vmatpush.msra.mxu0 0.0
    %1268 = vmatpush.msra.mxu0 0.0
    %1269 = vmatpush.msra.mxu0 0.0
    %1270 = vmatpush.msra.mxu0 0.0
    %1271 = vmatpush.msra.mxu0 0.0
    %1272 = vmatpush.msra.mxu0 %v1259
    %1273 = vmatpush.msra.mxu0 %v1258
    %1274 = vmatpush.msra.mxu0 %v1257
    %1275 = vmatpush.msra.mxu0 %v1256
    %1276 = vmatmul.f32.gmra.mxu0 %v80
    %v1277 = vpop.f32.mrf.mxu0
    %v1278 = vadd.f32 0.0, %v1277
    %1279 = vdwg.mxu0
    %v1280 = vsel %vm102, %v1278, 0.0
    %1281 = vadd.xlane.f32.xlu0 %v1280
    %v1282 = vpop.xlane.xlu0 %1281
    %1283 = vset.pattern.permute.xlu0 24
    %1284 = vperm.xlu0 %1283, %v33
    %v1285 = vpop.permute.xlu0 %1284
    %1287 = vset.pattern.permute.xlu0 24
    %1288 = vperm.xlu0 %1287, %v34
    %v1289 = vpop.permute.xlu0 %1288
    %1291 = vset.pattern.permute.xlu0 24
    %1292 = vperm.xlu0 %1291, %v35
    %v1293 = vpop.permute.xlu0 %1292
    %1295 = vset.pattern.permute.xlu0 24
    %1296 = vperm.xlu0 %1295, %v36
    %v1297 = vpop.permute.xlu0 %1296
    %v1299 = vmul.f32 %v276, %v1285
    %v1300 = vmul.f32 %v278, %v1289
    %v1301 = vmul.f32 %v802, %v1293
    %v1302 = vmul.f32 %v1297, 0.0
    %v1303 = vmul.f32 %v24, %v1299
    %v1304 = vmul.f32 %v25, %v1300
    %v1305 = vmul.f32 %v26, %v1301
    %v1306 = vmul.f32 %v27, %v1302
    %1307 = vmatpush.msra.mxu0 0.0
    %1308 = vmatpush.msra.mxu0 0.0
    %1309 = vmatpush.msra.mxu0 0.0
    %1310 = vmatpush.msra.mxu0 0.0
    %1311 = vmatpush.msra.mxu0 0.0
    %1312 = vmatpush.msra.mxu0 0.0
    %1313 = vmatpush.msra.mxu0 0.0
    %1314 = vmatpush.msra.mxu0 0.0
    %1315 = vmatpush.msra.mxu0 0.0
    %1316 = vmatpush.msra.mxu0 0.0
    %1317 = vmatpush.msra.mxu0 0.0
    %1318 = vmatpush.msra.mxu0 0.0
    %1319 = vmatpush.msra.mxu0 %v1306
    %1320 = vmatpush.msra.mxu0 %v1305
    %1321 = vmatpush.msra.mxu0 %v1304
    %1322 = vmatpush.msra.mxu0 %v1303
    %1323 = vmatmul.f32.gmra.mxu0 %v80
    %v1324 = vpop.f32.mrf.mxu0
    %v1325 = vadd.f32 0.0, %v1324
    %1326 = vdwg.mxu0
    %v1327 = vsel %vm102, %v1325, 0.0
    %1328 = vadd.xlane.f32.xlu0 %v1327
    %v1329 = vpop.xlane.xlu0 %1328
    %vm1330 = vcmask 7168
    %v1331 = vsel %vm1330, %v105, %v162
    %vm1332 = vcmask 15360
    %v1333 = vsel %vm1332, %v1331, %v209
    %vm1334 = vcmask 23552
    %v1335 = vsel %vm1334, %v1333, %v270
    %vm1336 = vcmask 31744
    %v1337 = vsel %vm1336, %v1335, %v330
    %vm1338 = vcmask 39936
    %v1339 = vsel %vm1338, %v1337, %v377
    %vm1340 = vcmask 48128
    %v1341 = vsel %vm1340, %v1339, %v437
    %vm1342 = vcmask 56320
    %v1343 = vsel %vm1342, %v1341, %v497
    %vm1344 = vcmask 64512
    %v1345 = vsel %vm1344, %v1343, %v557
    %vm1346 = vcmask 72704
    %v1347 = vsel %vm1346, %v1345, %v607
    %vm1348 = vcmask 80896
    %v1349 = vsel %vm1348, %v1347, %v654
    %vm1350 = vcmask 89088
    %v1351 = vsel %vm1350, %v1349, %v704
    %vm1352 = vcmask 97280
    %v1353 = vsel %vm1352, %v1351, %v751
    %vm1354 = vcmask 105472
    %v1355 = vsel %vm1354, %v1353, %v800
    %vm1356 = vcmask 113664
    %v1357 = vsel %vm1356, %v1355, %v849
    %vm1358 = vcmask 121856
    %v1359 = vsel %vm1358, %v1357, %v896
    %v1360 = vsel %vm1330, %v945, %v994
    %v1361 = vsel %vm1332, %v1360, %v1043
    %v1362 = vsel %vm1334, %v1361, %v1092
    %v1363 = vsel %vm1336, %v1362, %v1139
    %v1364 = vsel %vm1338, %v1363, %v1188
    %v1365 = vsel %vm1340, %v1364, %v1235
    %v1366 = vsel %vm1342, %v1365, %v1282
    %v1367 = vsel %vm1344, %v1366, %v1329
    %1369 = vrot.lane.b32.xlu0 %v1367, 16
    %v1370 = vpop.permute.xlu0 %1369
    %vm1372 = vcmask 130048
    %v1373 = vsel %vm1372, %v1359, %v1370
    %v1374 = vld [vmem:[%s4] sm:$0xff]
    %v1375 = vld [vmem:[%s4 + $0x8] sm:$0xff]
    %v1376 = vld [vmem:[%s4 + $0x10] sm:$0xff]
    %v1377 = vld [vmem:[%s4 + $0x18] sm:$0x1]
    %v1378 = vld [vmem:[%s5] sm:$0x1]
    %v1380 = vperm.slane %v1378, 0
    %vm1382 = vcmask 203776
    %v1384 = vsel %vm1382, %v1373, 0
    %v1387 = vsel %vm106, %v1377, 0
    %1389 = vmatpush.msra.mxu0 0.0
    %1390 = vmatpush.msra.mxu0 0.0
    %1391 = vmatpush.msra.mxu0 0.0
    %1392 = vmatpush.msra.mxu0 0.0
    %1393 = vmatpush.msra.mxu0 0.0
    %1394 = vmatpush.msra.mxu0 0.0
    %1395 = vmatpush.msra.mxu0 0.0
    %1396 = vmatpush.msra.mxu0 0.0
    %1397 = vmatpush.msra.mxu0 0.0
    %1398 = vmatpush.msra.mxu0 0.0
    %1399 = vmatpush.msra.mxu0 0.0
    %1400 = vmatpush.msra.mxu0 0.0
    %1401 = vmatpush.msra.mxu0 %v1387
    %1402 = vmatpush.msra.mxu0 %v1376
    %1403 = vmatpush.msra.mxu0 %v1375
    %1404 = vmatpush.msra.mxu0 %v1374
    %1405 = vmatmul.f32.gmra.mxu0 %v1384
    %v1406 = vpop.f32.mrf.mxu0
    %v1407 = vadd.f32 %v1380, %v1406
    %1408 = vdwg.mxu0
    %vm1409 = vcmask 26624
    %1410 = vst.msk [vmem:[#allocation2] sm:$0x7] %vm1409, %v1407
    // Predicated region
    $region26: #{mennet_forward.4} parent=1 // pred_check
      _
    $region27: #{mennet_forward.4} parent=1 // pred_check_branch
      %1412 = sbr.rel (0) target = $region29
    $region28: #{mennet_forward.4} parent=1 // pred_region
      %1414 = vsyncadd [#allocation3], 0
      %s1416 = sshll.u32 [#allocation2], 4
      %s1417 = int_to_ptr.vmem [resolvable:$true] %s1416
      %s1418 = sshll.u32 %s6, 4
      %s1419 = int_to_ptr.hbm [resolvable:$true] %s1418
      %1421 = dma.vmem_to_hbm [thread:$0]  %s1417, 64, %s1419, [#allocation3]
    $region29: #{mennet_forward.4} parent=1 // pred_fallthru
      _
    // Predicated region
    $region30: #{mennet_forward.4} parent=1 // pred_check
      _
    $region31: #{mennet_forward.4} parent=1 // pred_check_branch
      %1423 = sbr.rel (0) target = $region33
    $region32: #{mennet_forward.4} parent=1 // pred_region
      %1425 = dma.done [#allocation3], 64
    $region33: #{mennet_forward.4} parent=1 // pred_fallthru
      _
    %1426 = vsyncpa [#allocation3], 1

// kernel: mennet_forward.3
$region0: #{mennet_forward.3}
  #allocation0 [shape = 'u32[]', space=smem, size = 0x4, offset = 0x4, fixed_abs, tag = 'smem constant byte address 0x4 - core index']
  #allocation1 [shape = 'u32[72,128]{1,0:T(1,128)}', space=vmem, size = 0x9000, scoped, tag = 'internal scratch']
  %s0 = inlined_call_operand.vmem [shape: f32[64,48], index: 0, kind: input, shape index: {}]
  %s1 = inlined_call_operand.vmem [shape: f32[16,9], index: 1, kind: input, shape index: {}]
  %s2 = inlined_call_operand.vmem [shape: f32[432,8], index: 2, kind: input, shape index: {}]
  %s3 = inlined_call_operand.vmem [shape: f32[1,8], index: 3, kind: input, shape index: {}]
  %s4 = inlined_call_operand.vmem [shape: f32[72,16], index: 4, kind: input, shape index: {}]
  %s5 = inlined_call_operand.vmem [shape: f32[1,16], index: 5, kind: input, shape index: {}]
  %s6 = inlined_call_operand.vmem [shape: f32[64,16], index: 6, kind: output, shape index: {}]
  %s7 = sld [smem:[#allocation0]]
  $region57: #{mennet_forward.3} parent=0
    _
  %s9 = ssub.s32 1, %s7
  %s10 = scalar_select 0, %s9, %s7
  loop: start=0, step=1, limit=6
  $region2: #{mennet_forward.3} parent=0 // loop_pre_header
    _
  $region3: #{mennet_forward.3} parent=0 // loop_header
    %s12 = sphi 0, %s16
    %p13 = scmp.ge.s32.totalorder %s12, 6
    %s22 = sphi 0, %s24
    %s25 = sphi 0, %s22
    %s26 = sphi 0, %s25
    %s42 = sphi 0, %s26
    %s46 = sphi 0, %s46
    %s48 = sphi 0, %s46
    %s49 = sphi 0, %s48
    %s63 = sphi 0, %s49
    %s67 = sphi 0, %s67
    %s69 = sphi 0, %s67
    %s70 = sphi 0, %s69
    %s84 = sphi 0, %s70
    %s88 = sphi 0, %s88
    %s90 = sphi 0, %s88
    %s91 = sphi 0, %s90
    %s105 = sphi 0, %s91
    %s109 = sphi 0, %s109
    %s111 = sphi 0, %s109
    %s112 = sphi 0, %s111
    %s126 = sphi 0, %s112
    %s130 = sphi 0, %s130
    %s132 = sphi 0, %s130
    %s133 = sphi 0, %s132
    %s147 = sphi 0, %s133
    %s153 = sphi 0, %s155
    %s156 = sphi 0, %s153
    %s157 = sphi 0, %s156
    %s173 = sphi 0, %s157
  $region4: #{mennet_forward.3} parent=0 // loop_header_branch
    %15 = sbr.rel (%p13) target = $region8
  $region5: #{mennet_forward.3} parent=0 // loop_body
    %s17 = ssub.s32 %s12, 1
    %s18 = ssub.s32 %s12, 2
    %s19 = sadd.s32 %s12, 1
    %s20 = ssub.s32 %s12, %s19
    %p21 = scmp.eq.s32.totalorder %s20, 0
    %s23 = sadd.s32 %s22, 1
    %s24 = scalar_select %p21, %s22, %s23
    %p27 = pneg %p21
    %p28 = scmp.eq.s32.totalorder %s12, 3
    %p29 = por %p27, %p28
    %p30 = scmp.ne.s32.totalorder %s22, %s25
    %p31 = scmp.eq.s32.totalorder %s12, 0
    %p32 = por %p30, %p31
    %p33 = scmp.ne.s32.totalorder %s22, %s25
    %p34 = scmp.eq.s32.totalorder %s17, 3
    %p35 = por %p33, %p34
    %p36 = scmp.ne.s32.totalorder %s25, %s26
    %p37 = scmp.eq.s32.totalorder %s17, 0
    %p38 = por %p36, %p37
    %p39 = scmp.ne.s32.totalorder %s25, %s26
    %p40 = scmp.eq.s32.totalorder %s18, 3
    %p41 = por %p39, %p40
    %p43 = scmp.ne.s32.totalorder %s26, %s42
    %p44 = scmp.eq.s32.totalorder %s18, 0
    %p45 = por %p43, %p44
    %s47 = sadd.s32 %s46, 1
    %p50 = scmp.eq.s32.totalorder %s12, 3
    %p51 = scmp.ne.s32.totalorder %s46, %s48
    %p52 = scmp.eq.s32.totalorder %s12, 0
    %p53 = por %p51, %p52
    %p54 = scmp.ne.s32.totalorder %s46, %s48
    %p55 = scmp.eq.s32.totalorder %s17, 3
    %p56 = por %p54, %p55
    %p57 = scmp.ne.s32.totalorder %s48, %s49
    %p58 = scmp.eq.s32.totalorder %s17, 0
    %p59 = por %p57, %p58
    %p60 = scmp.ne.s32.totalorder %s48, %s49
    %p61 = scmp.eq.s32.totalorder %s18, 3
    %p62 = por %p60, %p61
    %p64 = scmp.ne.s32.totalorder %s49, %s63
    %p65 = scmp.eq.s32.totalorder %s18, 0
    %p66 = por %p64, %p65
    %s68 = sadd.s32 %s67, 1
    %p71 = scmp.eq.s32.totalorder %s12, 3
    %p72 = scmp.ne.s32.totalorder %s67, %s69
    %p73 = scmp.eq.s32.totalorder %s12, 0
    %p74 = por %p72, %p73
    %p75 = scmp.ne.s32.totalorder %s67, %s69
    %p76 = scmp.eq.s32.totalorder %s17, 3
    %p77 = por %p75, %p76
    %p78 = scmp.ne.s32.totalorder %s69, %s70
    %p79 = scmp.eq.s32.totalorder %s17, 0
    %p80 = por %p78, %p79
    %p81 = scmp.ne.s32.totalorder %s69, %s70
    %p82 = scmp.eq.s32.totalorder %s18, 3
    %p83 = por %p81, %p82
    %p85 = scmp.ne.s32.totalorder %s70, %s84
    %p86 = scmp.eq.s32.totalorder %s18, 0
    %p87 = por %p85, %p86
    %s89 = sadd.s32 %s88, 1
    %p92 = scmp.eq.s32.totalorder %s12, 3
    %p93 = scmp.ne.s32.totalorder %s88, %s90
    %p94 = scmp.eq.s32.totalorder %s12, 0
    %p95 = por %p93, %p94
    %p96 = scmp.ne.s32.totalorder %s88, %s90
    %p97 = scmp.eq.s32.totalorder %s17, 3
    %p98 = por %p96, %p97
    %p99 = scmp.ne.s32.totalorder %s90, %s91
    %p100 = scmp.eq.s32.totalorder %s17, 0
    %p101 = por %p99, %p100
    %p102 = scmp.ne.s32.totalorder %s90, %s91
    %p103 = scmp.eq.s32.totalorder %s18, 3
    %p104 = por %p102, %p103
    %p106 = scmp.ne.s32.totalorder %s91, %s105
    %p107 = scmp.eq.s32.totalorder %s18, 0
    %p108 = por %p106, %p107
    %s110 = sadd.s32 %s109, 1
    %p113 = scmp.eq.s32.totalorder %s12, 3
    %p114 = scmp.ne.s32.totalorder %s109, %s111
    %p115 = scmp.eq.s32.totalorder %s12, 0
    %p116 = por %p114, %p115
    %p117 = scmp.ne.s32.totalorder %s109, %s111
    %p118 = scmp.eq.s32.totalorder %s17, 3
    %p119 = por %p117, %p118
    %p120 = scmp.ne.s32.totalorder %s111, %s112
    %p121 = scmp.eq.s32.totalorder %s17, 0
    %p122 = por %p120, %p121
    %p123 = scmp.ne.s32.totalorder %s111, %s112
    %p124 = scmp.eq.s32.totalorder %s18, 3
    %p125 = por %p123, %p124
    %p127 = scmp.ne.s32.totalorder %s112, %s126
    %p128 = scmp.eq.s32.totalorder %s18, 0
    %p129 = por %p127, %p128
    %s131 = sadd.s32 %s130, 1
    %p134 = scmp.eq.s32.totalorder %s12, 3
    %p135 = scmp.ne.s32.totalorder %s130, %s132
    %p136 = scmp.eq.s32.totalorder %s12, 0
    %p137 = por %p135, %p136
    %p138 = scmp.ne.s32.totalorder %s130, %s132
    %p139 = scmp.eq.s32.totalorder %s17, 3
    %p140 = por %p138, %p139
    %p141 = scmp.ne.s32.totalorder %s132, %s133
    %p142 = scmp.eq.s32.totalorder %s17, 0
    %p143 = por %p141, %p142
    %p144 = scmp.ne.s32.totalorder %s132, %s133
    %p145 = scmp.eq.s32.totalorder %s18, 3
    %p146 = por %p144, %p145
    %p148 = scmp.ne.s32.totalorder %s133, %s147
    %p149 = scmp.eq.s32.totalorder %s18, 0
    %p150 = por %p148, %p149
    %s151 = ssub.s32 %s12, %s19
    %p152 = scmp.eq.s32.totalorder %s151, 0
    %s154 = sadd.s32 %s153, 1
    %s155 = scalar_select %p152, %s153, %s154
    %p158 = pneg %p152
    %p159 = scmp.eq.s32.totalorder %s12, 3
    %p160 = por %p158, %p159
    %p161 = scmp.ne.s32.totalorder %s153, %s156
    %p162 = scmp.eq.s32.totalorder %s12, 0
    %p163 = por %p161, %p162
    %p164 = scmp.ne.s32.totalorder %s153, %s156
    %p165 = scmp.eq.s32.totalorder %s17, 3
    %p166 = por %p164, %p165
    %p167 = scmp.ne.s32.totalorder %s156, %s157
    %p168 = scmp.eq.s32.totalorder %s17, 0
    %p169 = por %p167, %p168
    %p170 = scmp.ne.s32.totalorder %s156, %s157
    %p171 = scmp.eq.s32.totalorder %s18, 3
    %p172 = por %p170, %p171
    %p174 = scmp.ne.s32.totalorder %s157, %s173
    %p175 = scmp.eq.s32.totalorder %s18, 0
    %p176 = por %p174, %p175
    %p177 = scmp.le.s32.totalorder 1, %s12
    %p178 = scmp.lt.s32.totalorder %s12, 5
    %p179 = pnand %p177, %p178
    %p180 = pneg %p179
    // Predicated region
    $region9: #{mennet_forward.3} parent=5 // pred_check
      _
    $region10: #{mennet_forward.3} parent=5 // pred_check_branch
      %182 = sbr.rel (%p179) target = $region12
    $region11: #{mennet_forward.3} parent=5 // pred_region
      %s183 = ssub.s32 %s12, 1
      // Predicated region
      $region13: #{mennet_forward.3} parent=11 // pred_check
        %p184 = pneg %p59
      $region14: #{mennet_forward.3} parent=11 // pred_check_branch
        %186 = sbr.rel (%p184) target = $region16
      $region15: #{mennet_forward.3} parent=11 // pred_region
        _
      $region16: #{mennet_forward.3} parent=11 // pred_fallthru
        _
      // Predicated region
      $region17: #{mennet_forward.3} parent=11 // pred_check
        %p187 = pneg %p80
      $region18: #{mennet_forward.3} parent=11 // pred_check_branch
        %189 = sbr.rel (%p187) target = $region20
      $region19: #{mennet_forward.3} parent=11 // pred_region
        _
      $region20: #{mennet_forward.3} parent=11 // pred_fallthru
        _
      // Predicated region
      $region21: #{mennet_forward.3} parent=11 // pred_check
        %p190 = pneg %p101
      $region22: #{mennet_forward.3} parent=11 // pred_check_branch
        %192 = sbr.rel (%p190) target = $region24
      $region23: #{mennet_forward.3} parent=11 // pred_region
        _
      $region24: #{mennet_forward.3} parent=11 // pred_fallthru
        _
      // Predicated region
      $region25: #{mennet_forward.3} parent=11 // pred_check
        %p193 = pneg %p122
      $region26: #{mennet_forward.3} parent=11 // pred_check_branch
        %195 = sbr.rel (%p193) target = $region28
      $region27: #{mennet_forward.3} parent=11 // pred_region
        _
      $region28: #{mennet_forward.3} parent=11 // pred_fallthru
        _
      // Predicated region
      $region29: #{mennet_forward.3} parent=11 // pred_check
        %p196 = pneg %p143
      $region30: #{mennet_forward.3} parent=11 // pred_check_branch
        %198 = sbr.rel (%p196) target = $region32
      $region31: #{mennet_forward.3} parent=11 // pred_region
        _
      $region32: #{mennet_forward.3} parent=11 // pred_fallthru
        _
    $region12: #{mennet_forward.3} parent=5 // pred_fallthru
      _
    %p199 = scmp.lt.s32.totalorder %s12, 4
    // Predicated region
    $region33: #{mennet_forward.3} parent=5 // pred_check
      %p200 = pneg %p199
    $region34: #{mennet_forward.3} parent=5 // pred_check_branch
      %202 = sbr.rel (%p200) target = $region36
    $region35: #{mennet_forward.3} parent=5 // pred_region
      // Predicated region
      $region37: #{mennet_forward.3} parent=35 // pred_check
        %p203 = pneg %p32
      $region38: #{mennet_forward.3} parent=35 // pred_check_branch
        %205 = sbr.rel (%p203) target = $region40
      $region39: #{mennet_forward.3} parent=35 // pred_region
        %s206 = smul.u32 2, %s12
        %p207 = scmp.lt.s32.totalorder %s206, 7
        %s208 = scalar_select %p207, %s206, 7
        %s209 = smul.addr %s208, 8
        %s210 = scalar_lea.vmem %s0, %s209
        %s211 = smul.u32 2, %s12
      $region40: #{mennet_forward.3} parent=35 // pred_fallthru
        _
    $region36: #{mennet_forward.3} parent=5 // pred_fallthru
      _
    %p212 = scmp.le.s32.totalorder 1, %s12
    %p213 = scmp.lt.s32.totalorder %s12, 5
    %p214 = pnand %p212, %p213
    %p215 = pneg %p214
    // Predicated region
    $region41: #{mennet_forward.3} parent=5 // pred_check
      _
    $region42: #{mennet_forward.3} parent=5 // pred_check_branch
      %217 = sbr.rel (%p214) target = $region44
    $region43: #{mennet_forward.3} parent=5 // pred_region
      %s218 = ssub.s32 %s12, 1
      %s219 = smul.u32 2, %s17
      %p220 = scmp.lt.s32.totalorder %s219, 7
      %s221 = scalar_select %p220, %s219, 7
      %s222 = smul.addr %s221, 8
      %s223 = scalar_lea.vmem %s0, %s222
      %p224 = pneg %p38
      %p225 = pneg %p35
      %p226 = pneg %p59
      %p227 = pneg %p56
      %p228 = pneg %p80
      %p229 = pneg %p77
      %p230 = pneg %p101
      %p231 = pneg %p98
      %p232 = pneg %p122
      %p233 = pneg %p119
      %p234 = pneg %p143
      %p235 = pneg %p140
      %p236 = pneg %p169
      %p237 = pneg %p166
      %s238 = smul.u32 2, %s17
      %p239 = scmp.lt.s32.totalorder %s238, 7
      %s240 = scalar_select %p239, %s238, 7
      %s241 = smul.addr %s240, 8
      %s242 = scalar_lea.vmem %s6, %s241
      %s243 = smul.u32 2, %s17
      %p244 = scmp.lt.s32.totalorder %s243, 7
      %s245 = scalar_select %p244, %s243, 7
      %s246 = smul.addr %s245, 8
      %s247 = scalar_lea.vmem %s0, %s246
      %s248 = smul.u32 2, %s17
      %s249 = smul.u32 2, %s17
      %p250 = scmp.lt.s32.totalorder %s249, 7
      %s251 = scalar_select %p250, %s249, 7
      %s252 = smul.addr %s251, 8
      %s253 = scalar_lea.vmem %s6, %s252
      %s254 = smul.u32 2, %s17
      %v255 = vld [vmem:[%s247] sm:$0xff]
      %v256 = vld [vmem:[%s247 + $0x8] sm:$0xff]
      %v257 = vld [vmem:[%s1] sm:$0xff]
      %v258 = vld [vmem:[%s1 + $0x8] sm:$0xff]
      %v259 = vld [vmem:[%s2] sm:$0xff]
      %v260 = vld [vmem:[%s2 + $0x8] sm:$0xff]
      %v261 = vld [vmem:[%s2 + $0x10] sm:$0xff]
      %v262 = vld [vmem:[%s2 + $0x18] sm:$0xff]
      %v263 = vld [vmem:[%s2 + $0x20] sm:$0xff]
      %v264 = vld [vmem:[%s2 + $0x28] sm:$0xff]
      %v265 = vld [vmem:[%s2 + $0x30] sm:$0xff]
      %v266 = vld [vmem:[%s2 + $0x38] sm:$0xff]
      %v267 = vld [vmem:[%s2 + $0x40] sm:$0xff]
      %v268 = vld [vmem:[%s2 + $0x48] sm:$0xff]
      %v269 = vld [vmem:[%s2 + $0x50] sm:$0xff]
      %v270 = vld [vmem:[%s2 + $0x58] sm:$0xff]
      %v271 = vld [vmem:[%s2 + $0x60] sm:$0xff]
      %v272 = vld [vmem:[%s2 + $0x68] sm:$0xff]
      %v273 = vld [vmem:[%s2 + $0x70] sm:$0xff]
      %v274 = vld [vmem:[%s2 + $0x78] sm:$0xff]
      %v275 = vld [vmem:[%s2 + $0x80] sm:$0xff]
      %v276 = vld [vmem:[%s2 + $0x88] sm:$0xff]
      %v277 = vld [vmem:[%s2 + $0x90] sm:$0xff]
      %v278 = vld [vmem:[%s2 + $0x98] sm:$0xff]
      %v279 = vld [vmem:[%s2 + $0xa0] sm:$0xff]
      %v280 = vld [vmem:[%s2 + $0xa8] sm:$0xff]
      %v281 = vld [vmem:[%s2 + $0xb0] sm:$0xff]
      %v282 = vld [vmem:[%s2 + $0xb8] sm:$0xff]
      %v283 = vld [vmem:[%s2 + $0xc0] sm:$0xff]
      %v284 = vld [vmem:[%s2 + $0xc8] sm:$0xff]
      %v285 = vld [vmem:[%s2 + $0xd0] sm:$0xff]
      %v286 = vld [vmem:[%s2 + $0xd8] sm:$0xff]
      %v287 = vld [vmem:[%s2 + $0xe0] sm:$0xff]
      %v288 = vld [vmem:[%s2 + $0xe8] sm:$0xff]
      %v289 = vld [vmem:[%s2 + $0xf0] sm:$0xff]
      %v290 = vld [vmem:[%s2 + $0xf8] sm:$0xff]
      %v291 = vld [vmem:[%s2 + $0x100] sm:$0xff]
      %v292 = vld [vmem:[%s2 + $0x108] sm:$0xff]
      %v293 = vld [vmem:[%s2 + $0x110] sm:$0xff]
      %v294 = vld [vmem:[%s2 + $0x118] sm:$0xff]
      %v295 = vld [vmem:[%s2 + $0x120] sm:$0xff]
      %v296 = vld [vmem:[%s2 + $0x128] sm:$0xff]
      %v297 = vld [vmem:[%s2 + $0x130] sm:$0xff]
      %v298 = vld [vmem:[%s2 + $0x138] sm:$0xff]
      %v299 = vld [vmem:[%s2 + $0x140] sm:$0xff]
      %v300 = vld [vmem:[%s2 + $0x148] sm:$0xff]
      %v301 = vld [vmem:[%s2 + $0x150] sm:$0xff]
      %v302 = vld [vmem:[%s2 + $0x158] sm:$0xff]
      %v303 = vld [vmem:[%s2 + $0x160] sm:$0xff]
      %v304 = vld [vmem:[%s2 + $0x168] sm:$0xff]
      %v305 = vld [vmem:[%s2 + $0x170] sm:$0xff]
      %v306 = vld [vmem:[%s2 + $0x178] sm:$0xff]
      %v307 = vld [vmem:[%s2 + $0x180] sm:$0xff]
      %v308 = vld [vmem:[%s2 + $0x188] sm:$0xff]
      %v309 = vld [vmem:[%s2 + $0x190] sm:$0xff]
      %v310 = vld [vmem:[%s2 + $0x198] sm:$0xff]
      %v311 = vld [vmem:[%s2 + $0x1a0] sm:$0xff]
      %v312 = vld [vmem:[%s2 + $0x1a8] sm:$0xff]
      %v313 = vld [vmem:[%s4] sm:$0xff]
      %v314 = vld [vmem:[%s4 + $0x8] sm:$0xff]
      %v315 = vld [vmem:[%s4 + $0x10] sm:$0xff]
      %v316 = vld [vmem:[%s4 + $0x18] sm:$0xff]
      %v317 = vld [vmem:[%s4 + $0x20] sm:$0xff]
      %v318 = vld [vmem:[%s4 + $0x28] sm:$0xff]
      %v319 = vld [vmem:[%s4 + $0x30] sm:$0xff]
      %v320 = vld [vmem:[%s4 + $0x38] sm:$0xff]
      %v321 = vld [vmem:[%s4 + $0x40] sm:$0xff]
      %v322 = vld [vmem:[%s3] sm:$0x1]
      %vm325 = vcmask 1044480
      %v326 = vrot.slane %v255, 3
      %v327 = vrot.slane %v256, 3
      %v328 = vsel %vm325, %v326, %v327
      %v331 = vsel %vm325, 0.0, %v326
      %333 = vset.pattern.permute.xlu0 0
      %334 = vperm.xlu0 %333, %v257
      %v335 = vpop.permute.xlu0 %334
      %338 = vset.pattern.permute.xlu0 0
      %339 = vperm.xlu0 %338, %v258
      %v340 = vpop.permute.xlu0 %339
      %v342 = vmul.f32 %v331, %v335
      %v343 = vmul.f32 %v328, %v340
      %vm344 = vcmask 1043456
      %v345 = vrot.slane %v255, 4
      %v346 = vrot.slane %v256, 4
      %v347 = vsel %vm344, %v345, %v346
      %v350 = vsel %vm344, 0.0, %v345
      %351 = vset.pattern.permute.xlu0 1
      %352 = vperm.xlu0 %351, %v257
      %v353 = vpop.permute.xlu0 %352
      %355 = vset.pattern.permute.xlu0 1
      %356 = vperm.xlu0 %355, %v258
      %v357 = vpop.permute.xlu0 %356
      %v359 = vmul.f32 %v350, %v353
      %v360 = vmul.f32 %v347, %v357
      %vm361 = vcmask 392192
      %v363 = vsel %vm361, %v359, 0
      %v366 = vsel %vm361, %v360, 0
      %368 = vmatpush.msra.mxu0 0.0
      %369 = vmatpush.msra.mxu0 0.0
      %370 = vmatpush.msra.mxu0 0.0
      %371 = vmatpush.msra.mxu0 0.0
      %372 = vmatpush.msra.mxu0 0.0
      %373 = vmatpush.msra.mxu0 0.0
      %374 = vmatpush.msra.mxu0 0.0
      %375 = vmatpush.msra.mxu0 0.0
      %376 = vmatpush.msra.mxu0 0.0
      %377 = vmatpush.msra.mxu0 0.0
      %378 = vmatpush.msra.mxu0 %v270
      %379 = vmatpush.msra.mxu0 %v269
      %380 = vmatpush.msra.mxu0 %v268
      %381 = vmatpush.msra.mxu0 %v267
      %382 = vmatpush.msra.mxu0 %v266
      %383 = vmatpush.msra.mxu0 %v265
      %384 = vmatmul.f32.gmra.mxu0 %v363
      %v385 = vpop.f32.mrf.mxu0
      %v386 = vadd.f32 0.0, %v385
      %387 = vmatmul.f32.gmra.mxu0 %v366
      %v388 = vpop.f32.mrf.mxu0
      %v389 = vadd.f32 0.0, %v388
      %390 = vdwg.mxu0
      %v392 = vsel %vm361, %v342, 0
      %v395 = vsel %vm361, %v343, 0
      %397 = vmatpush.msra.mxu0 0.0
      %398 = vmatpush.msra.mxu0 0.0
      %399 = vmatpush.msra.mxu0 0.0
      %400 = vmatpush.msra.mxu0 0.0
      %401 = vmatpush.msra.mxu0 0.0
      %402 = vmatpush.msra.mxu0 0.0
      %403 = vmatpush.msra.mxu0 0.0
      %404 = vmatpush.msra.mxu0 0.0
      %405 = vmatpush.msra.mxu0 0.0
      %406 = vmatpush.msra.mxu0 0.0
      %407 = vmatpush.msra.mxu0 %v264
      %408 = vmatpush.msra.mxu0 %v263
      %409 = vmatpush.msra.mxu0 %v262
      %410 = vmatpush.msra.mxu0 %v261
      %411 = vmatpush.msra.mxu0 %v260
      %412 = vmatpush.msra.mxu0 %v259
      %413 = vmatmul.f32.gmra.mxu0 %v392
      %v414 = vpop.f32.mrf.mxu0
      %v415 = vadd.f32 %v386, %v414
      %416 = vmatmul.f32.gmra.mxu0 %v395
      %v417 = vpop.f32.mrf.mxu0
      %v418 = vadd.f32 %v389, %v417
      %419 = vdwg.mxu0
      %vm420 = vcmask 1042432
      %v421 = vrot.slane %v255, 5
      %v422 = vrot.slane %v256, 5
      %v423 = vsel %vm420, %v421, %v422
      %v426 = vsel %vm420, 0.0, %v421
      %427 = vset.pattern.permute.xlu0 2
      %428 = vperm.xlu0 %427, %v257
      %v429 = vpop.permute.xlu0 %428
      %431 = vset.pattern.permute.xlu0 2
      %432 = vperm.xlu0 %431, %v258
      %v433 = vpop.permute.xlu0 %432
      %v435 = vmul.f32 %v426, %v429
      %v436 = vmul.f32 %v423, %v433
      %v438 = vsel %vm361, %v435, 0
      %v441 = vsel %vm361, %v436, 0
      %443 = vmatpush.msra.mxu0 0.0
      %444 = vmatpush.msra.mxu0 0.0
      %445 = vmatpush.msra.mxu0 0.0
      %446 = vmatpush.msra.mxu0 0.0
      %447 = vmatpush.msra.mxu0 0.0
      %448 = vmatpush.msra.mxu0 0.0
      %449 = vmatpush.msra.mxu0 0.0
      %450 = vmatpush.msra.mxu0 0.0
      %451 = vmatpush.msra.mxu0 0.0
      %452 = vmatpush.msra.mxu0 0.0
      %453 = vmatpush.msra.mxu0 %v276
      %454 = vmatpush.msra.mxu0 %v275
      %455 = vmatpush.msra.mxu0 %v274
      %456 = vmatpush.msra.mxu0 %v273
      %457 = vmatpush.msra.mxu0 %v272
      %458 = vmatpush.msra.mxu0 %v271
      %459 = vmatmul.f32.gmra.mxu0 %v438
      %v460 = vpop.f32.mrf.mxu0
      %v461 = vadd.f32 0.0, %v460
      %462 = vmatmul.f32.gmra.mxu0 %v441
      %v463 = vpop.f32.mrf.mxu0
      %v464 = vadd.f32 0.0, %v463
      %465 = vdwg.mxu0
      %v466 = vadd.f32 %v415, %v461
      %v467 = vadd.f32 %v418, %v464
      %vm468 = vcmask 1040384
      %v469 = vrot.slane %v255, 7
      %v470 = vrot.slane %v256, 7
      %v471 = vsel %vm468, %v469, %v470
      %v474 = vsel %vm468, 0.0, %v469
      %475 = vset.pattern.permute.xlu0 3
      %476 = vperm.xlu0 %475, %v257
      %v477 = vpop.permute.xlu0 %476
      %479 = vset.pattern.permute.xlu0 3
      %480 = vperm.xlu0 %479, %v258
      %v481 = vpop.permute.xlu0 %480
      %v483 = vmul.f32 %v474, %v477
      %v484 = vmul.f32 %v471, %v481
      %v486 = vsel %vm361, %v483, 0
      %v489 = vsel %vm361, %v484, 0
      %491 = vmatpush.msra.mxu0 0.0
      %492 = vmatpush.msra.mxu0 0.0
      %493 = vmatpush.msra.mxu0 0.0
      %494 = vmatpush.msra.mxu0 0.0
      %495 = vmatpush.msra.mxu0 0.0
      %496 = vmatpush.msra.mxu0 0.0
      %497 = vmatpush.msra.mxu0 0.0
      %498 = vmatpush.msra.mxu0 0.0
      %499 = vmatpush.msra.mxu0 0.0
      %500 = vmatpush.msra.mxu0 0.0
      %501 = vmatpush.msra.mxu0 %v282
      %502 = vmatpush.msra.mxu0 %v281
      %503 = vmatpush.msra.mxu0 %v280
      %504 = vmatpush.msra.mxu0 %v279
      %505 = vmatpush.msra.mxu0 %v278
      %506 = vmatpush.msra.mxu0 %v277
      %507 = vmatmul.f32.gmra.mxu0 %v486
      %v508 = vpop.f32.mrf.mxu0
      %v509 = vadd.f32 0.0, %v508
      %510 = vmatmul.f32.gmra.mxu0 %v489
      %v511 = vpop.f32.mrf.mxu0
      %v512 = vadd.f32 0.0, %v511
      %513 = vdwg.mxu0
      %v514 = vadd.f32 %v466, %v509
      %v515 = vadd.f32 %v467, %v512
      %516 = vset.pattern.permute.xlu0 4
      %517 = vperm.xlu0 %516, %v257
      %v518 = vpop.permute.xlu0 %517
      %520 = vset.pattern.permute.xlu0 4
      %521 = vperm.xlu0 %520, %v258
      %v522 = vpop.permute.xlu0 %521
      %v524 = vmul.f32 %v255, %v518
      %v525 = vmul.f32 %v256, %v522
      %v527 = vsel %vm361, %v524, 0
      %v530 = vsel %vm361, %v525, 0
      %532 = vmatpush.msra.mxu0 0.0
      %533 = vmatpush.msra.mxu0 0.0
      %534 = vmatpush.msra.mxu0 0.0
      %535 = vmatpush.msra.mxu0 0.0
      %536 = vmatpush.msra.mxu0 0.0
      %537 = vmatpush.msra.mxu0 0.0
      %538 = vmatpush.msra.mxu0 0.0
      %539 = vmatpush.msra.mxu0 0.0
      %540 = vmatpush.msra.mxu0 0.0
      %541 = vmatpush.msra.mxu0 0.0
      %542 = vmatpush.msra.mxu0 %v288
      %543 = vmatpush.msra.mxu0 %v287
      %544 = vmatpush.msra.mxu0 %v286
      %545 = vmatpush.msra.mxu0 %v285
      %546 = vmatpush.msra.mxu0 %v284
      %547 = vmatpush.msra.mxu0 %v283
      %548 = vmatmul.f32.gmra.mxu0 %v527
      %v549 = vpop.f32.mrf.mxu0
      %v550 = vadd.f32 0.0, %v549
      %551 = vmatmul.f32.gmra.mxu0 %v530
      %v552 = vpop.f32.mrf.mxu0
      %v553 = vadd.f32 0.0, %v552
      %554 = vdwg.mxu0
      %v555 = vadd.f32 %v514, %v550
      %v556 = vadd.f32 %v515, %v553
      %vm557 = vcmask 1046528
      %v558 = vrot.slane %v255, 1
      %v559 = vrot.slane %v256, 1
      %v560 = vsel %vm557, %v558, %v559
      %v563 = vsel %vm557, %v559, 0.0
      %564 = vset.pattern.permute.xlu0 5
      %565 = vperm.xlu0 %564, %v257
      %v566 = vpop.permute.xlu0 %565
      %568 = vset.pattern.permute.xlu0 5
      %569 = vperm.xlu0 %568, %v258
      %v570 = vpop.permute.xlu0 %569
      %v572 = vmul.f32 %v560, %v566
      %v573 = vmul.f32 %v563, %v570
      %v575 = vsel %vm361, %v572, 0
      %v578 = vsel %vm361, %v573, 0
      %580 = vmatpush.msra.mxu0 0.0
      %581 = vmatpush.msra.mxu0 0.0
      %582 = vmatpush.msra.mxu0 0.0
      %583 = vmatpush.msra.mxu0 0.0
      %584 = vmatpush.msra.mxu0 0.0
      %585 = vmatpush.msra.mxu0 0.0
      %586 = vmatpush.msra.mxu0 0.0
      %587 = vmatpush.msra.mxu0 0.0
      %588 = vmatpush.msra.mxu0 0.0
      %589 = vmatpush.msra.mxu0 0.0
      %590 = vmatpush.msra.mxu0 %v294
      %591 = vmatpush.msra.mxu0 %v293
      %592 = vmatpush.msra.mxu0 %v292
      %593 = vmatpush.msra.mxu0 %v291
      %594 = vmatpush.msra.mxu0 %v290
      %595 = vmatpush.msra.mxu0 %v289
      %596 = vmatmul.f32.gmra.mxu0 %v575
      %v597 = vpop.f32.mrf.mxu0
      %v598 = vadd.f32 0.0, %v597
      %599 = vmatmul.f32.gmra.mxu0 %v578
      %v600 = vpop.f32.mrf.mxu0
      %v601 = vadd.f32 0.0, %v600
      %602 = vdwg.mxu0
      %v603 = vadd.f32 %v555, %v598
      %v604 = vadd.f32 %v556, %v601
      %v606 = vsel %vm325, %v327, 0.0
      %607 = vset.pattern.permute.xlu0 6
      %608 = vperm.xlu0 %607, %v257
      %v609 = vpop.permute.xlu0 %608
      %611 = vset.pattern.permute.xlu0 6
      %612 = vperm.xlu0 %611, %v258
      %v613 = vpop.permute.xlu0 %612
      %v615 = vmul.f32 %v328, %v609
      %v616 = vmul.f32 %v606, %v613
      %v618 = vsel %vm361, %v615, 0
      %v621 = vsel %vm361, %v616, 0
      %623 = vmatpush.msra.mxu0 0.0
      %624 = vmatpush.msra.mxu0 0.0
      %625 = vmatpush.msra.mxu0 0.0
      %626 = vmatpush.msra.mxu0 0.0
      %627 = vmatpush.msra.mxu0 0.0
      %628 = vmatpush.msra.mxu0 0.0
      %629 = vmatpush.msra.mxu0 0.0
      %630 = vmatpush.msra.mxu0 0.0
      %631 = vmatpush.msra.mxu0 0.0
      %632 = vmatpush.msra.mxu0 0.0
      %633 = vmatpush.msra.mxu0 %v300
      %634 = vmatpush.msra.mxu0 %v299
      %635 = vmatpush.msra.mxu0 %v298
      %636 = vmatpush.msra.mxu0 %v297
      %637 = vmatpush.msra.mxu0 %v296
      %638 = vmatpush.msra.mxu0 %v295
      %639 = vmatmul.f32.gmra.mxu0 %v618
      %v640 = vpop.f32.mrf.mxu0
      %v641 = vadd.f32 0.0, %v640
      %642 = vmatmul.f32.gmra.mxu0 %v621
      %v643 = vpop.f32.mrf.mxu0
      %v644 = vadd.f32 0.0, %v643
      %645 = vdwg.mxu0
      %v646 = vadd.f32 %v603, %v641
      %v647 = vadd.f32 %v604, %v644
      %v649 = vsel %vm344, %v346, 0.0
      %650 = vset.pattern.permute.xlu0 7
      %651 = vperm.xlu0 %650, %v257
      %v652 = vpop.permute.xlu0 %651
      %654 = vset.pattern.permute.xlu0 7
      %655 = vperm.xlu0 %654, %v258
      %v656 = vpop.permute.xlu0 %655
      %v658 = vmul.f32 %v347, %v652
      %v659 = vmul.f32 %v649, %v656
      %v661 = vsel %vm361, %v658, 0
      %v664 = vsel %vm361, %v659, 0
      %666 = vmatpush.msra.mxu0 0.0
      %667 = vmatpush.msra.mxu0 0.0
      %668 = vmatpush.msra.mxu0 0.0
      %669 = vmatpush.msra.mxu0 0.0
      %670 = vmatpush.msra.mxu0 0.0
      %671 = vmatpush.msra.mxu0 0.0
      %672 = vmatpush.msra.mxu0 0.0
      %673 = vmatpush.msra.mxu0 0.0
      %674 = vmatpush.msra.mxu0 0.0
      %675 = vmatpush.msra.mxu0 0.0
      %676 = vmatpush.msra.mxu0 %v306
      %677 = vmatpush.msra.mxu0 %v305
      %678 = vmatpush.msra.mxu0 %v304
      %679 = vmatpush.msra.mxu0 %v303
      %680 = vmatpush.msra.mxu0 %v302
      %681 = vmatpush.msra.mxu0 %v301
      %682 = vmatmul.f32.gmra.mxu0 %v661
      %v683 = vpop.f32.mrf.mxu0
      %v684 = vadd.f32 0.0, %v683
      %685 = vmatmul.f32.gmra.mxu0 %v664
      %v686 = vpop.f32.mrf.mxu0
      %v687 = vadd.f32 0.0, %v686
      %688 = vdwg.mxu0
      %v689 = vadd.f32 %v646, %v684
      %v690 = vadd.f32 %v647, %v687
      %v692 = vsel %vm420, %v422, 0.0
      %693 = vset.pattern.permute.xlu0 8
      %694 = vperm.xlu0 %693, %v257
      %v695 = vpop.permute.xlu0 %694
      %697 = vset.pattern.permute.xlu0 8
      %698 = vperm.xlu0 %697, %v258
      %v699 = vpop.permute.xlu0 %698
      %v701 = vmul.f32 %v423, %v695
      %v702 = vmul.f32 %v692, %v699
      %v704 = vsel %vm361, %v701, 0
      %v707 = vsel %vm361, %v702, 0
      %709 = vmatpush.msra.mxu0 0.0
      %710 = vmatpush.msra.mxu0 0.0
      %711 = vmatpush.msra.mxu0 0.0
      %712 = vmatpush.msra.mxu0 0.0
      %713 = vmatpush.msra.mxu0 0.0
      %714 = vmatpush.msra.mxu0 0.0
      %715 = vmatpush.msra.mxu0 0.0
      %716 = vmatpush.msra.mxu0 0.0
      %717 = vmatpush.msra.mxu0 0.0
      %718 = vmatpush.msra.mxu0 0.0
      %719 = vmatpush.msra.mxu0 %v312
      %720 = vmatpush.msra.mxu0 %v311
      %721 = vmatpush.msra.mxu0 %v310
      %722 = vmatpush.msra.mxu0 %v309
      %723 = vmatpush.msra.mxu0 %v308
      %724 = vmatpush.msra.mxu0 %v307
      %725 = vmatmul.f32.gmra.mxu0 %v704
      %v726 = vpop.f32.mrf.mxu0
      %v727 = vadd.f32 0.0, %v726
      %728 = vmatmul.f32.gmra.mxu0 %v707
      %v729 = vpop.f32.mrf.mxu0
      %v730 = vadd.f32 0.0, %v729
      %731 = vdwg.mxu0
      %v732 = vadd.f32 %v689, %v727
      %v733 = vadd.f32 %v690, %v730
      %v735 = vperm.slane %v322, 0
      %v737 = vadd.f32 %v732, %v735
      %v738 = vadd.f32 %v733, %v735
      %v739 = vmax.f32 %v737, 0.0
      %v740 = vmax.f32 %v738, 0.0
      %v741 = vld [vmem:[%s5] sm:$0x1]
      %v744 = vrot.slane %v739, 3
      %v745 = vrot.slane %v740, 3
      %v746 = vsel %vm325, %v744, %v745
      %v749 = vsel %vm325, 0.0, %v744
      %v750 = vmul.f32 %v749, %v335
      %v751 = vmul.f32 %v746, %v340
      %v752 = vrot.slane %v739, 4
      %v753 = vrot.slane %v740, 4
      %v754 = vsel %vm344, %v752, %v753
      %v757 = vsel %vm344, 0.0, %v752
      %v758 = vmul.f32 %v757, %v353
      %v759 = vmul.f32 %v754, %v357
      %vm760 = vcmask 64512
      %v762 = vsel %vm760, %v758, 0
      %v765 = vsel %vm760, %v759, 0
      %767 = vmatpush.msra.mxu0 0.0
      %768 = vmatpush.msra.mxu0 0.0
      %769 = vmatpush.msra.mxu0 0.0
      %770 = vmatpush.msra.mxu0 0.0
      %771 = vmatpush.msra.mxu0 0.0
      %772 = vmatpush.msra.mxu0 0.0
      %773 = vmatpush.msra.mxu0 0.0
      %774 = vmatpush.msra.mxu0 0.0
      %775 = vmatpush.msra.mxu0 0.0
      %776 = vmatpush.msra.mxu0 0.0
      %777 = vmatpush.msra.mxu0 0.0
      %778 = vmatpush.msra.mxu0 0.0
      %779 = vmatpush.msra.mxu0 0.0
      %780 = vmatpush.msra.mxu0 0.0
      %781 = vmatpush.msra.mxu0 0.0
      %782 = vmatpush.msra.mxu0 %v314
      %783 = vmatmul.f32.gmra.mxu0 %v762
      %v784 = vpop.f32.mrf.mxu0
      %v785 = vadd.f32 0.0, %v784
      %786 = vmatmul.f32.gmra.mxu0 %v765
      %v787 = vpop.f32.mrf.mxu0
      %v788 = vadd.f32 0.0, %v787
      %789 = vdwg.mxu0
      %v791 = vsel %vm760, %v750, 0
      %v794 = vsel %vm760, %v751, 0
      %796 = vmatpush.msra.mxu0 0.0
      %797 = vmatpush.msra.mxu0 0.0
      %798 = vmatpush.msra.mxu0 0.0
      %799 = vmatpush.msra.mxu0 0.0
      %800 = vmatpush.msra.mxu0 0.0
      %801 = vmatpush.msra.mxu0 0.0
      %802 = vmatpush.msra.mxu0 0.0
      %803 = vmatpush.msra.mxu0 0.0
      %804 = vmatpush.msra.mxu0 0.0
      %805 = vmatpush.msra.mxu0 0.0
      %806 = vmatpush.msra.mxu0 0.0
      %807 = vmatpush.msra.mxu0 0.0
      %808 = vmatpush.msra.mxu0 0.0
      %809 = vmatpush.msra.mxu0 0.0
      %810 = vmatpush.msra.mxu0 0.0
      %811 = vmatpush.msra.mxu0 %v313
      %812 = vmatmul.f32.gmra.mxu0 %v791
      %v813 = vpop.f32.mrf.mxu0
      %v814 = vadd.f32 %v785, %v813
      %815 = vmatmul.f32.gmra.mxu0 %v794
      %v816 = vpop.f32.mrf.mxu0
      %v817 = vadd.f32 %v788, %v816
      %818 = vdwg.mxu0
      %v819 = vrot.slane %v739, 5
      %v820 = vrot.slane %v740, 5
      %v821 = vsel %vm420, %v819, %v820
      %v824 = vsel %vm420, 0.0, %v819
      %v825 = vmul.f32 %v824, %v429
      %v826 = vmul.f32 %v821, %v433
      %v828 = vsel %vm760, %v825, 0
      %v831 = vsel %vm760, %v826, 0
      %833 = vmatpush.msra.mxu0 0.0
      %834 = vmatpush.msra.mxu0 0.0
      %835 = vmatpush.msra.mxu0 0.0
      %836 = vmatpush.msra.mxu0 0.0
      %837 = vmatpush.msra.mxu0 0.0
      %838 = vmatpush.msra.mxu0 0.0
      %839 = vmatpush.msra.mxu0 0.0
      %840 = vmatpush.msra.mxu0 0.0
      %841 = vmatpush.msra.mxu0 0.0
      %842 = vmatpush.msra.mxu0 0.0
      %843 = vmatpush.msra.mxu0 0.0
      %844 = vmatpush.msra.mxu0 0.0
      %845 = vmatpush.msra.mxu0 0.0
      %846 = vmatpush.msra.mxu0 0.0
      %847 = vmatpush.msra.mxu0 0.0
      %848 = vmatpush.msra.mxu0 %v315
      %849 = vmatmul.f32.gmra.mxu0 %v828
      %v850 = vpop.f32.mrf.mxu0
      %v851 = vadd.f32 0.0, %v850
      %852 = vmatmul.f32.gmra.mxu0 %v831
      %v853 = vpop.f32.mrf.mxu0
      %v854 = vadd.f32 0.0, %v853
      %855 = vdwg.mxu0
      %v856 = vadd.f32 %v814, %v851
      %v857 = vadd.f32 %v817, %v854
      %v858 = vrot.slane %v739, 7
      %v859 = vrot.slane %v740, 7
      %v860 = vsel %vm468, %v858, %v859
      %v863 = vsel %vm468, 0.0, %v858
      %v864 = vmul.f32 %v863, %v477
      %v865 = vmul.f32 %v860, %v481
      %v867 = vsel %vm760, %v864, 0
      %v870 = vsel %vm760, %v865, 0
      %872 = vmatpush.msra.mxu0 0.0
      %873 = vmatpush.msra.mxu0 0.0
      %874 = vmatpush.msra.mxu0 0.0
      %875 = vmatpush.msra.mxu0 0.0
      %876 = vmatpush.msra.mxu0 0.0
      %877 = vmatpush.msra.mxu0 0.0
      %878 = vmatpush.msra.mxu0 0.0
      %879 = vmatpush.msra.mxu0 0.0
      %880 = vmatpush.msra.mxu0 0.0
      %881 = vmatpush.msra.mxu0 0.0
      %882 = vmatpush.msra.mxu0 0.0
      %883 = vmatpush.msra.mxu0 0.0
      %884 = vmatpush.msra.mxu0 0.0
      %885 = vmatpush.msra.mxu0 0.0
      %886 = vmatpush.msra.mxu0 0.0
      %887 = vmatpush.msra.mxu0 %v316
      %888 = vmatmul.f32.gmra.mxu0 %v867
      %v889 = vpop.f32.mrf.mxu0
      %v890 = vadd.f32 0.0, %v889
      %891 = vmatmul.f32.gmra.mxu0 %v870
      %v892 = vpop.f32.mrf.mxu0
      %v893 = vadd.f32 0.0, %v892
      %894 = vdwg.mxu0
      %v895 = vadd.f32 %v856, %v890
      %v896 = vadd.f32 %v857, %v893
      %v897 = vmul.f32 %v739, %v518
      %v898 = vmul.f32 %v740, %v522
      %v900 = vsel %vm760, %v897, 0
      %v903 = vsel %vm760, %v898, 0
      %905 = vmatpush.msra.mxu0 0.0
      %906 = vmatpush.msra.mxu0 0.0
      %907 = vmatpush.msra.mxu0 0.0
      %908 = vmatpush.msra.mxu0 0.0
      %909 = vmatpush.msra.mxu0 0.0
      %910 = vmatpush.msra.mxu0 0.0
      %911 = vmatpush.msra.mxu0 0.0
      %912 = vmatpush.msra.mxu0 0.0
      %913 = vmatpush.msra.mxu0 0.0
      %914 = vmatpush.msra.mxu0 0.0
      %915 = vmatpush.msra.mxu0 0.0
      %916 = vmatpush.msra.mxu0 0.0
      %917 = vmatpush.msra.mxu0 0.0
      %918 = vmatpush.msra.mxu0 0.0
      %919 = vmatpush.msra.mxu0 0.0
      %920 = vmatpush.msra.mxu0 %v317
      %921 = vmatmul.f32.gmra.mxu0 %v900
      %v922 = vpop.f32.mrf.mxu0
      %v923 = vadd.f32 0.0, %v922
      %924 = vmatmul.f32.gmra.mxu0 %v903
      %v925 = vpop.f32.mrf.mxu0
      %v926 = vadd.f32 0.0, %v925
      %927 = vdwg.mxu0
      %v928 = vadd.f32 %v895, %v923
      %v929 = vadd.f32 %v896, %v926
      %v930 = vrot.slane %v739, 1
      %v931 = vrot.slane %v740, 1
      %v932 = vsel %vm557, %v930, %v931
      %v935 = vsel %vm557, %v931, 0.0
      %v936 = vmul.f32 %v932, %v566
      %v937 = vmul.f32 %v935, %v570
      %v939 = vsel %vm760, %v936, 0
      %v942 = vsel %vm760, %v937, 0
      %944 = vmatpush.msra.mxu0 0.0
      %945 = vmatpush.msra.mxu0 0.0
      %946 = vmatpush.msra.mxu0 0.0
      %947 = vmatpush.msra.mxu0 0.0
      %948 = vmatpush.msra.mxu0 0.0
      %949 = vmatpush.msra.mxu0 0.0
      %950 = vmatpush.msra.mxu0 0.0
      %951 = vmatpush.msra.mxu0 0.0
      %952 = vmatpush.msra.mxu0 0.0
      %953 = vmatpush.msra.mxu0 0.0
      %954 = vmatpush.msra.mxu0 0.0
      %955 = vmatpush.msra.mxu0 0.0
      %956 = vmatpush.msra.mxu0 0.0
      %957 = vmatpush.msra.mxu0 0.0
      %958 = vmatpush.msra.mxu0 0.0
      %959 = vmatpush.msra.mxu0 %v318
      %960 = vmatmul.f32.gmra.mxu0 %v939
      %v961 = vpop.f32.mrf.mxu0
      %v962 = vadd.f32 0.0, %v961
      %963 = vmatmul.f32.gmra.mxu0 %v942
      %v964 = vpop.f32.mrf.mxu0
      %v965 = vadd.f32 0.0, %v964
      %966 = vdwg.mxu0
      %v967 = vadd.f32 %v928, %v962
      %v968 = vadd.f32 %v929, %v965
      %v970 = vsel %vm325, %v745, 0.0
      %v971 = vmul.f32 %v746, %v609
      %v972 = vmul.f32 %v970, %v613
      %v974 = vsel %vm760, %v971, 0
      %v977 = vsel %vm760, %v972, 0
      %979 = vmatpush.msra.mxu0 0.0
      %980 = vmatpush.msra.mxu0 0.0
      %981 = vmatpush.msra.mxu0 0.0
      %982 = vmatpush.msra.mxu0 0.0
      %983 = vmatpush.msra.mxu0 0.0
      %984 = vmatpush.msra.mxu0 0.0
      %985 = vmatpush.msra.mxu0 0.0
      %986 = vmatpush.msra.mxu0 0.0
      %987 = vmatpush.msra.mxu0 0.0
      %988 = vmatpush.msra.mxu0 0.0
      %989 = vmatpush.msra.mxu0 0.0
      %990 = vmatpush.msra.mxu0 0.0
      %991 = vmatpush.msra.mxu0 0.0
      %992 = vmatpush.msra.mxu0 0.0
      %993 = vmatpush.msra.mxu0 0.0
      %994 = vmatpush.msra.mxu0 %v319
      %995 = vmatmul.f32.gmra.mxu0 %v974
      %v996 = vpop.f32.mrf.mxu0
      %v997 = vadd.f32 0.0, %v996
      %998 = vmatmul.f32.gmra.mxu0 %v977
      %v999 = vpop.f32.mrf.mxu0
      %v1000 = vadd.f32 0.0, %v999
      %1001 = vdwg.mxu0
      %v1002 = vadd.f32 %v967, %v997
      %v1003 = vadd.f32 %v968, %v1000
      %v1005 = vsel %vm344, %v753, 0.0
      %v1006 = vmul.f32 %v754, %v652
      %v1007 = vmul.f32 %v1005, %v656
      %v1009 = vsel %vm760, %v1006, 0
      %v1012 = vsel %vm760, %v1007, 0
      %1014 = vmatpush.msra.mxu0 0.0
      %1015 = vmatpush.msra.mxu0 0.0
      %1016 = vmatpush.msra.mxu0 0.0
      %1017 = vmatpush.msra.mxu0 0.0
      %1018 = vmatpush.msra.mxu0 0.0
      %1019 = vmatpush.msra.mxu0 0.0
      %1020 = vmatpush.msra.mxu0 0.0
      %1021 = vmatpush.msra.mxu0 0.0
      %1022 = vmatpush.msra.mxu0 0.0
      %1023 = vmatpush.msra.mxu0 0.0
      %1024 = vmatpush.msra.mxu0 0.0
      %1025 = vmatpush.msra.mxu0 0.0
      %1026 = vmatpush.msra.mxu0 0.0
      %1027 = vmatpush.msra.mxu0 0.0
      %1028 = vmatpush.msra.mxu0 0.0
      %1029 = vmatpush.msra.mxu0 %v320
      %1030 = vmatmul.f32.gmra.mxu0 %v1009
      %v1031 = vpop.f32.mrf.mxu0
      %v1032 = vadd.f32 0.0, %v1031
      %1033 = vmatmul.f32.gmra.mxu0 %v1012
      %v1034 = vpop.f32.mrf.mxu0
      %v1035 = vadd.f32 0.0, %v1034
      %1036 = vdwg.mxu0
      %v1037 = vadd.f32 %v1002, %v1032
      %v1038 = vadd.f32 %v1003, %v1035
      %v1040 = vsel %vm420, %v820, 0.0
      %v1041 = vmul.f32 %v821, %v695
      %v1042 = vmul.f32 %v1040, %v699
      %v1044 = vsel %vm760, %v1041, 0
      %v1047 = vsel %vm760, %v1042, 0
      %1049 = vmatpush.msra.mxu0 0.0
      %1050 = vmatpush.msra.mxu0 0.0
      %1051 = vmatpush.msra.mxu0 0.0
      %1052 = vmatpush.msra.mxu0 0.0
      %1053 = vmatpush.msra.mxu0 0.0
      %1054 = vmatpush.msra.mxu0 0.0
      %1055 = vmatpush.msra.mxu0 0.0
      %1056 = vmatpush.msra.mxu0 0.0
      %1057 = vmatpush.msra.mxu0 0.0
      %1058 = vmatpush.msra.mxu0 0.0
      %1059 = vmatpush.msra.mxu0 0.0
      %1060 = vmatpush.msra.mxu0 0.0
      %1061 = vmatpush.msra.mxu0 0.0
      %1062 = vmatpush.msra.mxu0 0.0
      %1063 = vmatpush.msra.mxu0 0.0
      %1064 = vmatpush.msra.mxu0 %v321
      %1065 = vmatmul.f32.gmra.mxu0 %v1044
      %v1066 = vpop.f32.mrf.mxu0
      %v1067 = vadd.f32 0.0, %v1066
      %1068 = vmatmul.f32.gmra.mxu0 %v1047
      %v1069 = vpop.f32.mrf.mxu0
      %v1070 = vadd.f32 0.0, %v1069
      %1071 = vdwg.mxu0
      %v1072 = vadd.f32 %v1037, %v1067
      %v1073 = vadd.f32 %v1038, %v1070
      %v1075 = vperm.slane %v741, 0
      %v1077 = vadd.f32 %v1072, %v1075
      %v1078 = vadd.f32 %v1073, %v1075
      %v1079 = vmax.f32 %v1077, 0.0
      %v1080 = vmax.f32 %v1078, 0.0
      %vm1081 = vcmask 130048
      %1082 = vst.msk [vmem:[%s253] sm:$0xff] %vm1081, %v1079
      %1083 = vst.msk [vmem:[%s253 + $0x8] sm:$0xff] %vm1081, %v1080
      %s1084 = smul.u32 2, %s17
      %p1085 = scmp.lt.s32.totalorder %s1084, 7
      %s1086 = scalar_select %p1085, %s1084, 7
      %s1087 = smul.addr %s1086, 8
      %s1088 = scalar_lea.vmem %s6, %s1087
      // Predicated region
      $region45: #{mennet_forward.3} parent=43 // pred_check
        %p1089 = pneg %p166
      $region46: #{mennet_forward.3} parent=43 // pred_check_branch
        %1091 = sbr.rel (%p1089) target = $region48
      $region47: #{mennet_forward.3} parent=43 // pred_region
        %s1092 = smul.u32 2, %s17
      $region48: #{mennet_forward.3} parent=43 // pred_fallthru
        _
    $region44: #{mennet_forward.3} parent=5 // pred_fallthru
      _
    %p1093 = scmp.le.s32.totalorder 2, %s12
    // Predicated region
    $region49: #{mennet_forward.3} parent=5 // pred_check
      %p1094 = pneg %p1093
    $region50: #{mennet_forward.3} parent=5 // pred_check_branch
      %1096 = sbr.rel (%p1094) target = $region52
    $region51: #{mennet_forward.3} parent=5 // pred_region
      %s1097 = ssub.s32 %s12, 2
      // Predicated region
      $region53: #{mennet_forward.3} parent=51 // pred_check
        %p1098 = pneg %p172
      $region54: #{mennet_forward.3} parent=51 // pred_check_branch
        %1100 = sbr.rel (%p1098) target = $region56
      $region55: #{mennet_forward.3} parent=51 // pred_region
        %s1101 = smul.u32 2, %s18
        %p1102 = scmp.lt.s32.totalorder %s1101, 7
        %s1103 = scalar_select %p1102, %s1101, 7
        %s1104 = smul.addr %s1103, 8
        %s1105 = scalar_lea.vmem %s6, %s1104
      $region56: #{mennet_forward.3} parent=51 // pred_fallthru
        _
    $region52: #{mennet_forward.3} parent=5 // pred_fallthru
      _
  $region6: #{mennet_forward.3} parent=0 // loop_footer
    %s16 = sadd.s32 1, %s12
  $region7: #{mennet_forward.3} parent=0 // loop_footer_branch
    %11 = sbr.rel target = $region3
  $region8: #{mennet_forward.3} parent=0 // loop_exit
    _

// kernel: mennet_forward.5
$region0: #{mennet_forward.5}
  #allocation0 [shape = 'u32[]', space=smem, size = 0x4, offset = 0x4, fixed_abs, tag = 'smem constant byte address 0x4 - core index']
  #allocation1 [shape = 'u32[72,128]{1,0:T(1,128)}', space=vmem, size = 0x9000, scoped, tag = 'internal scratch']
  %s0 = inlined_call_operand.vmem [shape: f32[6,64], index: 0, kind: input, shape index: {}]
  %s1 = inlined_call_operand.vmem [shape: f32[64,16], index: 1, kind: input, shape index: {}]
  %s2 = inlined_call_operand.vmem [shape: f32[16,32], index: 2, kind: input, shape index: {}]
  %s3 = inlined_call_operand.vmem [shape: f32[1,32], index: 3, kind: input, shape index: {}]
  %s4 = inlined_call_operand.vmem [shape: f32[32,10], index: 4, kind: input, shape index: {}]
  %s5 = inlined_call_operand.vmem [shape: f32[1,10], index: 5, kind: input, shape index: {}]
  %s6 = inlined_call_operand.vmem [shape: f32[6,32], index: 6, kind: output, shape index: {0}]
  %s7 = inlined_call_operand.vmem [shape: f32[6,10], index: 7, kind: output, shape index: {1}]
  %8 = xla_tuple %s6, %s7
  %s9 = sld [smem:[#allocation0]]
  $region42: #{mennet_forward.5} parent=0
    _
  %s11 = ssub.s32 1, %s9
  %s12 = scalar_select 0, %s11, %s9
  // Predicated region
  $region2: #{mennet_forward.5} parent=0 // pred_check
    _
  $region3: #{mennet_forward.5} parent=0 // pred_check_branch
    %14 = sbr.rel (0) target = $region5
  $region4: #{mennet_forward.5} parent=0 // pred_region
    _
  $region5: #{mennet_forward.5} parent=0 // pred_fallthru
    _
  // Predicated region
  $region6: #{mennet_forward.5} parent=0 // pred_check
    _
  $region7: #{mennet_forward.5} parent=0 // pred_check_branch
    %16 = sbr.rel (0) target = $region9
  $region8: #{mennet_forward.5} parent=0 // pred_region
    _
  $region9: #{mennet_forward.5} parent=0 // pred_fallthru
    _
  // Predicated region
  $region10: #{mennet_forward.5} parent=0 // pred_check
    _
  $region11: #{mennet_forward.5} parent=0 // pred_check_branch
    %18 = sbr.rel (0) target = $region13
  $region12: #{mennet_forward.5} parent=0 // pred_region
    _
  $region13: #{mennet_forward.5} parent=0 // pred_fallthru
    _
  // Predicated region
  $region14: #{mennet_forward.5} parent=0 // pred_check
    _
  $region15: #{mennet_forward.5} parent=0 // pred_check_branch
    %20 = sbr.rel (0) target = $region17
  $region16: #{mennet_forward.5} parent=0 // pred_region
    _
  $region17: #{mennet_forward.5} parent=0 // pred_fallthru
    _
  // Predicated region
  $region18: #{mennet_forward.5} parent=0 // pred_check
    _
  $region19: #{mennet_forward.5} parent=0 // pred_check_branch
    %22 = sbr.rel (0) target = $region21
  $region20: #{mennet_forward.5} parent=0 // pred_region
    _
  $region21: #{mennet_forward.5} parent=0 // pred_fallthru
    _
  // Predicated region
  $region22: #{mennet_forward.5} parent=0 // pred_check
    _
  $region23: #{mennet_forward.5} parent=0 // pred_check_branch
    %24 = sbr.rel (0) target = $region25
  $region24: #{mennet_forward.5} parent=0 // pred_region
    _
  $region25: #{mennet_forward.5} parent=0 // pred_fallthru
    _
  %v25 = vld [vmem:[%s0] sm:$0x3f]
  %v26 = vld [vmem:[%s1] sm:$0xff]
  %v27 = vld [vmem:[%s1 + $0x8] sm:$0xff]
  %v28 = vld [vmem:[%s1 + $0x10] sm:$0xff]
  %v29 = vld [vmem:[%s1 + $0x18] sm:$0xff]
  %v30 = vld [vmem:[%s1 + $0x20] sm:$0xff]
  %v31 = vld [vmem:[%s1 + $0x28] sm:$0xff]
  %v32 = vld [vmem:[%s1 + $0x30] sm:$0xff]
  %v33 = vld [vmem:[%s1 + $0x38] sm:$0xff]
  %vm34 = vcmask 523264
  %v36 = vsel %vm34, %v25, 0
  %38 = vmatpush.msra.mxu0 0.0
  %39 = vmatpush.msra.mxu0 0.0
  %40 = vmatpush.msra.mxu0 0.0
  %41 = vmatpush.msra.mxu0 0.0
  %42 = vmatpush.msra.mxu0 0.0
  %43 = vmatpush.msra.mxu0 0.0
  %44 = vmatpush.msra.mxu0 0.0
  %45 = vmatpush.msra.mxu0 0.0
  %46 = vmatpush.msra.mxu0 %v33
  %47 = vmatpush.msra.mxu0 %v32
  %48 = vmatpush.msra.mxu0 %v31
  %49 = vmatpush.msra.mxu0 %v30
  %50 = vmatpush.msra.mxu0 %v29
  %51 = vmatpush.msra.mxu0 %v28
  %52 = vmatpush.msra.mxu0 %v27
  %53 = vmatpush.msra.mxu0 %v26
  %54 = vmatmul.f32.gmra.mxu0 %v36
  %v55 = vpop.f32.mrf.mxu0
  %v56 = vadd.f32 0.0, %v55
  %57 = vdwg.mxu0
  %v58 = vld [vmem:[%s2] sm:$0xff]
  %v59 = vld [vmem:[%s2 + $0x8] sm:$0xff]
  %v60 = vld [vmem:[%s3] sm:$0x1]
  %v62 = vperm.slane %v60, 0
  %vm64 = vcmask 130048
  %v66 = vsel %vm64, %v56, 0
  %68 = vmatpush.msra.mxu0 0.0
  %69 = vmatpush.msra.mxu0 0.0
  %70 = vmatpush.msra.mxu0 0.0
  %71 = vmatpush.msra.mxu0 0.0
  %72 = vmatpush.msra.mxu0 0.0
  %73 = vmatpush.msra.mxu0 0.0
  %74 = vmatpush.msra.mxu0 0.0
  %75 = vmatpush.msra.mxu0 0.0
  %76 = vmatpush.msra.mxu0 0.0
  %77 = vmatpush.msra.mxu0 0.0
  %78 = vmatpush.msra.mxu0 0.0
  %79 = vmatpush.msra.mxu0 0.0
  %80 = vmatpush.msra.mxu0 0.0
  %81 = vmatpush.msra.mxu0 0.0
  %82 = vmatpush.msra.mxu0 %v59
  %83 = vmatpush.msra.mxu0 %v58
  %84 = vmatmul.f32.gmra.mxu0 %v66
  %v85 = vpop.f32.mrf.mxu0
  %v86 = vadd.f32 %v62, %v85
  %87 = vdwg.mxu0
  %v88 = vmax.f32 %v86, 0.0
  %vm89 = vcmask 259072
  %90 = vst.msk [vmem:[%s6] sm:$0x3f] %vm89, %v88
  %v91 = vld [vmem:[%s4] sm:$0xff]
  %v92 = vld [vmem:[%s4 + $0x8] sm:$0xff]
  %v93 = vld [vmem:[%s4 + $0x10] sm:$0xff]
  %v94 = vld [vmem:[%s4 + $0x18] sm:$0xff]
  %v95 = vld [vmem:[%s5] sm:$0x1]
  %v97 = vperm.slane %v95, 0
  %vm99 = vcmask 261120
  %v101 = vsel %vm99, %v88, 0
  %103 = vmatpush.msra.mxu0 0.0
  %104 = vmatpush.msra.mxu0 0.0
  %105 = vmatpush.msra.mxu0 0.0
  %106 = vmatpush.msra.mxu0 0.0
  %107 = vmatpush.msra.mxu0 0.0
  %108 = vmatpush.msra.mxu0 0.0
  %109 = vmatpush.msra.mxu0 0.0
  %110 = vmatpush.msra.mxu0 0.0
  %111 = vmatpush.msra.mxu0 0.0
  %112 = vmatpush.msra.mxu0 0.0
  %113 = vmatpush.msra.mxu0 0.0
  %114 = vmatpush.msra.mxu0 0.0
  %115 = vmatpush.msra.mxu0 %v94
  %116 = vmatpush.msra.mxu0 %v93
  %117 = vmatpush.msra.mxu0 %v92
  %118 = vmatpush.msra.mxu0 %v91
  %119 = vmatmul.f32.gmra.mxu0 %v101
  %v120 = vpop.f32.mrf.mxu0
  %v121 = vadd.f32 %v97, %v120
  %122 = vdwg.mxu0
  %vm123 = vcmask 78848
  %124 = vst.msk [vmem:[%s7] sm:$0x3f] %vm123, %v121
  // Predicated region
  $region26: #{mennet_forward.5} parent=0 // pred_check
    _
  $region27: #{mennet_forward.5} parent=0 // pred_check_branch
    %126 = sbr.rel (0) target = $region29
  $region28: #{mennet_forward.5} parent=0 // pred_region
    _
  $region29: #{mennet_forward.5} parent=0 // pred_fallthru
    _
  // Predicated region
  $region30: #{mennet_forward.5} parent=0 // pred_check
    _
  $region31: #{mennet_forward.5} parent=0 // pred_check_branch
    %128 = sbr.rel (0) target = $region33
  $region32: #{mennet_forward.5} parent=0 // pred_region
    _
  $region33: #{mennet_forward.5} parent=0 // pred_fallthru
    _
  // Predicated region
  $region34: #{mennet_forward.5} parent=0 // pred_check
    _
  $region35: #{mennet_forward.5} parent=0 // pred_check_branch
    %130 = sbr.rel (0) target = $region37
  $region36: #{mennet_forward.5} parent=0 // pred_region
    _
  $region37: #{mennet_forward.5} parent=0 // pred_fallthru
    _
  // Predicated region
  $region38: #{mennet_forward.5} parent=0 // pred_check
    _
  $region39: #{mennet_forward.5} parent=0 // pred_check_branch
    %132 = sbr.rel (0) target = $region41
  $region40: #{mennet_forward.5} parent=0 // pred_region
    _
  $region41: #{mennet_forward.5} parent=0 // pred_fallthru
    _

</llo_original>
